<compile_context>
chip_gen: v7x
topology: tpu7x:2x2x1
jax: 0.10.0
libtpu: 0.0.40
codegen_flags: <defaults>
</compile_context>

<pallas_src>
import functools

import jax
import jax.numpy as jnp
from jax import lax
from jax.experimental import pallas as pl
from jax.experimental.pallas import tpu as pltpu

# ---------------------------------------------------------------------------
# Genotype (standard DARTS recurrent genotype)
# ---------------------------------------------------------------------------
RECURRENT = (
    ("sigmoid", 0),
    ("relu", 1),
    ("relu", 1),
    ("identity", 1),
    ("tanh", 2),
    ("sigmoid", 5),
    ("tanh", 3),
    ("relu", 5),
)
CONCAT = tuple(range(1, 9))

_ACTS = {
    "tanh": jnp.tanh,
    "relu": lambda z: jnp.maximum(z, 0.0),
    "sigmoid": jax.nn.sigmoid,
    "identity": lambda z: z,
}


def _group_steps(recurrent):
    """Group step indices by predecessor state; returns ((pred, step_ids), ...).

    All steps in a group share one matmul against the lane-concatenated weights
    once `states[pred]` is available.  Increasing-pred order is a valid
    topological order for the standard DARTS genotype (asserted below)."""
    by_pred = {}
    for i, (_, pred) in enumerate(recurrent):
        by_pred.setdefault(pred, []).append(i)
    groups = sorted(by_pred.items(), key=lambda kv: kv[0])
    produced = {0}
    for pred, step_ids in groups:
        assert pred in produced, "genotype incompatible with pred-grouped fusion"
        produced.update(i + 1 for i in step_ids)
    return tuple((pred, tuple(ids)) for pred, ids in groups)


_GROUPS = _group_steps(RECURRENT)


def _pick_vmem_limit(resident_bytes):
    """Scoped-VMEM limit derived from the resident set, capped below the
    physical per-core capacity of the current TPU generation."""
    try:
        cap = int(pltpu.get_tpu_info().vmem_capacity_bytes)
    except Exception:  # pragma: no cover - conservative fallback (v7x floor)
        cap = 64 << 20
    want = int(resident_bytes) + (8 << 20)          # headroom for compiler temps
    return max(32 << 20, min(want, cap - (4 << 20)))


# ---------------------------------------------------------------------------
# Pallas kernel: one DARTS layer; grid = (batch_shards, seq_chunks)
# ---------------------------------------------------------------------------
def _make_layer_kernel(nhid, recurrent, concat, groups, unroll):
    n_groups = len(groups)
    pred_set = {p for _, p in recurrent}
    concat_set = set(concat)
    inv_n = 1.0 / float(len(concat))

    def kernel(*refs):
        xp_ref, h0_ref, w0h_ref = refs[:3]
        wg_refs = refs[3:3 + n_groups]
        y_ref = refs[3 + n_groups]
        h_ref = refs[4 + n_groups]            # persistent scratch: carried hidden

        w_dtype = w0h_ref.dtype
        chunk_t = xp_ref.shape[0]

        # First seq-chunk for this batch shard: load the initial hidden state.
        @pl.when(pl.program_id(1) == 0)
        def _():
            h_ref[...] = h0_ref[...].astype(jnp.float32)

        def step(t, h_prev):
            # Hoisted input projection (precomputed outside the recurrence).
            xp_t = xp_ref[t].astype(jnp.float32)                   # [Bs, 2*nhid]

            # Only the h-dependent half of the W0 matmul is on the chain.
            ch0 = xp_t + jnp.dot(h_prev.astype(w_dtype), w0h_ref[...],
                                 preferred_element_type=jnp.float32)
            c0 = jax.nn.sigmoid(ch0[:, :nhid])
            h0 = jnp.tanh(ch0[:, nhid:])
            s0 = h_prev + c0 * (h0 - h_prev)

            # Running concat-sum + minimal live-state set: only states reused
            # as a predecessor stay alive; everything else folds into `acc`.
            acc = s0 if 0 in concat_set else None
            states = {0: s0} if 0 in pred_set else {}

            for (pred, step_ids), wg_ref in zip(groups, wg_refs):
                s_prev = states.pop(pred)          # dead after this group
                ch = jnp.dot(s_prev.astype(w_dtype), wg_ref[...],
                             preferred_element_type=jnp.float32)
                for j, i in enumerate(step_ids):
                    base = 2 * nhid * j
                    c = jax.nn.sigmoid(ch[:, base:base + nhid])
                    h = _ACTS[recurrent[i][0]](ch[:, base + nhid:base + 2 * nhid])
                    s = s_prev + c * (h - s_prev)
                    if (i + 1) in concat_set:
                        acc = s if acc is None else acc + s
                    if (i + 1) in pred_set:
                        states[i + 1] = s

            out = acc * inv_n
            y_ref[t] = out.astype(y_ref.dtype)     # lane-dense slab write
            return out                             # carried hidden state

        h_ref[...] = lax.fori_loop(0, chunk_t, step, h_ref[...], unroll=unroll)

    return kernel


def darts_layer(x, h0, w0x, w0h, wg, *, nhid,
                recurrent=RECURRENT, concat=CONCAT, groups=_GROUPS,
                seq_chunk=None, batch_shards=None, unroll=2):
    """One DARTS recurrent layer over a full sequence.

    x   : [seq_len, batch, ninp]  f32
    h0  : [batch, nhid]           f32
    w0x : [ninp, 2*nhid], w0h : [nhid, 2*nhid]
    wg  : tuple of pre-packed same-predecessor step weights [nhid, k*2*nhid]
    returns y : [seq_len, batch, nhid] f32 (y[-1] is the final hidden state)
    """
    seq_len, batch, ninp = x.shape
    w_dtype = w0h.dtype
    is_f32_w = jnp.dtype(w_dtype) == jnp.dtype(jnp.float32)

    # Hoisted input projection: ONE (S*B, ninp) @ (ninp, 2*nhid) GEMM outside the
    # recurrence.  Stored in bf16 on the fast path to halve its HBM/VMEM bytes.
    xp = jnp.dot(x.reshape(seq_len * batch, ninp).astype(w_dtype), w0x,
                 precision=lax.Precision.HIGHEST,
                 preferred_element_type=jnp.float32)
    xp_dtype = jnp.float32 if is_f32_w else w_dtype
    xp = xp.astype(xp_dtype).reshape(seq_len, batch, 2 * nhid)

    # Batch sharding across TensorCores (v7x megacore) via a leading "parallel"
    # grid axis; only when per-shard batch keeps (8,128) block alignment.
    # Harmless (sequential) on single-core chips.
    if batch_shards is None:
        batch_shards = 2 if batch % 16 == 0 else 1
    if (batch_shards < 1 or batch % batch_shards != 0
            or (batch_shards > 1 and (batch // batch_shards) % 8 != 0)):
        batch_shards = 1
    bsz = batch // batch_shards

    # Seq chunking: bounds VMEM and pipelines xp-load / y-store DMA behind the
    # recurrence.  The grid must tile the seq axis exactly (carried h!).
    bytes_per_t = bsz * 2 * nhid * jnp.dtype(xp_dtype).itemsize + bsz * nhid * 4
    if seq_chunk is None:
        seq_chunk = max(1, min(seq_len, (4 << 20) // max(bytes_per_t, 1)))
    seq_chunk = int(max(1, min(seq_len, seq_chunk)))
    while seq_len % seq_chunk != 0:
        seq_chunk -= 1
    n_chunks = seq_len // seq_chunk

    kernel = _make_layer_kernel(nhid, recurrent, concat, groups, unroll)

    in_specs = [
        pl.BlockSpec((seq_chunk, bsz, 2 * nhid), lambda s, c: (c, s, 0)),  # xp
        pl.BlockSpec((bsz, nhid), lambda s, c: (s, 0)),                    # h0
        pl.BlockSpec((nhid, 2 * nhid), lambda s, c: (0, 0)),               # w0h
    ] + [pl.BlockSpec(w.shape, lambda s, c: (0, 0)) for w in wg]           # packed Ws
    out_specs = pl.BlockSpec((seq_chunk, bsz, nhid), lambda s, c: (c, s, 0))

    # VMEM budget derived from the resident set (weights resident, tiles 2x-buffered).
    weight_bytes = (w0h.size + sum(w.size for w in wg)) * jnp.dtype(w_dtype).itemsize
    tile_bytes = 2 * seq_chunk * bytes_per_t + 3 * bsz * nhid * 4
    vmem_limit = _pick_vmem_limit(weight_bytes + tile_bytes)

    # TODO(synk): pad batch to a multiple of 8 and 2*nhid to a multiple of 128
    # (256 on v6e/v7x) for production shapes; toy shapes are left unpadded.
    return pl.pallas_call(
        kernel,
        out_shape=jax.ShapeDtypeStruct((seq_len, batch, nhid), jnp.float32),
        grid=(batch_shards, n_chunks),
        in_specs=in_specs,
        out_specs=out_specs,
        scratch_shapes=[pltpu.VMEM((bsz, nhid), jnp.float32)],
        compiler_params=pltpu.CompilerParams(
            dimension_semantics=("parallel", "arbitrary"),
            vmem_limit_bytes=vmem_limit),
    )(xp, h0, w0h, *wg)


# ---------------------------------------------------------------------------
# One-time parameter preparation (bf16 cast + per-group weight packing)
# ---------------------------------------------------------------------------
def prepare_params(params, weights_dtype=jnp.bfloat16, groups=_GROUPS):
    """Done once, NOT inside every jitted forward: optional bf16 weight cast and
    lane-concat of same-predecessor step weights."""
    prepped = []
    for p in params:
        w0x, w0h, ws = p["w0x"], p["w0h"], p["ws"]
        if weights_dtype is not None:
            w0x = w0x.astype(weights_dtype)
            w0h = w0h.astype(weights_dtype)
            ws = ws.astype(weights_dtype)
        wg = tuple(jnp.concatenate([ws[i] for i in ids], axis=-1)
                   for _, ids in groups)
        prepped.append({"w0x": w0x, "w0h": w0h, "wg": wg})
    return prepped


# ---------------------------------------------------------------------------
# DGReceiver forward (multi-layer wrapper, plain-JAX glue)
# ---------------------------------------------------------------------------
def dg_receiver_forward(x, prepped_params, state=None, *,
                        seq_chunk=None, batch_shards=None, unroll=2):
    """x: [seq_len, batch, input_size]; prepped_params: list of per-layer dicts.

    Returns (output [seq_len, batch, nhid], state [num_layers, batch, nhid])."""
    seq_len, batch, _ = x.shape
    nhid = prepped_params[0]["w0h"].shape[0]
    num_layers = len(prepped_params)

    if state is None:
        state = jnp.zeros((num_layers, batch, nhid), jnp.float32)

    inputs = x
    finals = []
    for layer_idx, p in enumerate(prepped_params):
        y = darts_layer(inputs, state[layer_idx], p["w0x"], p["w0h"], p["wg"],
                        nhid=nhid, seq_chunk=seq_chunk,
                        batch_shards=batch_shards, unroll=unroll)
        finals.append(y[-1])
        # TODO(synk): inter-layer dropout omitted (module default p=0).
        # TODO(synk): for num_layers > 1, fuse layers into one wavefront kernel
        # to avoid the HBM round trip of y between layers.
        inputs = y
    return inputs, jnp.stack(finals)


# ---------------------------------------------------------------------------
# Deterministic parameter init (xavier_uniform_, as in the module __init__)
# ---------------------------------------------------------------------------
def _xavier_uniform(key, shape):
    fan_in, fan_out = shape[-2], shape[-1]
    limit = (6.0 / (fan_in + fan_out)) ** 0.5
    return jax.random.uniform(key, shape, jnp.float32, -limit, limit)


def init_params(key, input_size, hidden_size, num_layers):
    steps = len(RECURRENT)
    params = []
    for n in range(num_layers):
        ninp = input_size if n == 0 else hidden_size
        key, k0, k1 = jax.random.split(key, 3)
        w0 = _xavier_uniform(k0, (ninp + hidden_size, 2 * hidden_size))
        ws = jnp.stack([
            _xavier_uniform(jax.random.fold_in(k1, i),
                            (hidden_size, 2 * hidden_size))
            for i in range(steps)
        ])
        params.append({"w0x": w0[:ninp], "w0h": w0[ninp:], "ws": ws})
    return params


# ---------------------------------------------------------------------------
# Pure-JAX reference (mirrors the PyTorch forward) for correctness check
# ---------------------------------------------------------------------------
def _ref_forward(x, params, state=None):
    seq_len, batch, _ = x.shape
    nhid = params[0]["w0h"].shape[0]
    if state is None:
        state = [jnp.zeros((batch, nhid), jnp.float32) for _ in params]
    else:
        state = list(state)

    def cell(xt, h_prev, p):
        ch0 = xt @ p["w0x"] + h_prev @ p["w0h"]
        c0 = jax.nn.sigmoid(ch0[:, :nhid])
        h0 = jnp.tanh(ch0[:, nhid:])
        states = [h_prev + c0 * (h0 - h_prev)]
        for i, (name, pred) in enumerate(RECURRENT):
            s_prev = states[pred]
            ch = s_prev @ p["ws"][i]
            c = jax.nn.sigmoid(ch[:, :nhid])
            h = _ACTS[name](ch[:, nhid:])
            states.append(s_prev + c * (h - s_prev))
        return jnp.mean(jnp.stack([states[i] for i in CONCAT], -1), -1)

    inputs = [x[t] for t in range(seq_len)]
    for li, p in enumerate(params):
        layer_out = []
        for t in range(seq_len):
            state[li] = cell(inputs[t], state[li], p)
            layer_out.append(state[li])
        inputs = layer_out
    return jnp.stack(layer_out), jnp.stack(state)


# ---------------------------------------------------------------------------
if __name__ == "__main__":
    seq_len, batch, input_size, hidden_size, num_layers = 8, 2, 16, 32, 2

    key = jax.random.PRNGKey(0)
    kp, kx = jax.random.split(key)
    params = init_params(kp, input_size, hidden_size, num_layers)
    x = jax.random.normal(kx, (seq_len, batch, input_size), jnp.float32)

    ref_out, ref_state = _ref_forward(x, params)

    # f32 weights, forced multi-chunk seq grid (exercises the scratch-carried
    # hidden state across the "arbitrary" grid axis); strict check.
    p_f32 = prepare_params(params, weights_dtype=None)
    fwd_f32 = jax.jit(functools.partial(dg_receiver_forward, seq_chunk=2))
    out, state = fwd_f32(x, p_f32)
    out = jax.block_until_ready(out)
    state = jax.block_until_ready(state)
    assert out.shape == (seq_len, batch, hidden_size)
    assert state.shape == (num_layers, batch, hidden_size)
    assert jnp.allclose(out, ref_out, atol=1e-4, rtol=1e-4)
    assert jnp.allclose(state, ref_state, atol=1e-4, rtol=1e-4)

    # Default fast path: bf16 weights (f32 accumulation, f32 carried h),
    # auto seq chunking; loose-tolerance sanity check.
    p_bf16 = prepare_params(params)          # bf16 weights are the default
    fwd_bf16 = jax.jit(dg_receiver_forward)
    out_bf16, state_bf16 = fwd_bf16(x, p_bf16)
    out_bf16 = jax.block_until_ready(out_bf16)
    state_bf16 = jax.block_until_ready(state_bf16)
    assert out_bf16.shape == (seq_len, batch, hidden_size)
    assert jnp.allclose(out_bf16, ref_out, atol=1e-1, rtol=1e-1)

    print("KERNEL_OK")
</pallas_src>

<mosaic_0001>
module attributes {stable_mosaic.version = 11 : i64} {
  func.func @kernel(%arg0: i32, %arg1: i32, %arg2: memref<2x2x64xf32, #tpu.memory_space<vmem>>, %arg3: memref<2x32xf32, #tpu.memory_space<vmem>>, %arg4: memref<32x64xf32, #tpu.memory_space<vmem>>, %arg5: memref<32x64xf32, #tpu.memory_space<vmem>>, %arg6: memref<32x192xf32, #tpu.memory_space<vmem>>, %arg7: memref<32x64xf32, #tpu.memory_space<vmem>>, %arg8: memref<32x64xf32, #tpu.memory_space<vmem>>, %arg9: memref<32x128xf32, #tpu.memory_space<vmem>>, %arg10: memref<2x2x32xf32, #tpu.memory_space<vmem>>, %arg11: memref<2x32xf32, #tpu.memory_space<vmem>>) attributes {dimension_semantics = [#tpu.dimension_semantics<parallel>, #tpu.dimension_semantics<arbitrary>], iteration_bounds = array<i64: 1, 4>, scalar_prefetch = 0 : i64, scratch_operands = 1 : i64, tpu.core_type = #tpu.core_type<tc>, window_params = [{transform_indices = @transform_0, window_bounds = array<i64: 2, 2, 64>}, {transform_indices = @transform_1, window_bounds = array<i64: 2, 32>}, {pipeline_mode = #tpu.pipeline_mode<synchronous>, transform_indices = @transform_2, window_bounds = array<i64: 32, 64>}, {pipeline_mode = #tpu.pipeline_mode<synchronous>, transform_indices = @transform_3, window_bounds = array<i64: 32, 64>}, {pipeline_mode = #tpu.pipeline_mode<synchronous>, transform_indices = @transform_4, window_bounds = array<i64: 32, 192>}, {pipeline_mode = #tpu.pipeline_mode<synchronous>, transform_indices = @transform_5, window_bounds = array<i64: 32, 64>}, {pipeline_mode = #tpu.pipeline_mode<synchronous>, transform_indices = @transform_6, window_bounds = array<i64: 32, 64>}, {pipeline_mode = #tpu.pipeline_mode<synchronous>, transform_indices = @transform_7, window_bounds = array<i64: 32, 128>}, {transform_indices = @transform_8, window_bounds = array<i64: 2, 2, 32>}]} {
    %c0_i32 = arith.constant 0 : i32
    %0 = arith.cmpi eq, %arg1, %c0_i32 : i32
    %1 = arith.extui %0 : i1 to i32
    %c0_i32_0 = arith.constant 0 : i32
    %2 = arith.cmpi ne, %1, %c0_i32_0 : i32
    scf.if %2 {
      %c0_78 = arith.constant 0 : index
      %c0_79 = arith.constant 0 : index
      %281 = vector.load %arg3[%c0_78, %c0_79] : memref<2x32xf32, #tpu.memory_space<vmem>>, vector<2x32xf32>
      %c0_80 = arith.constant 0 : index
      %c0_81 = arith.constant 0 : index
      %282 = vector.load %arg11[%c0_80, %c0_81] : memref<2x32xf32, #tpu.memory_space<vmem>>, vector<2x32xf32>
      tpu.vector_store %arg11[%c0_80, %c0_81], %281 {strides = array<i32>} : memref<2x32xf32, #tpu.memory_space<vmem>>, vector<2x32xf32>,
    } else {
    }
    %c0 = arith.constant 0 : index
    %c0_1 = arith.constant 0 : index
    %3 = vector.load %arg11[%c0, %c0_1] : memref<2x32xf32, #tpu.memory_space<vmem>>, vector<2x32xf32>
    %c0_i32_2 = arith.constant 0 : i32
    %4 = arith.index_cast %c0_i32_2 : i32 to index
    %c0_3 = arith.constant 0 : index
    %c0_4 = arith.constant 0 : index
    %5 = vector.load %arg2[%4, %c0_3, %c0_4] : memref<2x2x64xf32, #tpu.memory_space<vmem>>, vector<1x2x64xf32>
    %6 = vector.shape_cast %5 : vector<1x2x64xf32> to vector<2x64xf32>
    %c0_5 = arith.constant 0 : index
    %c0_6 = arith.constant 0 : index
    %7 = vector.load %arg4[%c0_5, %c0_6] : memref<32x64xf32, #tpu.memory_space<vmem>>, vector<32x64xf32>
    %cst = arith.constant dense<0.000000e+00> : vector<2x64xf32>
    %8 = tpu.matmul %3, %7, %cst {dimension_numbers = #tpu.dot_dimension_numbers<[1], [0], [0], [1], [0, 0, 1, 1], [], []>} : vector<2x32xf32>, vector<32x64xf32>, vector<2x64xf32> -> vector<2x64xf32>
    %9 = arith.addf %6, %8 : vector<2x64xf32>
    %10 = vector.extract_strided_slice %9 {offsets = [0, 0], sizes = [2, 32], strides = [1, 1]} : vector<2x64xf32> to vector<2x32xf32>
    %11 = arith.negf %10 : vector<2x32xf32>
    %12 = math.exp %11 : vector<2x32xf32>
    %cst_7 = arith.constant 1.000000e+00 : f32
    %13 = vector.broadcast %cst_7 : f32 to vector<2x32xf32>
    %14 = arith.addf %13, %12 : vector<2x32xf32>
    %15 = arith.divf %13, %14 : vector<2x32xf32>
    %16 = vector.extract_strided_slice %9 {offsets = [0, 32], sizes = [2, 32], strides = [1, 1]} : vector<2x64xf32> to vector<2x32xf32>
    %17 = math.tanh %16 : vector<2x32xf32>
    %18 = arith.subf %17, %3 : vector<2x32xf32>
    %19 = arith.mulf %15, %18 : vector<2x32xf32>
    %20 = arith.addf %3, %19 : vector<2x32xf32>
    %c0_8 = arith.constant 0 : index
    %c0_9 = arith.constant 0 : index
    %21 = vector.load %arg5[%c0_8, %c0_9] : memref<32x64xf32, #tpu.memory_space<vmem>>, vector<32x64xf32>
    %cst_10 = arith.constant dense<0.000000e+00> : vector<2x64xf32>
    %22 = tpu.matmul %20, %21, %cst_10 {dimension_numbers = #tpu.dot_dimension_numbers<[1], [0], [0], [1], [0, 0, 1, 1], [], []>} : vector<2x32xf32>, vector<32x64xf32>, vector<2x64xf32> -> vector<2x64xf32>
    %23 = vector.extract_strided_slice %22 {offsets = [0, 0], sizes = [2, 32], strides = [1, 1]} : vector<2x64xf32> to vector<2x32xf32>
    %24 = arith.negf %23 : vector<2x32xf32>
    %25 = math.exp %24 : vector<2x32xf32>
    %cst_11 = arith.constant 1.000000e+00 : f32
    %26 = vector.broadcast %cst_11 : f32 to vector<2x32xf32>
    %27 = arith.addf %26, %25 : vector<2x32xf32>
    %28 = arith.divf %26, %27 : vector<2x32xf32>
    %29 = vector.extract_strided_slice %22 {offsets = [0, 32], sizes = [2, 32], strides = [1, 1]} : vector<2x64xf32> to vector<2x32xf32>
    %30 = arith.negf %29 : vector<2x32xf32>
    %31 = math.exp %30 : vector<2x32xf32>
    %cst_12 = arith.constant 1.000000e+00 : f32
    %32 = vector.broadcast %cst_12 : f32 to vector<2x32xf32>
    %33 = arith.addf %32, %31 : vector<2x32xf32>
    %34 = arith.divf %32, %33 : vector<2x32xf32>
    %35 = arith.subf %34, %20 : vector<2x32xf32>
    %36 = arith.mulf %28, %35 : vector<2x32xf32>
    %37 = arith.addf %20, %36 : vector<2x32xf32>
    %c0_13 = arith.constant 0 : index
    %c0_14 = arith.constant 0 : index
    %38 = vector.load %arg6[%c0_13, %c0_14] : memref<32x192xf32, #tpu.memory_space<vmem>>, vector<32x192xf32>
    %cst_15 = arith.constant dense<0.000000e+00> : vector<2x192xf32>
    %39 = tpu.matmul %37, %38, %cst_15 {dimension_numbers = #tpu.dot_dimension_numbers<[1], [0], [0], [1], [0, 0, 1, 1], [], []>} : vector<2x32xf32>, vector<32x192xf32>, vector<2x192xf32> -> vector<2x192xf32>
    %40 = vector.extract_strided_slice %39 {offsets = [0, 0], sizes = [2, 32], strides = [1, 1]} : vector<2x192xf32> to vector<2x32xf32>
    %41 = arith.negf %40 : vector<2x32xf32>
    %42 = math.exp %41 : vector<2x32xf32>
    %cst_16 = arith.constant 1.000000e+00 : f32
    %43 = vector.broadcast %cst_16 : f32 to vector<2x32xf32>
    %44 = arith.addf %43, %42 : vector<2x32xf32>
    %45 = arith.divf %43, %44 : vector<2x32xf32>
    %46 = vector.extract_strided_slice %39 {offsets = [0, 32], sizes = [2, 32], strides = [1, 1]} : vector<2x192xf32> to vector<2x32xf32>
    %cst_17 = arith.constant 0.000000e+00 : f32
    %47 = vector.broadcast %cst_17 : f32 to vector<2x32xf32>
    %48 = arith.maximumf %46, %47 : vector<2x32xf32>
    %49 = arith.subf %48, %37 : vector<2x32xf32>
    %50 = arith.mulf %45, %49 : vector<2x32xf32>
    %51 = arith.addf %37, %50 : vector<2x32xf32>
    %52 = arith.addf %37, %51 : vector<2x32xf32>
    %53 = vector.extract_strided_slice %39 {offsets = [0, 64], sizes = [2, 32], strides = [1, 1]} : vector<2x192xf32> to vector<2x32xf32>
    %54 = arith.negf %53 : vector<2x32xf32>
    %55 = math.exp %54 : vector<2x32xf32>
    %cst_18 = arith.constant 1.000000e+00 : f32
    %56 = vector.broadcast %cst_18 : f32 to vector<2x32xf32>
    %57 = arith.addf %56, %55 : vector<2x32xf32>
    %58 = arith.divf %56, %57 : vector<2x32xf32>
    %59 = vector.extract_strided_slice %39 {offsets = [0, 96], sizes = [2, 32], strides = [1, 1]} : vector<2x192xf32> to vector<2x32xf32>
    %cst_19 = arith.constant 0.000000e+00 : f32
    %60 = vector.broadcast %cst_19 : f32 to vector<2x32xf32>
    %61 = arith.maximumf %59, %60 : vector<2x32xf32>
    %62 = arith.subf %61, %37 : vector<2x32xf32>
    %63 = arith.mulf %58, %62 : vector<2x32xf32>
    %64 = arith.addf %37, %63 : vector<2x32xf32>
    %65 = arith.addf %52, %64 : vector<2x32xf32>
    %66 = vector.extract_strided_slice %39 {offsets = [0, 128], sizes = [2, 32], strides = [1, 1]} : vector<2x192xf32> to vector<2x32xf32>
    %67 = arith.negf %66 : vector<2x32xf32>
    %68 = math.exp %67 : vector<2x32xf32>
    %cst_20 = arith.constant 1.000000e+00 : f32
    %69 = vector.broadcast %cst_20 : f32 to vector<2x32xf32>
    %70 = arith.addf %69, %68 : vector<2x32xf32>
    %71 = arith.divf %69, %70 : vector<2x32xf32>
    %72 = vector.extract_strided_slice %39 {offsets = [0, 160], sizes = [2, 32], strides = [1, 1]} : vector<2x192xf32> to vector<2x32xf32>
    %73 = arith.subf %72, %37 : vector<2x32xf32>
    %74 = arith.mulf %71, %73 : vector<2x32xf32>
    %75 = arith.addf %37, %74 : vector<2x32xf32>
    %76 = arith.addf %65, %75 : vector<2x32xf32>
    %c0_21 = arith.constant 0 : index
    %c0_22 = arith.constant 0 : index
    %77 = vector.load %arg7[%c0_21, %c0_22] : memref<32x64xf32, #tpu.memory_space<vmem>>, vector<32x64xf32>
    %cst_23 = arith.constant dense<0.000000e+00> : vector<2x64xf32>
    %78 = tpu.matmul %51, %77, %cst_23 {dimension_numbers = #tpu.dot_dimension_numbers<[1], [0], [0], [1], [0, 0, 1, 1], [], []>} : vector<2x32xf32>, vector<32x64xf32>, vector<2x64xf32> -> vector<2x64xf32>
    %79 = vector.extract_strided_slice %78 {offsets = [0, 0], sizes = [2, 32], strides = [1, 1]} : vector<2x64xf32> to vector<2x32xf32>
    %80 = arith.negf %79 : vector<2x32xf32>
    %81 = math.exp %80 : vector<2x32xf32>
    %cst_24 = arith.constant 1.000000e+00 : f32
    %82 = vector.broadcast %cst_24 : f32 to vector<2x32xf32>
    %83 = arith.addf %82, %81 : vector<2x32xf32>
    %84 = arith.divf %82, %83 : vector<2x32xf32>
    %85 = vector.extract_strided_slice %78 {offsets = [0, 32], sizes = [2, 32], strides = [1, 1]} : vector<2x64xf32> to vector<2x32xf32>
    %86 = math.tanh %85 : vector<2x32xf32>
    %87 = arith.subf %86, %51 : vector<2x32xf32>
    %88 = arith.mulf %84, %87 : vector<2x32xf32>
    %89 = arith.addf %51, %88 : vector<2x32xf32>
    %90 = arith.addf %76, %89 : vector<2x32xf32>
    %c0_25 = arith.constant 0 : index
    %c0_26 = arith.constant 0 : index
    %91 = vector.load %arg8[%c0_25, %c0_26] : memref<32x64xf32, #tpu.memory_space<vmem>>, vector<32x64xf32>
    %cst_27 = arith.constant dense<0.000000e+00> : vector<2x64xf32>
    %92 = tpu.matmul %64, %91, %cst_27 {dimension_numbers = #tpu.dot_dimension_numbers<[1], [0], [0], [1], [0, 0, 1, 1], [], []>} : vector<2x32xf32>, vector<32x64xf32>, vector<2x64xf32> -> vector<2x64xf32>
    %93 = vector.extract_strided_slice %92 {offsets = [0, 0], sizes = [2, 32], strides = [1, 1]} : vector<2x64xf32> to vector<2x32xf32>
    %94 = arith.negf %93 : vector<2x32xf32>
    %95 = math.exp %94 : vector<2x32xf32>
    %cst_28 = arith.constant 1.000000e+00 : f32
    %96 = vector.broadcast %cst_28 : f32 to vector<2x32xf32>
    %97 = arith.addf %96, %95 : vector<2x32xf32>
    %98 = arith.divf %96, %97 : vector<2x32xf32>
    %99 = vector.extract_strided_slice %92 {offsets = [0, 32], sizes = [2, 32], strides = [1, 1]} : vector<2x64xf32> to vector<2x32xf32>
    %100 = math.tanh %99 : vector<2x32xf32>
    %101 = arith.subf %100, %64 : vector<2x32xf32>
    %102 = arith.mulf %98, %101 : vector<2x32xf32>
    %103 = arith.addf %64, %102 : vector<2x32xf32>
    %104 = arith.addf %90, %103 : vector<2x32xf32>
    %c0_29 = arith.constant 0 : index
    %c0_30 = arith.constant 0 : index
    %105 = vector.load %arg9[%c0_29, %c0_30] : memref<32x128xf32, #tpu.memory_space<vmem>>, vector<32x128xf32>
    %cst_31 = arith.constant dense<0.000000e+00> : vector<2x128xf32>
    %106 = tpu.matmul %89, %105, %cst_31 {dimension_numbers = #tpu.dot_dimension_numbers<[1], [0], [0], [1], [0, 0, 1, 1], [], []>} : vector<2x32xf32>, vector<32x128xf32>, vector<2x128xf32> -> vector<2x128xf32>
    %107 = vector.extract_strided_slice %106 {offsets = [0, 0], sizes = [2, 32], strides = [1, 1]} : vector<2x128xf32> to vector<2x32xf32>
    %108 = arith.negf %107 : vector<2x32xf32>
    %109 = math.exp %108 : vector<2x32xf32>
    %cst_32 = arith.constant 1.000000e+00 : f32
    %110 = vector.broadcast %cst_32 : f32 to vector<2x32xf32>
    %111 = arith.addf %110, %109 : vector<2x32xf32>
    %112 = arith.divf %110, %111 : vector<2x32xf32>
    %113 = vector.extract_strided_slice %106 {offsets = [0, 32], sizes = [2, 32], strides = [1, 1]} : vector<2x128xf32> to vector<2x32xf32>
    %114 = arith.negf %113 : vector<2x32xf32>
    %115 = math.exp %114 : vector<2x32xf32>
    %cst_33 = arith.constant 1.000000e+00 : f32
    %116 = vector.broadcast %cst_33 : f32 to vector<2x32xf32>
    %117 = arith.addf %116, %115 : vector<2x32xf32>
    %118 = arith.divf %116, %117 : vector<2x32xf32>
    %119 = arith.subf %118, %89 : vector<2x32xf32>
    %120 = arith.mulf %112, %119 : vector<2x32xf32>
    %121 = arith.addf %89, %120 : vector<2x32xf32>
    %122 = arith.addf %104, %121 : vector<2x32xf32>
    %123 = vector.extract_strided_slice %106 {offsets = [0, 64], sizes = [2, 32], strides = [1, 1]} : vector<2x128xf32> to vector<2x32xf32>
    %124 = arith.negf %123 : vector<2x32xf32>
    %125 = math.exp %124 : vector<2x32xf32>
    %cst_34 = arith.constant 1.000000e+00 : f32
    %126 = vector.broadcast %cst_34 : f32 to vector<2x32xf32>
    %127 = arith.addf %126, %125 : vector<2x32xf32>
    %128 = arith.divf %126, %127 : vector<2x32xf32>
    %129 = vector.extract_strided_slice %106 {offsets = [0, 96], sizes = [2, 32], strides = [1, 1]} : vector<2x128xf32> to vector<2x32xf32>
    %cst_35 = arith.constant 0.000000e+00 : f32
    %130 = vector.broadcast %cst_35 : f32 to vector<2x32xf32>
    %131 = arith.maximumf %129, %130 : vector<2x32xf32>
    %132 = arith.subf %131, %89 : vector<2x32xf32>
    %133 = arith.mulf %128, %132 : vector<2x32xf32>
    %134 = arith.addf %89, %133 : vector<2x32xf32>
    %135 = arith.addf %122, %134 : vector<2x32xf32>
    %cst_36 = arith.constant 1.250000e-01 : f32
    %136 = vector.broadcast %cst_36 : f32 to vector<2x32xf32>
    %137 = arith.mulf %135, %136 : vector<2x32xf32>
    %138 = arith.index_cast %c0_i32_2 : i32 to index
    %c0_37 = arith.constant 0 : index
    %c0_38 = arith.constant 0 : index
    %139 = vector.load %arg10[%138, %c0_37, %c0_38] : memref<2x2x32xf32, #tpu.memory_space<vmem>>, vector<1x2x32xf32>
    %140 = vector.shape_cast %139 : vector<1x2x32xf32> to vector<2x32xf32>
    %141 = vector.shape_cast %137 : vector<2x32xf32> to vector<1x2x32xf32>
    tpu.vector_store %arg10[%138, %c0_37, %c0_38], %141 {strides = array<i32>} : memref<2x2x32xf32, #tpu.memory_space<vmem>>, vector<1x2x32xf32>,
    %c1_i32 = arith.constant 1 : i32
    %142 = arith.index_cast %c1_i32 : i32 to index
    %c0_39 = arith.constant 0 : index
    %c0_40 = arith.constant 0 : index
    %143 = vector.load %arg2[%142, %c0_39, %c0_40] : memref<2x2x64xf32, #tpu.memory_space<vmem>>, vector<1x2x64xf32>
    %144 = vector.shape_cast %143 : vector<1x2x64xf32> to vector<2x64xf32>
    %c0_41 = arith.constant 0 : index
    %c0_42 = arith.constant 0 : index
    %145 = vector.load %arg4[%c0_41, %c0_42] : memref<32x64xf32, #tpu.memory_space<vmem>>, vector<32x64xf32>
    %cst_43 = arith.constant dense<0.000000e+00> : vector<2x64xf32>
    %146 = tpu.matmul %137, %145, %cst_43 {dimension_numbers = #tpu.dot_dimension_numbers<[1], [0], [0], [1], [0, 0, 1, 1], [], []>} : vector<2x32xf32>, vector<32x64xf32>, vector<2x64xf32> -> vector<2x64xf32>
    %147 = arith.addf %144, %146 : vector<2x64xf32>
    %148 = vector.extract_strided_slice %147 {offsets = [0, 0], sizes = [2, 32], strides = [1, 1]} : vector<2x64xf32> to vector<2x32xf32>
    %149 = arith.negf %148 : vector<2x32xf32>
    %150 = math.exp %149 : vector<2x32xf32>
    %cst_44 = arith.constant 1.000000e+00 : f32
    %151 = vector.broadcast %cst_44 : f32 to vector<2x32xf32>
    %152 = arith.addf %151, %150 : vector<2x32xf32>
    %153 = arith.divf %151, %152 : vector<2x32xf32>
    %154 = vector.extract_strided_slice %147 {offsets = [0, 32], sizes = [2, 32], strides = [1, 1]} : vector<2x64xf32> to vector<2x32xf32>
    %155 = math.tanh %154 : vector<2x32xf32>
    %156 = arith.subf %155, %137 : vector<2x32xf32>
    %157 = arith.mulf %153, %156 : vector<2x32xf32>
    %158 = arith.addf %137, %157 : vector<2x32xf32>
    %c0_45 = arith.constant 0 : index
    %c0_46 = arith.constant 0 : index
    %159 = vector.load %arg5[%c0_45, %c0_46] : memref<32x64xf32, #tpu.memory_space<vmem>>, vector<32x64xf32>
    %cst_47 = arith.constant dense<0.000000e+00> : vector<2x64xf32>
    %160 = tpu.matmul %158, %159, %cst_47 {dimension_numbers = #tpu.dot_dimension_numbers<[1], [0], [0], [1], [0, 0, 1, 1], [], []>} : vector<2x32xf32>, vector<32x64xf32>, vector<2x64xf32> -> vector<2x64xf32>
    %161 = vector.extract_strided_slice %160 {offsets = [0, 0], sizes = [2, 32], strides = [1, 1]} : vector<2x64xf32> to vector<2x32xf32>
    %162 = arith.negf %161 : vector<2x32xf32>
    %163 = math.exp %162 : vector<2x32xf32>
    %cst_48 = arith.constant 1.000000e+00 : f32
    %164 = vector.broadcast %cst_48 : f32 to vector<2x32xf32>
    %165 = arith.addf %164, %163 : vector<2x32xf32>
    %166 = arith.divf %164, %165 : vector<2x32xf32>
    %167 = vector.extract_strided_slice %160 {offsets = [0, 32], sizes = [2, 32], strides = [1, 1]} : vector<2x64xf32> to vector<2x32xf32>
    %168 = arith.negf %167 : vector<2x32xf32>
    %169 = math.exp %168 : vector<2x32xf32>
    %cst_49 = arith.constant 1.000000e+00 : f32
    %170 = vector.broadcast %cst_49 : f32 to vector<2x32xf32>
    %171 = arith.addf %170, %169 : vector<2x32xf32>
    %172 = arith.divf %170, %171 : vector<2x32xf32>
    %173 = arith.subf %172, %158 : vector<2x32xf32>
    %174 = arith.mulf %166, %173 : vector<2x32xf32>
    %175 = arith.addf %158, %174 : vector<2x32xf32>
    %c0_50 = arith.constant 0 : index
    %c0_51 = arith.constant 0 : index
    %176 = vector.load %arg6[%c0_50, %c0_51] : memref<32x192xf32, #tpu.memory_space<vmem>>, vector<32x192xf32>
    %cst_52 = arith.constant dense<0.000000e+00> : vector<2x192xf32>
    %177 = tpu.matmul %175, %176, %cst_52 {dimension_numbers = #tpu.dot_dimension_numbers<[1], [0], [0], [1], [0, 0, 1, 1], [], []>} : vector<2x32xf32>, vector<32x192xf32>, vector<2x192xf32> -> vector<2x192xf32>
    %178 = vector.extract_strided_slice %177 {offsets = [0, 0], sizes = [2, 32], strides = [1, 1]} : vector<2x192xf32> to vector<2x32xf32>
    %179 = arith.negf %178 : vector<2x32xf32>
    %180 = math.exp %179 : vector<2x32xf32>
    %cst_53 = arith.constant 1.000000e+00 : f32
    %181 = vector.broadcast %cst_53 : f32 to vector<2x32xf32>
    %182 = arith.addf %181, %180 : vector<2x32xf32>
    %183 = arith.divf %181, %182 : vector<2x32xf32>
    %184 = vector.extract_strided_slice %177 {offsets = [0, 32], sizes = [2, 32], strides = [1, 1]} : vector<2x192xf32> to vector<2x32xf32>
    %cst_54 = arith.constant 0.000000e+00 : f32
    %185 = vector.broadcast %cst_54 : f32 to vector<2x32xf32>
    %186 = arith.maximumf %184, %185 : vector<2x32xf32>
    %187 = arith.subf %186, %175 : vector<2x32xf32>
    %188 = arith.mulf %183, %187 : vector<2x32xf32>
    %189 = arith.addf %175, %188 : vector<2x32xf32>
    %190 = arith.addf %175, %189 : vector<2x32xf32>
    %191 = vector.extract_strided_slice %177 {offsets = [0, 64], sizes = [2, 32], strides = [1, 1]} : vector<2x192xf32> to vector<2x32xf32>
    %192 = arith.negf %191 : vector<2x32xf32>
    %193 = math.exp %192 : vector<2x32xf32>
    %cst_55 = arith.constant 1.000000e+00 : f32
    %194 = vector.broadcast %cst_55 : f32 to vector<2x32xf32>
    %195 = arith.addf %194, %193 : vector<2x32xf32>
    %196 = arith.divf %194, %195 : vector<2x32xf32>
    %197 = vector.extract_strided_slice %177 {offsets = [0, 96], sizes = [2, 32], strides = [1, 1]} : vector<2x192xf32> to vector<2x32xf32>
    %cst_56 = arith.constant 0.000000e+00 : f32
    %198 = vector.broadcast %cst_56 : f32 to vector<2x32xf32>
    %199 = arith.maximumf %197, %198 : vector<2x32xf32>
    %200 = arith.subf %199, %175 : vector<2x32xf32>
    %201 = arith.mulf %196, %200 : vector<2x32xf32>
    %202 = arith.addf %175, %201 : vector<2x32xf32>
    %203 = arith.addf %190, %202 : vector<2x32xf32>
    %204 = vector.extract_strided_slice %177 {offsets = [0, 128], sizes = [2, 32], strides = [1, 1]} : vector<2x192xf32> to vector<2x32xf32>
    %205 = arith.negf %204 : vector<2x32xf32>
    %206 = math.exp %205 : vector<2x32xf32>
    %cst_57 = arith.constant 1.000000e+00 : f32
    %207 = vector.broadcast %cst_57 : f32 to vector<2x32xf32>
    %208 = arith.addf %207, %206 : vector<2x32xf32>
    %209 = arith.divf %207, %208 : vector<2x32xf32>
    %210 = vector.extract_strided_slice %177 {offsets = [0, 160], sizes = [2, 32], strides = [1, 1]} : vector<2x192xf32> to vector<2x32xf32>
    %211 = arith.subf %210, %175 : vector<2x32xf32>
    %212 = arith.mulf %209, %211 : vector<2x32xf32>
    %213 = arith.addf %175, %212 : vector<2x32xf32>
    %214 = arith.addf %203, %213 : vector<2x32xf32>
    %c0_58 = arith.constant 0 : index
    %c0_59 = arith.constant 0 : index
    %215 = vector.load %arg7[%c0_58, %c0_59] : memref<32x64xf32, #tpu.memory_space<vmem>>, vector<32x64xf32>
    %cst_60 = arith.constant dense<0.000000e+00> : vector<2x64xf32>
    %216 = tpu.matmul %189, %215, %cst_60 {dimension_numbers = #tpu.dot_dimension_numbers<[1], [0], [0], [1], [0, 0, 1, 1], [], []>} : vector<2x32xf32>, vector<32x64xf32>, vector<2x64xf32> -> vector<2x64xf32>
    %217 = vector.extract_strided_slice %216 {offsets = [0, 0], sizes = [2, 32], strides = [1, 1]} : vector<2x64xf32> to vector<2x32xf32>
    %218 = arith.negf %217 : vector<2x32xf32>
    %219 = math.exp %218 : vector<2x32xf32>
    %cst_61 = arith.constant 1.000000e+00 : f32
    %220 = vector.broadcast %cst_61 : f32 to vector<2x32xf32>
    %221 = arith.addf %220, %219 : vector<2x32xf32>
    %222 = arith.divf %220, %221 : vector<2x32xf32>
    %223 = vector.extract_strided_slice %216 {offsets = [0, 32], sizes = [2, 32], strides = [1, 1]} : vector<2x64xf32> to vector<2x32xf32>
    %224 = math.tanh %223 : vector<2x32xf32>
    %225 = arith.subf %224, %189 : vector<2x32xf32>
    %226 = arith.mulf %222, %225 : vector<2x32xf32>
    %227 = arith.addf %189, %226 : vector<2x32xf32>
    %228 = arith.addf %214, %227 : vector<2x32xf32>
    %c0_62 = arith.constant 0 : index
    %c0_63 = arith.constant 0 : index
    %229 = vector.load %arg8[%c0_62, %c0_63] : memref<32x64xf32, #tpu.memory_space<vmem>>, vector<32x64xf32>
    %cst_64 = arith.constant dense<0.000000e+00> : vector<2x64xf32>
    %230 = tpu.matmul %202, %229, %cst_64 {dimension_numbers = #tpu.dot_dimension_numbers<[1], [0], [0], [1], [0, 0, 1, 1], [], []>} : vector<2x32xf32>, vector<32x64xf32>, vector<2x64xf32> -> vector<2x64xf32>
    %231 = vector.extract_strided_slice %230 {offsets = [0, 0], sizes = [2, 32], strides = [1, 1]} : vector<2x64xf32> to vector<2x32xf32>
    %232 = arith.negf %231 : vector<2x32xf32>
    %233 = math.exp %232 : vector<2x32xf32>
    %cst_65 = arith.constant 1.000000e+00 : f32
    %234 = vector.broadcast %cst_65 : f32 to vector<2x32xf32>
    %235 = arith.addf %234, %233 : vector<2x32xf32>
    %236 = arith.divf %234, %235 : vector<2x32xf32>
    %237 = vector.extract_strided_slice %230 {offsets = [0, 32], sizes = [2, 32], strides = [1, 1]} : vector<2x64xf32> to vector<2x32xf32>
    %238 = math.tanh %237 : vector<2x32xf32>
    %239 = arith.subf %238, %202 : vector<2x32xf32>
    %240 = arith.mulf %236, %239 : vector<2x32xf32>
    %241 = arith.addf %202, %240 : vector<2x32xf32>
    %242 = arith.addf %228, %241 : vector<2x32xf32>
    %c0_66 = arith.constant 0 : index
    %c0_67 = arith.constant 0 : index
    %243 = vector.load %arg9[%c0_66, %c0_67] : memref<32x128xf32, #tpu.memory_space<vmem>>, vector<32x128xf32>
    %cst_68 = arith.constant dense<0.000000e+00> : vector<2x128xf32>
    %244 = tpu.matmul %227, %243, %cst_68 {dimension_numbers = #tpu.dot_dimension_numbers<[1], [0], [0], [1], [0, 0, 1, 1], [], []>} : vector<2x32xf32>, vector<32x128xf32>, vector<2x128xf32> -> vector<2x128xf32>
    %245 = vector.extract_strided_slice %244 {offsets = [0, 0], sizes = [2, 32], strides = [1, 1]} : vector<2x128xf32> to vector<2x32xf32>
    %246 = arith.negf %245 : vector<2x32xf32>
    %247 = math.exp %246 : vector<2x32xf32>
    %cst_69 = arith.constant 1.000000e+00 : f32
    %248 = vector.broadcast %cst_69 : f32 to vector<2x32xf32>
    %249 = arith.addf %248, %247 : vector<2x32xf32>
    %250 = arith.divf %248, %249 : vector<2x32xf32>
    %251 = vector.extract_strided_slice %244 {offsets = [0, 32], sizes = [2, 32], strides = [1, 1]} : vector<2x128xf32> to vector<2x32xf32>
    %252 = arith.negf %251 : vector<2x32xf32>
    %253 = math.exp %252 : vector<2x32xf32>
    %cst_70 = arith.constant 1.000000e+00 : f32
    %254 = vector.broadcast %cst_70 : f32 to vector<2x32xf32>
    %255 = arith.addf %254, %253 : vector<2x32xf32>
    %256 = arith.divf %254, %255 : vector<2x32xf32>
    %257 = arith.subf %256, %227 : vector<2x32xf32>
    %258 = arith.mulf %250, %257 : vector<2x32xf32>
    %259 = arith.addf %227, %258 : vector<2x32xf32>
    %260 = arith.addf %242, %259 : vector<2x32xf32>
    %261 = vector.extract_strided_slice %244 {offsets = [0, 64], sizes = [2, 32], strides = [1, 1]} : vector<2x128xf32> to vector<2x32xf32>
    %262 = arith.negf %261 : vector<2x32xf32>
    %263 = math.exp %262 : vector<2x32xf32>
    %cst_71 = arith.constant 1.000000e+00 : f32
    %264 = vector.broadcast %cst_71 : f32 to vector<2x32xf32>
    %265 = arith.addf %264, %263 : vector<2x32xf32>
    %266 = arith.divf %264, %265 : vector<2x32xf32>
    %267 = vector.extract_strided_slice %244 {offsets = [0, 96], sizes = [2, 32], strides = [1, 1]} : vector<2x128xf32> to vector<2x32xf32>
    %cst_72 = arith.constant 0.000000e+00 : f32
    %268 = vector.broadcast %cst_72 : f32 to vector<2x32xf32>
    %269 = arith.maximumf %267, %268 : vector<2x32xf32>
    %270 = arith.subf %269, %227 : vector<2x32xf32>
    %271 = arith.mulf %266, %270 : vector<2x32xf32>
    %272 = arith.addf %227, %271 : vector<2x32xf32>
    %273 = arith.addf %260, %272 : vector<2x32xf32>
    %cst_73 = arith.constant 1.250000e-01 : f32
    %274 = vector.broadcast %cst_73 : f32 to vector<2x32xf32>
    %275 = arith.mulf %273, %274 : vector<2x32xf32>
    %276 = arith.index_cast %c1_i32 : i32 to index
    %c0_74 = arith.constant 0 : index
    %c0_75 = arith.constant 0 : index
    %277 = vector.load %arg10[%276, %c0_74, %c0_75] : memref<2x2x32xf32, #tpu.memory_space<vmem>>, vector<1x2x32xf32>
    %278 = vector.shape_cast %277 : vector<1x2x32xf32> to vector<2x32xf32>
    %279 = vector.shape_cast %275 : vector<2x32xf32> to vector<1x2x32xf32>
    tpu.vector_store %arg10[%276, %c0_74, %c0_75], %279 {strides = array<i32>} : memref<2x2x32xf32, #tpu.memory_space<vmem>>, vector<1x2x32xf32>,
    %c2_i32 = arith.constant 2 : i32
    %c0_76 = arith.constant 0 : index
    %c0_77 = arith.constant 0 : index
    %280 = vector.load %arg11[%c0_76, %c0_77] : memref<2x32xf32, #tpu.memory_space<vmem>>, vector<2x32xf32>
    tpu.vector_store %arg11[%c0_76, %c0_77], %275 {strides = array<i32>} : memref<2x32xf32, #tpu.memory_space<vmem>>, vector<2x32xf32>,
    return
  }
  func.func @transform_0(%arg0: i32, %arg1: i32) -> (i32, i32, i32) {
    %c0_i32 = arith.constant 0 : i32
    %c0_i32_0 = arith.constant 0 : i32
    return %arg1, %arg0, %c0_i32 : i32, i32, i32
  }
  func.func @transform_1(%arg0: i32, %arg1: i32) -> (i32, i32) {
    %c0_i32 = arith.constant 0 : i32
    %c0_i32_0 = arith.constant 0 : i32
    return %arg0, %c0_i32 : i32, i32
  }
  func.func @transform_2(%arg0: i32, %arg1: i32) -> (i32, i32) {
    %c0_i32 = arith.constant 0 : i32
    %c0_i32_0 = arith.constant 0 : i32
    %c0_i32_1 = arith.constant 0 : i32
    return %c0_i32, %c0_i32_0 : i32, i32
  }
  func.func @transform_3(%arg0: i32, %arg1: i32) -> (i32, i32) {
    %c0_i32 = arith.constant 0 : i32
    %c0_i32_0 = arith.constant 0 : i32
    %c0_i32_1 = arith.constant 0 : i32
    return %c0_i32, %c0_i32_0 : i32, i32
  }
  func.func @transform_4(%arg0: i32, %arg1: i32) -> (i32, i32) {
    %c0_i32 = arith.constant 0 : i32
    %c0_i32_0 = arith.constant 0 : i32
    %c0_i32_1 = arith.constant 0 : i32
    return %c0_i32, %c0_i32_0 : i32, i32
  }
  func.func @transform_5(%arg0: i32, %arg1: i32) -> (i32, i32) {
    %c0_i32 = arith.constant 0 : i32
    %c0_i32_0 = arith.constant 0 : i32
    %c0_i32_1 = arith.constant 0 : i32
    return %c0_i32, %c0_i32_0 : i32, i32
  }
  func.func @transform_6(%arg0: i32, %arg1: i32) -> (i32, i32) {
    %c0_i32 = arith.constant 0 : i32
    %c0_i32_0 = arith.constant 0 : i32
    %c0_i32_1 = arith.constant 0 : i32
    return %c0_i32, %c0_i32_0 : i32, i32
  }
  func.func @transform_7(%arg0: i32, %arg1: i32) -> (i32, i32) {
    %c0_i32 = arith.constant 0 : i32
    %c0_i32_0 = arith.constant 0 : i32
    %c0_i32_1 = arith.constant 0 : i32
    return %c0_i32, %c0_i32_0 : i32, i32
  }
  func.func @transform_8(%arg0: i32, %arg1: i32) -> (i32, i32, i32) {
    %c0_i32 = arith.constant 0 : i32
    %c0_i32_0 = arith.constant 0 : i32
    return %arg1, %arg0, %c0_i32 : i32, i32, i32
  }
}

module attributes {stable_mosaic.version = 11 : i64} {
  func.func @kernel(%arg0: i32, %arg1: i32, %arg2: memref<2x2x64xf32, #tpu.memory_space<vmem>>, %arg3: memref<2x32xf32, #tpu.memory_space<vmem>>, %arg4: memref<32x64xf32, #tpu.memory_space<vmem>>, %arg5: memref<32x64xf32, #tpu.memory_space<vmem>>, %arg6: memref<32x192xf32, #tpu.memory_space<vmem>>, %arg7: memref<32x64xf32, #tpu.memory_space<vmem>>, %arg8: memref<32x64xf32, #tpu.memory_space<vmem>>, %arg9: memref<32x128xf32, #tpu.memory_space<vmem>>, %arg10: memref<2x2x32xf32, #tpu.memory_space<vmem>>, %arg11: memref<2x32xf32, #tpu.memory_space<vmem>>) attributes {dimension_semantics = [#tpu.dimension_semantics<parallel>, #tpu.dimension_semantics<arbitrary>], iteration_bounds = array<i64: 1, 4>, scalar_prefetch = 0 : i64, scratch_operands = 1 : i64, tpu.core_type = #tpu.core_type<tc>, window_params = [{transform_indices = @transform_0, window_bounds = array<i64: 2, 2, 64>}, {transform_indices = @transform_1, window_bounds = array<i64: 2, 32>}, {pipeline_mode = #tpu.pipeline_mode<synchronous>, transform_indices = @transform_2, window_bounds = array<i64: 32, 64>}, {pipeline_mode = #tpu.pipeline_mode<synchronous>, transform_indices = @transform_3, window_bounds = array<i64: 32, 64>}, {pipeline_mode = #tpu.pipeline_mode<synchronous>, transform_indices = @transform_4, window_bounds = array<i64: 32, 192>}, {pipeline_mode = #tpu.pipeline_mode<synchronous>, transform_indices = @transform_5, window_bounds = array<i64: 32, 64>}, {pipeline_mode = #tpu.pipeline_mode<synchronous>, transform_indices = @transform_6, window_bounds = array<i64: 32, 64>}, {pipeline_mode = #tpu.pipeline_mode<synchronous>, transform_indices = @transform_7, window_bounds = array<i64: 32, 128>}, {transform_indices = @transform_8, window_bounds = array<i64: 2, 2, 32>}]} {
    %c0_i32 = arith.constant 0 : i32
    %0 = arith.cmpi eq, %arg1, %c0_i32 : i32
    %1 = arith.extui %0 : i1 to i32
    %c0_i32_0 = arith.constant 0 : i32
    %2 = arith.cmpi ne, %1, %c0_i32_0 : i32
    scf.if %2 {
      %c0_78 = arith.constant 0 : index
      %c0_79 = arith.constant 0 : index
      %281 = vector.load %arg3[%c0_78, %c0_79] : memref<2x32xf32, #tpu.memory_space<vmem>>, vector<2x32xf32>
      %c0_80 = arith.constant 0 : index
      %c0_81 = arith.constant 0 : index
      %282 = vector.load %arg11[%c0_80, %c0_81] : memref<2x32xf32, #tpu.memory_space<vmem>>, vector<2x32xf32>
      tpu.vector_store %arg11[%c0_80, %c0_81], %281 {strides = array<i32>} : memref<2x32xf32, #tpu.memory_space<vmem>>, vector<2x32xf32>,
    } else {
    }
    %c0 = arith.constant 0 : index
    %c0_1 = arith.constant 0 : index
    %3 = vector.load %arg11[%c0, %c0_1] : memref<2x32xf32, #tpu.memory_space<vmem>>, vector<2x32xf32>
    %c0_i32_2 = arith.constant 0 : i32
    %4 = arith.index_cast %c0_i32_2 : i32 to index
    %c0_3 = arith.constant 0 : index
    %c0_4 = arith.constant 0 : index
    %5 = vector.load %arg2[%4, %c0_3, %c0_4] : memref<2x2x64xf32, #tpu.memory_space<vmem>>, vector<1x2x64xf32>
    %6 = vector.shape_cast %5 : vector<1x2x64xf32> to vector<2x64xf32>
    %c0_5 = arith.constant 0 : index
    %c0_6 = arith.constant 0 : index
    %7 = vector.load %arg4[%c0_5, %c0_6] : memref<32x64xf32, #tpu.memory_space<vmem>>, vector<32x64xf32>
    %cst = arith.constant dense<0.000000e+00> : vector<2x64xf32>
    %8 = tpu.matmul %3, %7, %cst {dimension_numbers = #tpu.dot_dimension_numbers<[1], [0], [0], [1], [0, 0, 1, 1], [], []>} : vector<2x32xf32>, vector<32x64xf32>, vector<2x64xf32> -> vector<2x64xf32>
    %9 = arith.addf %6, %8 : vector<2x64xf32>
    %10 = vector.extract_strided_slice %9 {offsets = [0, 0], sizes = [2, 32], strides = [1, 1]} : vector<2x64xf32> to vector<2x32xf32>
    %11 = arith.negf %10 : vector<2x32xf32>
    %12 = math.exp %11 : vector<2x32xf32>
    %cst_7 = arith.constant 1.000000e+00 : f32
    %13 = vector.broadcast %cst_7 : f32 to vector<2x32xf32>
    %14 = arith.addf %13, %12 : vector<2x32xf32>
    %15 = arith.divf %13, %14 : vector<2x32xf32>
    %16 = vector.extract_strided_slice %9 {offsets = [0, 32], sizes = [2, 32], strides = [1, 1]} : vector<2x64xf32> to vector<2x32xf32>
    %17 = math.tanh %16 : vector<2x32xf32>
    %18 = arith.subf %17, %3 : vector<2x32xf32>
    %19 = arith.mulf %15, %18 : vector<2x32xf32>
    %20 = arith.addf %3, %19 : vector<2x32xf32>
    %c0_8 = arith.constant 0 : index
    %c0_9 = arith.constant 0 : index
    %21 = vector.load %arg5[%c0_8, %c0_9] : memref<32x64xf32, #tpu.memory_space<vmem>>, vector<32x64xf32>
    %cst_10 = arith.constant dense<0.000000e+00> : vector<2x64xf32>
    %22 = tpu.matmul %20, %21, %cst_10 {dimension_numbers = #tpu.dot_dimension_numbers<[1], [0], [0], [1], [0, 0, 1, 1], [], []>} : vector<2x32xf32>, vector<32x64xf32>, vector<2x64xf32> -> vector<2x64xf32>
    %23 = vector.extract_strided_slice %22 {offsets = [0, 0], sizes = [2, 32], strides = [1, 1]} : vector<2x64xf32> to vector<2x32xf32>
    %24 = arith.negf %23 : vector<2x32xf32>
    %25 = math.exp %24 : vector<2x32xf32>
    %cst_11 = arith.constant 1.000000e+00 : f32
    %26 = vector.broadcast %cst_11 : f32 to vector<2x32xf32>
    %27 = arith.addf %26, %25 : vector<2x32xf32>
    %28 = arith.divf %26, %27 : vector<2x32xf32>
    %29 = vector.extract_strided_slice %22 {offsets = [0, 32], sizes = [2, 32], strides = [1, 1]} : vector<2x64xf32> to vector<2x32xf32>
    %30 = arith.negf %29 : vector<2x32xf32>
    %31 = math.exp %30 : vector<2x32xf32>
    %cst_12 = arith.constant 1.000000e+00 : f32
    %32 = vector.broadcast %cst_12 : f32 to vector<2x32xf32>
    %33 = arith.addf %32, %31 : vector<2x32xf32>
    %34 = arith.divf %32, %33 : vector<2x32xf32>
    %35 = arith.subf %34, %20 : vector<2x32xf32>
    %36 = arith.mulf %28, %35 : vector<2x32xf32>
    %37 = arith.addf %20, %36 : vector<2x32xf32>
    %c0_13 = arith.constant 0 : index
    %c0_14 = arith.constant 0 : index
    %38 = vector.load %arg6[%c0_13, %c0_14] : memref<32x192xf32, #tpu.memory_space<vmem>>, vector<32x192xf32>
    %cst_15 = arith.constant dense<0.000000e+00> : vector<2x192xf32>
    %39 = tpu.matmul %37, %38, %cst_15 {dimension_numbers = #tpu.dot_dimension_numbers<[1], [0], [0], [1], [0, 0, 1, 1], [], []>} : vector<2x32xf32>, vector<32x192xf32>, vector<2x192xf32> -> vector<2x192xf32>
    %40 = vector.extract_strided_slice %39 {offsets = [0, 0], sizes = [2, 32], strides = [1, 1]} : vector<2x192xf32> to vector<2x32xf32>
    %41 = arith.negf %40 : vector<2x32xf32>
    %42 = math.exp %41 : vector<2x32xf32>
    %cst_16 = arith.constant 1.000000e+00 : f32
    %43 = vector.broadcast %cst_16 : f32 to vector<2x32xf32>
    %44 = arith.addf %43, %42 : vector<2x32xf32>
    %45 = arith.divf %43, %44 : vector<2x32xf32>
    %46 = vector.extract_strided_slice %39 {offsets = [0, 32], sizes = [2, 32], strides = [1, 1]} : vector<2x192xf32> to vector<2x32xf32>
    %cst_17 = arith.constant 0.000000e+00 : f32
    %47 = vector.broadcast %cst_17 : f32 to vector<2x32xf32>
    %48 = arith.maximumf %46, %47 : vector<2x32xf32>
    %49 = arith.subf %48, %37 : vector<2x32xf32>
    %50 = arith.mulf %45, %49 : vector<2x32xf32>
    %51 = arith.addf %37, %50 : vector<2x32xf32>
    %52 = arith.addf %37, %51 : vector<2x32xf32>
    %53 = vector.extract_strided_slice %39 {offsets = [0, 64], sizes = [2, 32], strides = [1, 1]} : vector<2x192xf32> to vector<2x32xf32>
    %54 = arith.negf %53 : vector<2x32xf32>
    %55 = math.exp %54 : vector<2x32xf32>
    %cst_18 = arith.constant 1.000000e+00 : f32
    %56 = vector.broadcast %cst_18 : f32 to vector<2x32xf32>
    %57 = arith.addf %56, %55 : vector<2x32xf32>
    %58 = arith.divf %56, %57 : vector<2x32xf32>
    %59 = vector.extract_strided_slice %39 {offsets = [0, 96], sizes = [2, 32], strides = [1, 1]} : vector<2x192xf32> to vector<2x32xf32>
    %cst_19 = arith.constant 0.000000e+00 : f32
    %60 = vector.broadcast %cst_19 : f32 to vector<2x32xf32>
    %61 = arith.maximumf %59, %60 : vector<2x32xf32>
    %62 = arith.subf %61, %37 : vector<2x32xf32>
    %63 = arith.mulf %58, %62 : vector<2x32xf32>
    %64 = arith.addf %37, %63 : vector<2x32xf32>
    %65 = arith.addf %52, %64 : vector<2x32xf32>
    %66 = vector.extract_strided_slice %39 {offsets = [0, 128], sizes = [2, 32], strides = [1, 1]} : vector<2x192xf32> to vector<2x32xf32>
    %67 = arith.negf %66 : vector<2x32xf32>
    %68 = math.exp %67 : vector<2x32xf32>
    %cst_20 = arith.constant 1.000000e+00 : f32
    %69 = vector.broadcast %cst_20 : f32 to vector<2x32xf32>
    %70 = arith.addf %69, %68 : vector<2x32xf32>
    %71 = arith.divf %69, %70 : vector<2x32xf32>
    %72 = vector.extract_strided_slice %39 {offsets = [0, 160], sizes = [2, 32], strides = [1, 1]} : vector<2x192xf32> to vector<2x32xf32>
    %73 = arith.subf %72, %37 : vector<2x32xf32>
    %74 = arith.mulf %71, %73 : vector<2x32xf32>
    %75 = arith.addf %37, %74 : vector<2x32xf32>
    %76 = arith.addf %65, %75 : vector<2x32xf32>
    %c0_21 = arith.constant 0 : index
    %c0_22 = arith.constant 0 : index
    %77 = vector.load %arg7[%c0_21, %c0_22] : memref<32x64xf32, #tpu.memory_space<vmem>>, vector<32x64xf32>
    %cst_23 = arith.constant dense<0.000000e+00> : vector<2x64xf32>
    %78 = tpu.matmul %51, %77, %cst_23 {dimension_numbers = #tpu.dot_dimension_numbers<[1], [0], [0], [1], [0, 0, 1, 1], [], []>} : vector<2x32xf32>, vector<32x64xf32>, vector<2x64xf32> -> vector<2x64xf32>
    %79 = vector.extract_strided_slice %78 {offsets = [0, 0], sizes = [2, 32], strides = [1, 1]} : vector<2x64xf32> to vector<2x32xf32>
    %80 = arith.negf %79 : vector<2x32xf32>
    %81 = math.exp %80 : vector<2x32xf32>
    %cst_24 = arith.constant 1.000000e+00 : f32
    %82 = vector.broadcast %cst_24 : f32 to vector<2x32xf32>
    %83 = arith.addf %82, %81 : vector<2x32xf32>
    %84 = arith.divf %82, %83 : vector<2x32xf32>
    %85 = vector.extract_strided_slice %78 {offsets = [0, 32], sizes = [2, 32], strides = [1, 1]} : vector<2x64xf32> to vector<2x32xf32>
    %86 = math.tanh %85 : vector<2x32xf32>
    %87 = arith.subf %86, %51 : vector<2x32xf32>
    %88 = arith.mulf %84, %87 : vector<2x32xf32>
    %89 = arith.addf %51, %88 : vector<2x32xf32>
    %90 = arith.addf %76, %89 : vector<2x32xf32>
    %c0_25 = arith.constant 0 : index
    %c0_26 = arith.constant 0 : index
    %91 = vector.load %arg8[%c0_25, %c0_26] : memref<32x64xf32, #tpu.memory_space<vmem>>, vector<32x64xf32>
    %cst_27 = arith.constant dense<0.000000e+00> : vector<2x64xf32>
    %92 = tpu.matmul %64, %91, %cst_27 {dimension_numbers = #tpu.dot_dimension_numbers<[1], [0], [0], [1], [0, 0, 1, 1], [], []>} : vector<2x32xf32>, vector<32x64xf32>, vector<2x64xf32> -> vector<2x64xf32>
    %93 = vector.extract_strided_slice %92 {offsets = [0, 0], sizes = [2, 32], strides = [1, 1]} : vector<2x64xf32> to vector<2x32xf32>
    %94 = arith.negf %93 : vector<2x32xf32>
    %95 = math.exp %94 : vector<2x32xf32>
    %cst_28 = arith.constant 1.000000e+00 : f32
    %96 = vector.broadcast %cst_28 : f32 to vector<2x32xf32>
    %97 = arith.addf %96, %95 : vector<2x32xf32>
    %98 = arith.divf %96, %97 : vector<2x32xf32>
    %99 = vector.extract_strided_slice %92 {offsets = [0, 32], sizes = [2, 32], strides = [1, 1]} : vector<2x64xf32> to vector<2x32xf32>
    %100 = math.tanh %99 : vector<2x32xf32>
    %101 = arith.subf %100, %64 : vector<2x32xf32>
    %102 = arith.mulf %98, %101 : vector<2x32xf32>
    %103 = arith.addf %64, %102 : vector<2x32xf32>
    %104 = arith.addf %90, %103 : vector<2x32xf32>
    %c0_29 = arith.constant 0 : index
    %c0_30 = arith.constant 0 : index
    %105 = vector.load %arg9[%c0_29, %c0_30] : memref<32x128xf32, #tpu.memory_space<vmem>>, vector<32x128xf32>
    %cst_31 = arith.constant dense<0.000000e+00> : vector<2x128xf32>
    %106 = tpu.matmul %89, %105, %cst_31 {dimension_numbers = #tpu.dot_dimension_numbers<[1], [0], [0], [1], [0, 0, 1, 1], [], []>} : vector<2x32xf32>, vector<32x128xf32>, vector<2x128xf32> -> vector<2x128xf32>
    %107 = vector.extract_strided_slice %106 {offsets = [0, 0], sizes = [2, 32], strides = [1, 1]} : vector<2x128xf32> to vector<2x32xf32>
    %108 = arith.negf %107 : vector<2x32xf32>
    %109 = math.exp %108 : vector<2x32xf32>
    %cst_32 = arith.constant 1.000000e+00 : f32
    %110 = vector.broadcast %cst_32 : f32 to vector<2x32xf32>
    %111 = arith.addf %110, %109 : vector<2x32xf32>
    %112 = arith.divf %110, %111 : vector<2x32xf32>
    %113 = vector.extract_strided_slice %106 {offsets = [0, 32], sizes = [2, 32], strides = [1, 1]} : vector<2x128xf32> to vector<2x32xf32>
    %114 = arith.negf %113 : vector<2x32xf32>
    %115 = math.exp %114 : vector<2x32xf32>
    %cst_33 = arith.constant 1.000000e+00 : f32
    %116 = vector.broadcast %cst_33 : f32 to vector<2x32xf32>
    %117 = arith.addf %116, %115 : vector<2x32xf32>
    %118 = arith.divf %116, %117 : vector<2x32xf32>
    %119 = arith.subf %118, %89 : vector<2x32xf32>
    %120 = arith.mulf %112, %119 : vector<2x32xf32>
    %121 = arith.addf %89, %120 : vector<2x32xf32>
    %122 = arith.addf %104, %121 : vector<2x32xf32>
    %123 = vector.extract_strided_slice %106 {offsets = [0, 64], sizes = [2, 32], strides = [1, 1]} : vector<2x128xf32> to vector<2x32xf32>
    %124 = arith.negf %123 : vector<2x32xf32>
    %125 = math.exp %124 : vector<2x32xf32>
    %cst_34 = arith.constant 1.000000e+00 : f32
    %126 = vector.broadcast %cst_34 : f32 to vector<2x32xf32>
    %127 = arith.addf %126, %125 : vector<2x32xf32>
    %128 = arith.divf %126, %127 : vector<2x32xf32>
    %129 = vector.extract_strided_slice %106 {offsets = [0, 96], sizes = [2, 32], strides = [1, 1]} : vector<2x128xf32> to vector<2x32xf32>
    %cst_35 = arith.constant 0.000000e+00 : f32
    %130 = vector.broadcast %cst_35 : f32 to vector<2x32xf32>
    %131 = arith.maximumf %129, %130 : vector<2x32xf32>
    %132 = arith.subf %131, %89 : vector<2x32xf32>
    %133 = arith.mulf %128, %132 : vector<2x32xf32>
    %134 = arith.addf %89, %133 : vector<2x32xf32>
    %135 = arith.addf %122, %134 : vector<2x32xf32>
    %cst_36 = arith.constant 1.250000e-01 : f32
    %136 = vector.broadcast %cst_36 : f32 to vector<2x32xf32>
    %137 = arith.mulf %135, %136 : vector<2x32xf32>
    %138 = arith.index_cast %c0_i32_2 : i32 to index
    %c0_37 = arith.constant 0 : index
    %c0_38 = arith.constant 0 : index
    %139 = vector.load %arg10[%138, %c0_37, %c0_38] : memref<2x2x32xf32, #tpu.memory_space<vmem>>, vector<1x2x32xf32>
    %140 = vector.shape_cast %139 : vector<1x2x32xf32> to vector<2x32xf32>
    %141 = vector.shape_cast %137 : vector<2x32xf32> to vector<1x2x32xf32>
    tpu.vector_store %arg10[%138, %c0_37, %c0_38], %141 {strides = array<i32>} : memref<2x2x32xf32, #tpu.memory_space<vmem>>, vector<1x2x32xf32>,
    %c1_i32 = arith.constant 1 : i32
    %142 = arith.index_cast %c1_i32 : i32 to index
    %c0_39 = arith.constant 0 : index
    %c0_40 = arith.constant 0 : index
    %143 = vector.load %arg2[%142, %c0_39, %c0_40] : memref<2x2x64xf32, #tpu.memory_space<vmem>>, vector<1x2x64xf32>
    %144 = vector.shape_cast %143 : vector<1x2x64xf32> to vector<2x64xf32>
    %c0_41 = arith.constant 0 : index
    %c0_42 = arith.constant 0 : index
    %145 = vector.load %arg4[%c0_41, %c0_42] : memref<32x64xf32, #tpu.memory_space<vmem>>, vector<32x64xf32>
    %cst_43 = arith.constant dense<0.000000e+00> : vector<2x64xf32>
    %146 = tpu.matmul %137, %145, %cst_43 {dimension_numbers = #tpu.dot_dimension_numbers<[1], [0], [0], [1], [0, 0, 1, 1], [], []>} : vector<2x32xf32>, vector<32x64xf32>, vector<2x64xf32> -> vector<2x64xf32>
    %147 = arith.addf %144, %146 : vector<2x64xf32>
    %148 = vector.extract_strided_slice %147 {offsets = [0, 0], sizes = [2, 32], strides = [1, 1]} : vector<2x64xf32> to vector<2x32xf32>
    %149 = arith.negf %148 : vector<2x32xf32>
    %150 = math.exp %149 : vector<2x32xf32>
    %cst_44 = arith.constant 1.000000e+00 : f32
    %151 = vector.broadcast %cst_44 : f32 to vector<2x32xf32>
    %152 = arith.addf %151, %150 : vector<2x32xf32>
    %153 = arith.divf %151, %152 : vector<2x32xf32>
    %154 = vector.extract_strided_slice %147 {offsets = [0, 32], sizes = [2, 32], strides = [1, 1]} : vector<2x64xf32> to vector<2x32xf32>
    %155 = math.tanh %154 : vector<2x32xf32>
    %156 = arith.subf %155, %137 : vector<2x32xf32>
    %157 = arith.mulf %153, %156 : vector<2x32xf32>
    %158 = arith.addf %137, %157 : vector<2x32xf32>
    %c0_45 = arith.constant 0 : index
    %c0_46 = arith.constant 0 : index
    %159 = vector.load %arg5[%c0_45, %c0_46] : memref<32x64xf32, #tpu.memory_space<vmem>>, vector<32x64xf32>
    %cst_47 = arith.constant dense<0.000000e+00> : vector<2x64xf32>
    %160 = tpu.matmul %158, %159, %cst_47 {dimension_numbers = #tpu.dot_dimension_numbers<[1], [0], [0], [1], [0, 0, 1, 1], [], []>} : vector<2x32xf32>, vector<32x64xf32>, vector<2x64xf32> -> vector<2x64xf32>
    %161 = vector.extract_strided_slice %160 {offsets = [0, 0], sizes = [2, 32], strides = [1, 1]} : vector<2x64xf32> to vector<2x32xf32>
    %162 = arith.negf %161 : vector<2x32xf32>
    %163 = math.exp %162 : vector<2x32xf32>
    %cst_48 = arith.constant 1.000000e+00 : f32
    %164 = vector.broadcast %cst_48 : f32 to vector<2x32xf32>
    %165 = arith.addf %164, %163 : vector<2x32xf32>
    %166 = arith.divf %164, %165 : vector<2x32xf32>
    %167 = vector.extract_strided_slice %160 {offsets = [0, 32], sizes = [2, 32], strides = [1, 1]} : vector<2x64xf32> to vector<2x32xf32>
    %168 = arith.negf %167 : vector<2x32xf32>
    %169 = math.exp %168 : vector<2x32xf32>
    %cst_49 = arith.constant 1.000000e+00 : f32
    %170 = vector.broadcast %cst_49 : f32 to vector<2x32xf32>
    %171 = arith.addf %170, %169 : vector<2x32xf32>
    %172 = arith.divf %170, %171 : vector<2x32xf32>
    %173 = arith.subf %172, %158 : vector<2x32xf32>
    %174 = arith.mulf %166, %173 : vector<2x32xf32>
    %175 = arith.addf %158, %174 : vector<2x32xf32>
    %c0_50 = arith.constant 0 : index
    %c0_51 = arith.constant 0 : index
    %176 = vector.load %arg6[%c0_50, %c0_51] : memref<32x192xf32, #tpu.memory_space<vmem>>, vector<32x192xf32>
    %cst_52 = arith.constant dense<0.000000e+00> : vector<2x192xf32>
    %177 = tpu.matmul %175, %176, %cst_52 {dimension_numbers = #tpu.dot_dimension_numbers<[1], [0], [0], [1], [0, 0, 1, 1], [], []>} : vector<2x32xf32>, vector<32x192xf32>, vector<2x192xf32> -> vector<2x192xf32>
    %178 = vector.extract_strided_slice %177 {offsets = [0, 0], sizes = [2, 32], strides = [1, 1]} : vector<2x192xf32> to vector<2x32xf32>
    %179 = arith.negf %178 : vector<2x32xf32>
    %180 = math.exp %179 : vector<2x32xf32>
    %cst_53 = arith.constant 1.000000e+00 : f32
    %181 = vector.broadcast %cst_53 : f32 to vector<2x32xf32>
    %182 = arith.addf %181, %180 : vector<2x32xf32>
    %183 = arith.divf %181, %182 : vector<2x32xf32>
    %184 = vector.extract_strided_slice %177 {offsets = [0, 32], sizes = [2, 32], strides = [1, 1]} : vector<2x192xf32> to vector<2x32xf32>
    %cst_54 = arith.constant 0.000000e+00 : f32
    %185 = vector.broadcast %cst_54 : f32 to vector<2x32xf32>
    %186 = arith.maximumf %184, %185 : vector<2x32xf32>
    %187 = arith.subf %186, %175 : vector<2x32xf32>
    %188 = arith.mulf %183, %187 : vector<2x32xf32>
    %189 = arith.addf %175, %188 : vector<2x32xf32>
    %190 = arith.addf %175, %189 : vector<2x32xf32>
    %191 = vector.extract_strided_slice %177 {offsets = [0, 64], sizes = [2, 32], strides = [1, 1]} : vector<2x192xf32> to vector<2x32xf32>
    %192 = arith.negf %191 : vector<2x32xf32>
    %193 = math.exp %192 : vector<2x32xf32>
    %cst_55 = arith.constant 1.000000e+00 : f32
    %194 = vector.broadcast %cst_55 : f32 to vector<2x32xf32>
    %195 = arith.addf %194, %193 : vector<2x32xf32>
    %196 = arith.divf %194, %195 : vector<2x32xf32>
    %197 = vector.extract_strided_slice %177 {offsets = [0, 96], sizes = [2, 32], strides = [1, 1]} : vector<2x192xf32> to vector<2x32xf32>
    %cst_56 = arith.constant 0.000000e+00 : f32
    %198 = vector.broadcast %cst_56 : f32 to vector<2x32xf32>
    %199 = arith.maximumf %197, %198 : vector<2x32xf32>
    %200 = arith.subf %199, %175 : vector<2x32xf32>
    %201 = arith.mulf %196, %200 : vector<2x32xf32>
    %202 = arith.addf %175, %201 : vector<2x32xf32>
    %203 = arith.addf %190, %202 : vector<2x32xf32>
    %204 = vector.extract_strided_slice %177 {offsets = [0, 128], sizes = [2, 32], strides = [1, 1]} : vector<2x192xf32> to vector<2x32xf32>
    %205 = arith.negf %204 : vector<2x32xf32>
    %206 = math.exp %205 : vector<2x32xf32>
    %cst_57 = arith.constant 1.000000e+00 : f32
    %207 = vector.broadcast %cst_57 : f32 to vector<2x32xf32>
    %208 = arith.addf %207, %206 : vector<2x32xf32>
    %209 = arith.divf %207, %208 : vector<2x32xf32>
    %210 = vector.extract_strided_slice %177 {offsets = [0, 160], sizes = [2, 32], strides = [1, 1]} : vector<2x192xf32> to vector<2x32xf32>
    %211 = arith.subf %210, %175 : vector<2x32xf32>
    %212 = arith.mulf %209, %211 : vector<2x32xf32>
    %213 = arith.addf %175, %212 : vector<2x32xf32>
    %214 = arith.addf %203, %213 : vector<2x32xf32>
    %c0_58 = arith.constant 0 : index
    %c0_59 = arith.constant 0 : index
    %215 = vector.load %arg7[%c0_58, %c0_59] : memref<32x64xf32, #tpu.memory_space<vmem>>, vector<32x64xf32>
    %cst_60 = arith.constant dense<0.000000e+00> : vector<2x64xf32>
    %216 = tpu.matmul %189, %215, %cst_60 {dimension_numbers = #tpu.dot_dimension_numbers<[1], [0], [0], [1], [0, 0, 1, 1], [], []>} : vector<2x32xf32>, vector<32x64xf32>, vector<2x64xf32> -> vector<2x64xf32>
    %217 = vector.extract_strided_slice %216 {offsets = [0, 0], sizes = [2, 32], strides = [1, 1]} : vector<2x64xf32> to vector<2x32xf32>
    %218 = arith.negf %217 : vector<2x32xf32>
    %219 = math.exp %218 : vector<2x32xf32>
    %cst_61 = arith.constant 1.000000e+00 : f32
    %220 = vector.broadcast %cst_61 : f32 to vector<2x32xf32>
    %221 = arith.addf %220, %219 : vector<2x32xf32>
    %222 = arith.divf %220, %221 : vector<2x32xf32>
    %223 = vector.extract_strided_slice %216 {offsets = [0, 32], sizes = [2, 32], strides = [1, 1]} : vector<2x64xf32> to vector<2x32xf32>
    %224 = math.tanh %223 : vector<2x32xf32>
    %225 = arith.subf %224, %189 : vector<2x32xf32>
    %226 = arith.mulf %222, %225 : vector<2x32xf32>
    %227 = arith.addf %189, %226 : vector<2x32xf32>
    %228 = arith.addf %214, %227 : vector<2x32xf32>
    %c0_62 = arith.constant 0 : index
    %c0_63 = arith.constant 0 : index
    %229 = vector.load %arg8[%c0_62, %c0_63] : memref<32x64xf32, #tpu.memory_space<vmem>>, vector<32x64xf32>
    %cst_64 = arith.constant dense<0.000000e+00> : vector<2x64xf32>
    %230 = tpu.matmul %202, %229, %cst_64 {dimension_numbers = #tpu.dot_dimension_numbers<[1], [0], [0], [1], [0, 0, 1, 1], [], []>} : vector<2x32xf32>, vector<32x64xf32>, vector<2x64xf32> -> vector<2x64xf32>
    %231 = vector.extract_strided_slice %230 {offsets = [0, 0], sizes = [2, 32], strides = [1, 1]} : vector<2x64xf32> to vector<2x32xf32>
    %232 = arith.negf %231 : vector<2x32xf32>
    %233 = math.exp %232 : vector<2x32xf32>
    %cst_65 = arith.constant 1.000000e+00 : f32
    %234 = vector.broadcast %cst_65 : f32 to vector<2x32xf32>
    %235 = arith.addf %234, %233 : vector<2x32xf32>
    %236 = arith.divf %234, %235 : vector<2x32xf32>
    %237 = vector.extract_strided_slice %230 {offsets = [0, 32], sizes = [2, 32], strides = [1, 1]} : vector<2x64xf32> to vector<2x32xf32>
    %238 = math.tanh %237 : vector<2x32xf32>
    %239 = arith.subf %238, %202 : vector<2x32xf32>
    %240 = arith.mulf %236, %239 : vector<2x32xf32>
    %241 = arith.addf %202, %240 : vector<2x32xf32>
    %242 = arith.addf %228, %241 : vector<2x32xf32>
    %c0_66 = arith.constant 0 : index
    %c0_67 = arith.constant 0 : index
    %243 = vector.load %arg9[%c0_66, %c0_67] : memref<32x128xf32, #tpu.memory_space<vmem>>, vector<32x128xf32>
    %cst_68 = arith.constant dense<0.000000e+00> : vector<2x128xf32>
    %244 = tpu.matmul %227, %243, %cst_68 {dimension_numbers = #tpu.dot_dimension_numbers<[1], [0], [0], [1], [0, 0, 1, 1], [], []>} : vector<2x32xf32>, vector<32x128xf32>, vector<2x128xf32> -> vector<2x128xf32>
    %245 = vector.extract_strided_slice %244 {offsets = [0, 0], sizes = [2, 32], strides = [1, 1]} : vector<2x128xf32> to vector<2x32xf32>
    %246 = arith.negf %245 : vector<2x32xf32>
    %247 = math.exp %246 : vector<2x32xf32>
    %cst_69 = arith.constant 1.000000e+00 : f32
    %248 = vector.broadcast %cst_69 : f32 to vector<2x32xf32>
    %249 = arith.addf %248, %247 : vector<2x32xf32>
    %250 = arith.divf %248, %249 : vector<2x32xf32>
    %251 = vector.extract_strided_slice %244 {offsets = [0, 32], sizes = [2, 32], strides = [1, 1]} : vector<2x128xf32> to vector<2x32xf32>
    %252 = arith.negf %251 : vector<2x32xf32>
    %253 = math.exp %252 : vector<2x32xf32>
    %cst_70 = arith.constant 1.000000e+00 : f32
    %254 = vector.broadcast %cst_70 : f32 to vector<2x32xf32>
    %255 = arith.addf %254, %253 : vector<2x32xf32>
    %256 = arith.divf %254, %255 : vector<2x32xf32>
    %257 = arith.subf %256, %227 : vector<2x32xf32>
    %258 = arith.mulf %250, %257 : vector<2x32xf32>
    %259 = arith.addf %227, %258 : vector<2x32xf32>
    %260 = arith.addf %242, %259 : vector<2x32xf32>
    %261 = vector.extract_strided_slice %244 {offsets = [0, 64], sizes = [2, 32], strides = [1, 1]} : vector<2x128xf32> to vector<2x32xf32>
    %262 = arith.negf %261 : vector<2x32xf32>
    %263 = math.exp %262 : vector<2x32xf32>
    %cst_71 = arith.constant 1.000000e+00 : f32
    %264 = vector.broadcast %cst_71 : f32 to vector<2x32xf32>
    %265 = arith.addf %264, %263 : vector<2x32xf32>
    %266 = arith.divf %264, %265 : vector<2x32xf32>
    %267 = vector.extract_strided_slice %244 {offsets = [0, 96], sizes = [2, 32], strides = [1, 1]} : vector<2x128xf32> to vector<2x32xf32>
    %cst_72 = arith.constant 0.000000e+00 : f32
    %268 = vector.broadcast %cst_72 : f32 to vector<2x32xf32>
    %269 = arith.maximumf %267, %268 : vector<2x32xf32>
    %270 = arith.subf %269, %227 : vector<2x32xf32>
    %271 = arith.mulf %266, %270 : vector<2x32xf32>
    %272 = arith.addf %227, %271 : vector<2x32xf32>
    %273 = arith.addf %260, %272 : vector<2x32xf32>
    %cst_73 = arith.constant 1.250000e-01 : f32
    %274 = vector.broadcast %cst_73 : f32 to vector<2x32xf32>
    %275 = arith.mulf %273, %274 : vector<2x32xf32>
    %276 = arith.index_cast %c1_i32 : i32 to index
    %c0_74 = arith.constant 0 : index
    %c0_75 = arith.constant 0 : index
    %277 = vector.load %arg10[%276, %c0_74, %c0_75] : memref<2x2x32xf32, #tpu.memory_space<vmem>>, vector<1x2x32xf32>
    %278 = vector.shape_cast %277 : vector<1x2x32xf32> to vector<2x32xf32>
    %279 = vector.shape_cast %275 : vector<2x32xf32> to vector<1x2x32xf32>
    tpu.vector_store %arg10[%276, %c0_74, %c0_75], %279 {strides = array<i32>} : memref<2x2x32xf32, #tpu.memory_space<vmem>>, vector<1x2x32xf32>,
    %c2_i32 = arith.constant 2 : i32
    %c0_76 = arith.constant 0 : index
    %c0_77 = arith.constant 0 : index
    %280 = vector.load %arg11[%c0_76, %c0_77] : memref<2x32xf32, #tpu.memory_space<vmem>>, vector<2x32xf32>
    tpu.vector_store %arg11[%c0_76, %c0_77], %275 {strides = array<i32>} : memref<2x32xf32, #tpu.memory_space<vmem>>, vector<2x32xf32>,
    return
  }
  func.func @transform_0(%arg0: i32, %arg1: i32) -> (i32, i32, i32) {
    %c0_i32 = arith.constant 0 : i32
    %c0_i32_0 = arith.constant 0 : i32
    return %arg1, %arg0, %c0_i32 : i32, i32, i32
  }
  func.func @transform_1(%arg0: i32, %arg1: i32) -> (i32, i32) {
    %c0_i32 = arith.constant 0 : i32
    %c0_i32_0 = arith.constant 0 : i32
    return %arg0, %c0_i32 : i32, i32
  }
  func.func @transform_2(%arg0: i32, %arg1: i32) -> (i32, i32) {
    %c0_i32 = arith.constant 0 : i32
    %c0_i32_0 = arith.constant 0 : i32
    %c0_i32_1 = arith.constant 0 : i32
    return %c0_i32, %c0_i32_0 : i32, i32
  }
  func.func @transform_3(%arg0: i32, %arg1: i32) -> (i32, i32) {
    %c0_i32 = arith.constant 0 : i32
    %c0_i32_0 = arith.constant 0 : i32
    %c0_i32_1 = arith.constant 0 : i32
    return %c0_i32, %c0_i32_0 : i32, i32
  }
  func.func @transform_4(%arg0: i32, %arg1: i32) -> (i32, i32) {
    %c0_i32 = arith.constant 0 : i32
    %c0_i32_0 = arith.constant 0 : i32
    %c0_i32_1 = arith.constant 0 : i32
    return %c0_i32, %c0_i32_0 : i32, i32
  }
  func.func @transform_5(%arg0: i32, %arg1: i32) -> (i32, i32) {
    %c0_i32 = arith.constant 0 : i32
    %c0_i32_0 = arith.constant 0 : i32
    %c0_i32_1 = arith.constant 0 : i32
    return %c0_i32, %c0_i32_0 : i32, i32
  }
  func.func @transform_6(%arg0: i32, %arg1: i32) -> (i32, i32) {
    %c0_i32 = arith.constant 0 : i32
    %c0_i32_0 = arith.constant 0 : i32
    %c0_i32_1 = arith.constant 0 : i32
    return %c0_i32, %c0_i32_0 : i32, i32
  }
  func.func @transform_7(%arg0: i32, %arg1: i32) -> (i32, i32) {
    %c0_i32 = arith.constant 0 : i32
    %c0_i32_0 = arith.constant 0 : i32
    %c0_i32_1 = arith.constant 0 : i32
    return %c0_i32, %c0_i32_0 : i32, i32
  }
  func.func @transform_8(%arg0: i32, %arg1: i32) -> (i32, i32, i32) {
    %c0_i32 = arith.constant 0 : i32
    %c0_i32_0 = arith.constant 0 : i32
    return %arg1, %arg0, %c0_i32 : i32, i32, i32
  }
}

</mosaic_0001>

<llo_original>
// kernel: dg_receiver_forward.2
$region0: #{dg_receiver_forward.2}
  #allocation0 [shape = 'u32[]', space=smem, size = 0x4, offset = 0x4, fixed_abs, tag = 'smem constant byte address 0x4 - core index']
  #allocation1 [shape = 'u32[144,128]{1,0:T(1,128)}', space=vmem, size = 0x12000, scoped, tag = 'internal scratch']
  #allocation2 [shape = 'f32[2,32]{1,0:T(2,128)}', space=vmem, size = 0x400, scoped, tag = 'scratch operand']
  %s0 = inlined_call_operand.vmem [shape: f32[8,2,64], index: 0, kind: input, shape index: {}]
  %s1 = inlined_call_operand.vmem [shape: f32[2,32], index: 1, kind: input, shape index: {}]
  %s2 = inlined_call_operand.vmem [shape: f32[32,64], index: 2, kind: input, shape index: {}]
  %s3 = inlined_call_operand.hbm [shape: f32[32,64], index: 3, kind: input, shape index: {}]
  %s4 = inlined_call_operand.vmem [shape: f32[32,192], index: 4, kind: input, shape index: {}]
  %s5 = inlined_call_operand.hbm [shape: f32[32,64], index: 5, kind: input, shape index: {}]
  %s6 = inlined_call_operand.hbm [shape: f32[32,64], index: 6, kind: input, shape index: {}]
  %s7 = inlined_call_operand.hbm [shape: f32[32,128], index: 7, kind: input, shape index: {}]
  %s8 = inlined_call_operand.vmem [shape: f32[8,2,32], index: 8, kind: output, shape index: {}]
  %s9 = sld [smem:[#allocation0]]
  $region85: #{dg_receiver_forward.2} parent=0
    _
  %s11 = ssub.s32 1, %s9
  %s12 = scalar_select 0, %s11, %s9
  $region1: #{dg_receiver_forward.2} parent=0
    #allocation3 [shape = 'u8[16384]{0}', space=vmem, size = 0x4000, scoped, tag = 'input window, operand 3, single buffered']
    #allocation4 [shape = 's32[2]{0}', space=sflag, size = 0x8, scoped, tag = 'scoped memory for dg_receiver_forward.2']
    #allocation5 [shape = 'u8[16384]{0}', space=vmem, size = 0x4000, scoped, tag = 'input window, operand 5, single buffered']
    #allocation6 [shape = 's32[1]{0}', space=sflag, size = 0x4, scoped, tag = 'scoped memory for dg_receiver_forward.2']
    #allocation7 [shape = 'u8[16384]{0}', space=vmem, size = 0x4000, scoped, tag = 'input window, operand 6, single buffered']
    #allocation8 [shape = 'u8[16384]{0}', space=vmem, size = 0x4000, scoped, tag = 'input window, operand 7, single buffered']
    #allocation9 [shape = 's32[1]{0}', space=sflag, size = 0x4, scoped, tag = 'scoped memory for dg_receiver_forward.2']
    %13 = vsyncpa [#allocation4], 0
    %14 = vsyncpa [#allocation6], 0
    %15 = vsyncpa [#allocation9], 0
    loop: start=0, step=1, limit=6
    $region2: #{dg_receiver_forward.2} parent=1 // loop_pre_header
      _
    $region3: #{dg_receiver_forward.2} parent=1 // loop_header
      %s17 = sphi 0, %s21
      %p18 = scmp.ge.s32.totalorder %s17, 6
      %s24 = sphi 0, %s36
      %s25 = sphi 0, %s32
      %s26 = sphi 0, %s24
      %s27 = sphi 0, %s25
      %s28 = sphi 0, %s26
      %s29 = sphi 0, %s27
      %s41 = sphi 0, %s43
      %s44 = sphi 0, %s41
      %s45 = sphi 0, %s44
      %s61 = sphi 0, %s45
      %s67 = sphi 0, %s69
      %s70 = sphi 0, %s67
      %s71 = sphi 0, %s70
      %s87 = sphi 0, %s71
      %s91 = sphi 0, %s91
      %s93 = sphi 0, %s91
      %s94 = sphi 0, %s93
      %s108 = sphi 0, %s94
      %s112 = sphi 0, %s112
      %s114 = sphi 0, %s112
      %s115 = sphi 0, %s114
      %s129 = sphi 0, %s115
      %s133 = sphi 0, %s133
      %s135 = sphi 0, %s133
      %s136 = sphi 0, %s135
      %s150 = sphi 0, %s136
      %s154 = sphi 0, %s154
      %s156 = sphi 0, %s154
      %s157 = sphi 0, %s156
      %s171 = sphi 0, %s157
      %s175 = sphi 0, %s175
      %s177 = sphi 0, %s175
      %s178 = sphi 0, %s177
      %s192 = sphi 0, %s178
      %s196 = sphi 0, %s196
      %s198 = sphi 0, %s196
      %s199 = sphi 0, %s198
      %s213 = sphi 0, %s199
      %s221 = sphi 0, %s223
      %s224 = sphi 0, %s221
      %s225 = sphi 0, %s224
      %s241 = sphi 0, %s225
    $region4: #{dg_receiver_forward.2} parent=1 // loop_header_branch
      %20 = sbr.rel (%p18) target = $region8
    $region5: #{dg_receiver_forward.2} parent=1 // loop_body
      %s22 = ssub.s32 %s17, 1
      %s23 = ssub.s32 %s17, 2
      %s30 = sadd.s32 1, %s25
      %p31 = scmp.ge.s32.totalorder %s30, 4
      %s32 = scalar_select %p31, 0, %s30
      %s33 = sadd.s32 1, %s24
      %s34 = scalar_select %p31, %s33, %s24
      %p35 = scmp.ge.s32.totalorder %s34, 1
      %s36 = scalar_select %p35, 0, %s34
      %s37 = ssub.s32 %s25, %s32
      %s38 = ssub.s32 %s24, %s36
      %s39 = sor.u32 %s37, %s38
      %p40 = scmp.eq.s32.totalorder %s39, 0
      %s42 = sadd.s32 %s41, 1
      %s43 = scalar_select %p40, %s41, %s42
      %p46 = pneg %p40
      %p47 = scmp.eq.s32.totalorder %s17, 3
      %p48 = por %p46, %p47
      %p49 = scmp.ne.s32.totalorder %s41, %s44
      %p50 = scmp.eq.s32.totalorder %s17, 0
      %p51 = por %p49, %p50
      %p52 = scmp.ne.s32.totalorder %s41, %s44
      %p53 = scmp.eq.s32.totalorder %s22, 3
      %p54 = por %p52, %p53
      %p55 = scmp.ne.s32.totalorder %s44, %s45
      %p56 = scmp.eq.s32.totalorder %s22, 0
      %p57 = por %p55, %p56
      %p58 = scmp.ne.s32.totalorder %s44, %s45
      %p59 = scmp.eq.s32.totalorder %s23, 3
      %p60 = por %p58, %p59
      %p62 = scmp.ne.s32.totalorder %s45, %s61
      %p63 = scmp.eq.s32.totalorder %s23, 0
      %p64 = por %p62, %p63
      %s65 = ssub.s32 %s24, %s36
      %p66 = scmp.eq.s32.totalorder %s65, 0
      %s68 = sadd.s32 %s67, 1
      %s69 = scalar_select %p66, %s67, %s68
      %p72 = pneg %p66
      %p73 = scmp.eq.s32.totalorder %s17, 3
      %p74 = por %p72, %p73
      %p75 = scmp.ne.s32.totalorder %s67, %s70
      %p76 = scmp.eq.s32.totalorder %s17, 0
      %p77 = por %p75, %p76
      %p78 = scmp.ne.s32.totalorder %s67, %s70
      %p79 = scmp.eq.s32.totalorder %s22, 3
      %p80 = por %p78, %p79
      %p81 = scmp.ne.s32.totalorder %s70, %s71
      %p82 = scmp.eq.s32.totalorder %s22, 0
      %p83 = por %p81, %p82
      %p84 = scmp.ne.s32.totalorder %s70, %s71
      %p85 = scmp.eq.s32.totalorder %s23, 3
      %p86 = por %p84, %p85
      %p88 = scmp.ne.s32.totalorder %s71, %s87
      %p89 = scmp.eq.s32.totalorder %s23, 0
      %p90 = por %p88, %p89
      %s92 = sadd.s32 %s91, 1
      %p95 = scmp.eq.s32.totalorder %s17, 3
      %p96 = scmp.ne.s32.totalorder %s91, %s93
      %p97 = scmp.eq.s32.totalorder %s17, 0
      %p98 = por %p96, %p97
      %p99 = scmp.ne.s32.totalorder %s91, %s93
      %p100 = scmp.eq.s32.totalorder %s22, 3
      %p101 = por %p99, %p100
      %p102 = scmp.ne.s32.totalorder %s93, %s94
      %p103 = scmp.eq.s32.totalorder %s22, 0
      %p104 = por %p102, %p103
      %p105 = scmp.ne.s32.totalorder %s93, %s94
      %p106 = scmp.eq.s32.totalorder %s23, 3
      %p107 = por %p105, %p106
      %p109 = scmp.ne.s32.totalorder %s94, %s108
      %p110 = scmp.eq.s32.totalorder %s23, 0
      %p111 = por %p109, %p110
      %s113 = sadd.s32 %s112, 1
      %p116 = scmp.eq.s32.totalorder %s17, 3
      %p117 = scmp.ne.s32.totalorder %s112, %s114
      %p118 = scmp.eq.s32.totalorder %s17, 0
      %p119 = por %p117, %p118
      %p120 = scmp.ne.s32.totalorder %s112, %s114
      %p121 = scmp.eq.s32.totalorder %s22, 3
      %p122 = por %p120, %p121
      %p123 = scmp.ne.s32.totalorder %s114, %s115
      %p124 = scmp.eq.s32.totalorder %s22, 0
      %p125 = por %p123, %p124
      %p126 = scmp.ne.s32.totalorder %s114, %s115
      %p127 = scmp.eq.s32.totalorder %s23, 3
      %p128 = por %p126, %p127
      %p130 = scmp.ne.s32.totalorder %s115, %s129
      %p131 = scmp.eq.s32.totalorder %s23, 0
      %p132 = por %p130, %p131
      %s134 = sadd.s32 %s133, 1
      %p137 = scmp.eq.s32.totalorder %s17, 3
      %p138 = scmp.ne.s32.totalorder %s133, %s135
      %p139 = scmp.eq.s32.totalorder %s17, 0
      %p140 = por %p138, %p139
      %p141 = scmp.ne.s32.totalorder %s133, %s135
      %p142 = scmp.eq.s32.totalorder %s22, 3
      %p143 = por %p141, %p142
      %p144 = scmp.ne.s32.totalorder %s135, %s136
      %p145 = scmp.eq.s32.totalorder %s22, 0
      %p146 = por %p144, %p145
      %p147 = scmp.ne.s32.totalorder %s135, %s136
      %p148 = scmp.eq.s32.totalorder %s23, 3
      %p149 = por %p147, %p148
      %p151 = scmp.ne.s32.totalorder %s136, %s150
      %p152 = scmp.eq.s32.totalorder %s23, 0
      %p153 = por %p151, %p152
      %s155 = sadd.s32 %s154, 1
      %p158 = scmp.eq.s32.totalorder %s17, 3
      %p159 = scmp.ne.s32.totalorder %s154, %s156
      %p160 = scmp.eq.s32.totalorder %s17, 0
      %p161 = por %p159, %p160
      %p162 = scmp.ne.s32.totalorder %s154, %s156
      %p163 = scmp.eq.s32.totalorder %s22, 3
      %p164 = por %p162, %p163
      %p165 = scmp.ne.s32.totalorder %s156, %s157
      %p166 = scmp.eq.s32.totalorder %s22, 0
      %p167 = por %p165, %p166
      %p168 = scmp.ne.s32.totalorder %s156, %s157
      %p169 = scmp.eq.s32.totalorder %s23, 3
      %p170 = por %p168, %p169
      %p172 = scmp.ne.s32.totalorder %s157, %s171
      %p173 = scmp.eq.s32.totalorder %s23, 0
      %p174 = por %p172, %p173
      %s176 = sadd.s32 %s175, 1
      %p179 = scmp.eq.s32.totalorder %s17, 3
      %p180 = scmp.ne.s32.totalorder %s175, %s177
      %p181 = scmp.eq.s32.totalorder %s17, 0
      %p182 = por %p180, %p181
      %p183 = scmp.ne.s32.totalorder %s175, %s177
      %p184 = scmp.eq.s32.totalorder %s22, 3
      %p185 = por %p183, %p184
      %p186 = scmp.ne.s32.totalorder %s177, %s178
      %p187 = scmp.eq.s32.totalorder %s22, 0
      %p188 = por %p186, %p187
      %p189 = scmp.ne.s32.totalorder %s177, %s178
      %p190 = scmp.eq.s32.totalorder %s23, 3
      %p191 = por %p189, %p190
      %p193 = scmp.ne.s32.totalorder %s178, %s192
      %p194 = scmp.eq.s32.totalorder %s23, 0
      %p195 = por %p193, %p194
      %s197 = sadd.s32 %s196, 1
      %p200 = scmp.eq.s32.totalorder %s17, 3
      %p201 = scmp.ne.s32.totalorder %s196, %s198
      %p202 = scmp.eq.s32.totalorder %s17, 0
      %p203 = por %p201, %p202
      %p204 = scmp.ne.s32.totalorder %s196, %s198
      %p205 = scmp.eq.s32.totalorder %s22, 3
      %p206 = por %p204, %p205
      %p207 = scmp.ne.s32.totalorder %s198, %s199
      %p208 = scmp.eq.s32.totalorder %s22, 0
      %p209 = por %p207, %p208
      %p210 = scmp.ne.s32.totalorder %s198, %s199
      %p211 = scmp.eq.s32.totalorder %s23, 3
      %p212 = por %p210, %p211
      %p214 = scmp.ne.s32.totalorder %s199, %s213
      %p215 = scmp.eq.s32.totalorder %s23, 0
      %p216 = por %p214, %p215
      %s217 = ssub.s32 %s25, %s32
      %s218 = ssub.s32 %s24, %s36
      %s219 = sor.u32 %s217, %s218
      %p220 = scmp.eq.s32.totalorder %s219, 0
      %s222 = sadd.s32 %s221, 1
      %s223 = scalar_select %p220, %s221, %s222
      %p226 = pneg %p220
      %p227 = scmp.eq.s32.totalorder %s17, 3
      %p228 = por %p226, %p227
      %p229 = scmp.ne.s32.totalorder %s221, %s224
      %p230 = scmp.eq.s32.totalorder %s17, 0
      %p231 = por %p229, %p230
      %p232 = scmp.ne.s32.totalorder %s221, %s224
      %p233 = scmp.eq.s32.totalorder %s22, 3
      %p234 = por %p232, %p233
      %p235 = scmp.ne.s32.totalorder %s224, %s225
      %p236 = scmp.eq.s32.totalorder %s22, 0
      %p237 = por %p235, %p236
      %p238 = scmp.ne.s32.totalorder %s224, %s225
      %p239 = scmp.eq.s32.totalorder %s23, 3
      %p240 = por %p238, %p239
      %p242 = scmp.ne.s32.totalorder %s225, %s241
      %p243 = scmp.eq.s32.totalorder %s23, 0
      %p244 = por %p242, %p243
      %p245 = scmp.le.s32.totalorder 1, %s17
      %p246 = scmp.lt.s32.totalorder %s17, 5
      %p247 = pnand %p245, %p246
      %p248 = pneg %p247
      // Predicated region
      $region9: #{dg_receiver_forward.2} parent=5 // pred_check
        _
      $region10: #{dg_receiver_forward.2} parent=5 // pred_check_branch
        %250 = sbr.rel (%p247) target = $region12
      $region11: #{dg_receiver_forward.2} parent=5 // pred_region
        %s251 = ssub.s32 %s17, 1
        // Predicated region
        $region13: #{dg_receiver_forward.2} parent=11 // pred_check
          %p252 = pneg %p83
        $region14: #{dg_receiver_forward.2} parent=11 // pred_check_branch
          %254 = sbr.rel (%p252) target = $region16
        $region15: #{dg_receiver_forward.2} parent=11 // pred_region
          %p255 = scmp.lt.s32.totalorder %s26, 0
          %s256 = scalar_select %p255, %s26, 0
          %s257 = smul.addr %s256, 2
          %s258 = scalar_lea.vmem %s1, %s257
        $region16: #{dg_receiver_forward.2} parent=11 // pred_fallthru
          _
        // Predicated region
        $region17: #{dg_receiver_forward.2} parent=11 // pred_check
          %p259 = pneg %p104
        $region18: #{dg_receiver_forward.2} parent=11 // pred_check_branch
          %261 = sbr.rel (%p259) target = $region20
        $region19: #{dg_receiver_forward.2} parent=11 // pred_region
          _
        $region20: #{dg_receiver_forward.2} parent=11 // pred_fallthru
          _
        // Predicated region
        $region21: #{dg_receiver_forward.2} parent=11 // pred_check
          %p262 = pneg %p125
        $region22: #{dg_receiver_forward.2} parent=11 // pred_check_branch
          %264 = sbr.rel (%p262) target = $region24
        $region23: #{dg_receiver_forward.2} parent=11 // pred_region
          %s266 = ssub.s32 512, 512
          %267 = vsyncadd [#allocation4], %s266
          %s268 = sshll.u32 [#allocation3], 4
          %s269 = int_to_ptr.vmem [resolvable:$true] %s268
          %274 = dma.hbm_to_vmem [thread:$0]  %s3, 512, %s269, [#allocation4], 128, 128, 8
        $region24: #{dg_receiver_forward.2} parent=11 // pred_fallthru
          _
        // Predicated region
        $region25: #{dg_receiver_forward.2} parent=11 // pred_check
          %p275 = pneg %p146
        $region26: #{dg_receiver_forward.2} parent=11 // pred_check_branch
          %277 = sbr.rel (%p275) target = $region28
        $region27: #{dg_receiver_forward.2} parent=11 // pred_region
          _
        $region28: #{dg_receiver_forward.2} parent=11 // pred_fallthru
          _
        // Predicated region
        $region29: #{dg_receiver_forward.2} parent=11 // pred_check
          %p278 = pneg %p167
        $region30: #{dg_receiver_forward.2} parent=11 // pred_check_branch
          %280 = sbr.rel (%p278) target = $region32
        $region31: #{dg_receiver_forward.2} parent=11 // pred_region
          %s282 = ssub.s32 512, 512
          %283 = vsyncadd [#allocation6], %s282
          %s284 = sshll.u32 [#allocation5], 4
          %s285 = int_to_ptr.vmem [resolvable:$true] %s284
          %290 = dma.hbm_to_vmem [thread:$0]  %s5, 512, %s285, [#allocation6], 128, 128, 8
        $region32: #{dg_receiver_forward.2} parent=11 // pred_fallthru
          _
        // Predicated region
        $region33: #{dg_receiver_forward.2} parent=11 // pred_check
          %p291 = pneg %p188
        $region34: #{dg_receiver_forward.2} parent=11 // pred_check_branch
          %293 = sbr.rel (%p291) target = $region36
        $region35: #{dg_receiver_forward.2} parent=11 // pred_region
          %s295 = ssub.s32 512, 512
          %296 = vsyncadd [#allocation6], %s295
          %s297 = sshll.u32 [#allocation7], 4
          %s298 = int_to_ptr.vmem [resolvable:$true] %s297
          %303 = dma.hbm_to_vmem [thread:$0]  %s6, 512, %s298, [#allocation6], 128, 128, 8
        $region36: #{dg_receiver_forward.2} parent=11 // pred_fallthru
          _
        // Predicated region
        $region37: #{dg_receiver_forward.2} parent=11 // pred_check
          %p304 = pneg %p209
        $region38: #{dg_receiver_forward.2} parent=11 // pred_check_branch
          %306 = sbr.rel (%p304) target = $region40
        $region39: #{dg_receiver_forward.2} parent=11 // pred_region
          %s308 = ssub.s32 512, 512
          %309 = vsyncadd [#allocation9], %s308
          %s310 = sshll.u32 [#allocation8], 4
          %s311 = int_to_ptr.vmem [resolvable:$true] %s310
          %316 = dma.hbm_to_vmem [thread:$0]  %s7, 512, %s311, [#allocation9], 128, 128, 8
        $region40: #{dg_receiver_forward.2} parent=11 // pred_fallthru
          _
      $region12: #{dg_receiver_forward.2} parent=5 // pred_fallthru
        _
      %p317 = scmp.lt.s32.totalorder %s17, 4
      // Predicated region
      $region41: #{dg_receiver_forward.2} parent=5 // pred_check
        %p318 = pneg %p317
      $region42: #{dg_receiver_forward.2} parent=5 // pred_check_branch
        %320 = sbr.rel (%p318) target = $region44
      $region43: #{dg_receiver_forward.2} parent=5 // pred_region
        // Predicated region
        $region45: #{dg_receiver_forward.2} parent=43 // pred_check
          %p321 = pneg %p51
        $region46: #{dg_receiver_forward.2} parent=43 // pred_check_branch
          %323 = sbr.rel (%p321) target = $region48
        $region47: #{dg_receiver_forward.2} parent=43 // pred_region
          %s324 = smul.u32 2, %s25
          %p325 = scmp.lt.s32.totalorder %s324, 7
          %s326 = scalar_select %p325, %s324, 7
          %p327 = scmp.lt.s32.totalorder %s24, 0
          %s328 = scalar_select %p327, %s24, 0
          %s329 = sadd.s32 %s328, %s326
          %s330 = smul.addr %s329, 2
          %s331 = scalar_lea.vmem %s0, %s330
          %s332 = smul.u32 2, %s25
        $region48: #{dg_receiver_forward.2} parent=43 // pred_fallthru
          _
      $region44: #{dg_receiver_forward.2} parent=5 // pred_fallthru
        _
      %p333 = scmp.le.s32.totalorder 1, %s17
      %p334 = scmp.lt.s32.totalorder %s17, 5
      %p335 = pnand %p333, %p334
      %p336 = pneg %p335
      // Predicated region
      $region49: #{dg_receiver_forward.2} parent=5 // pred_check
        _
      $region50: #{dg_receiver_forward.2} parent=5 // pred_check_branch
        %338 = sbr.rel (%p335) target = $region52
      $region51: #{dg_receiver_forward.2} parent=5 // pred_region
        %s339 = ssub.s32 %s17, 1
        // Predicated region
        $region53: #{dg_receiver_forward.2} parent=51 // pred_check
          %p340 = pneg %p125
        $region54: #{dg_receiver_forward.2} parent=51 // pred_check_branch
          %342 = sbr.rel (%p340) target = $region56
        $region55: #{dg_receiver_forward.2} parent=51 // pred_region
          %343 = dma.done [#allocation4], 512
        $region56: #{dg_receiver_forward.2} parent=51 // pred_fallthru
          _
        // Predicated region
        $region57: #{dg_receiver_forward.2} parent=51 // pred_check
          %p344 = pneg %p167
        $region58: #{dg_receiver_forward.2} parent=51 // pred_check_branch
          %346 = sbr.rel (%p344) target = $region60
        $region59: #{dg_receiver_forward.2} parent=51 // pred_region
          %347 = dma.done [#allocation6], 512
        $region60: #{dg_receiver_forward.2} parent=51 // pred_fallthru
          _
        // Predicated region
        $region61: #{dg_receiver_forward.2} parent=51 // pred_check
          %p348 = pneg %p188
        $region62: #{dg_receiver_forward.2} parent=51 // pred_check_branch
          %350 = sbr.rel (%p348) target = $region64
        $region63: #{dg_receiver_forward.2} parent=51 // pred_region
          %351 = dma.done [#allocation6], 512
        $region64: #{dg_receiver_forward.2} parent=51 // pred_fallthru
          _
        // Predicated region
        $region65: #{dg_receiver_forward.2} parent=51 // pred_check
          %p352 = pneg %p209
        $region66: #{dg_receiver_forward.2} parent=51 // pred_check_branch
          %354 = sbr.rel (%p352) target = $region68
        $region67: #{dg_receiver_forward.2} parent=51 // pred_region
          %355 = dma.done [#allocation9], 512
        $region68: #{dg_receiver_forward.2} parent=51 // pred_fallthru
          _
        %s356 = smul.u32 2, %s27
        %p357 = scmp.lt.s32.totalorder %s356, 7
        %s358 = scalar_select %p357, %s356, 7
        %p359 = scmp.lt.s32.totalorder %s26, 0
        %s360 = scalar_select %p359, %s26, 0
        %s361 = sadd.s32 %s360, %s358
        %s362 = smul.addr %s361, 2
        %s363 = scalar_lea.vmem %s0, %s362
        %p364 = pneg %p57
        %p365 = pneg %p54
        %p366 = scmp.lt.s32.totalorder %s26, 0
        %s367 = scalar_select %p366, %s26, 0
        %s368 = smul.addr %s367, 2
        %s369 = scalar_lea.vmem %s1, %s368
        %p370 = pneg %p83
        %p371 = pneg %p80
        %p372 = pneg %p104
        %p373 = pneg %p101
        %p374 = pneg %p125
        %p375 = pneg %p122
        %p376 = pneg %p146
        %p377 = pneg %p143
        %p378 = pneg %p167
        %p379 = pneg %p164
        %p380 = pneg %p188
        %p381 = pneg %p185
        %p382 = pneg %p209
        %p383 = pneg %p206
        %p384 = pneg %p237
        %p385 = pneg %p234
        %s386 = smul.u32 2, %s27
        %p387 = scmp.lt.s32.totalorder %s386, 7
        %s388 = scalar_select %p387, %s386, 7
        %p389 = scmp.lt.s32.totalorder %s26, 0
        %s390 = scalar_select %p389, %s26, 0
        %s391 = sadd.s32 %s390, %s388
        %s392 = smul.addr %s391, 2
        %s393 = scalar_lea.vmem %s8, %s392
        %s394 = smul.u32 2, %s27
        %p395 = scmp.lt.s32.totalorder %s394, 7
        %s396 = scalar_select %p395, %s394, 7
        %p397 = scmp.lt.s32.totalorder %s26, 0
        %s398 = scalar_select %p397, %s26, 0
        %s399 = sadd.s32 %s398, %s396
        %s400 = smul.addr %s399, 2
        %s401 = scalar_lea.vmem %s0, %s400
        %s402 = smul.u32 2, %s27
        %p403 = scmp.lt.s32.totalorder %s26, 0
        %s404 = scalar_select %p403, %s26, 0
        %s405 = smul.addr %s404, 2
        %s406 = scalar_lea.vmem %s1, %s405
        %s407 = smul.u32 2, %s27
        %p408 = scmp.lt.s32.totalorder %s407, 7
        %s409 = scalar_select %p408, %s407, 7
        %p410 = scmp.lt.s32.totalorder %s26, 0
        %s411 = scalar_select %p410, %s26, 0
        %s412 = sadd.s32 %s411, %s409
        %s413 = smul.addr %s412, 2
        %s414 = scalar_lea.vmem %s8, %s413
        %s415 = smul.u32 2, %s27
        %p416 = scmp.eq.s32.totalorder %s27, 0
        // Predicated region
        $region69: #{dg_receiver_forward.2} parent=51 // pred_check
          %p417 = pneg %p416
        $region70: #{dg_receiver_forward.2} parent=51 // pred_check_branch
          %419 = sbr.rel (%p417) target = $region72
        $region71: #{dg_receiver_forward.2} parent=51 // pred_region
          %v420 = vld [vmem:[%s406] sm:$0x3]
          %vm421 = vcmask 254976
          %422 = vst.msk [vmem:[#allocation2] sm:$0x3] %vm421, %v420
        $region72: #{dg_receiver_forward.2} parent=51 // pred_fallthru
          _
        %v423 = vld [vmem:[#allocation2] sm:$0x3]
        %v424 = vld [vmem:[%s401] sm:$0x3]
        %v425 = vld [vmem:[%s2] sm:$0xff]
        %v426 = vld [vmem:[%s2 + $0x8] sm:$0xff]
        %v427 = vld [vmem:[%s2 + $0x10] sm:$0xff]
        %v428 = vld [vmem:[%s2 + $0x18] sm:$0xff]
        %vm429 = vcmask 261120
        %v431 = vsel %vm429, %v423, 0
        %433 = vmatprep.subr.mxu0 0.0
        %434 = vmatpush1.msra.mxu0 %v425
        %435 = vmatprep.subr.mxu0 0.0
        %436 = vmatpush1.msra.mxu0 %v426
        %437 = vmatprep.subr.mxu0 0.0
        %438 = vmatpush1.msra.mxu0 %v427
        %439 = vmatprep.subr.mxu0 0.0
        %440 = vmatpush1.msra.mxu0 %v428
        %441 = vmatprep.subr.mxu0 0.0
        %442 = vmatpush1.msra.mxu0 0.0
        %443 = vmatprep.subr.mxu0 0.0
        %444 = vmatpush1.msra.mxu0 0.0
        %445 = vmatprep.subr.mxu0 0.0
        %446 = vmatpush1.msra.mxu0 0.0
        %447 = vmatprep.subr.mxu0 0.0
        %448 = vmatpush1.msra.mxu0 0.0
        %449 = vmatprep.subr.mxu0 0.0
        %450 = vmatpush1.msra.mxu0 0.0
        %451 = vmatprep.subr.mxu0 0.0
        %452 = vmatpush1.msra.mxu0 0.0
        %453 = vmatprep.subr.mxu0 0.0
        %454 = vmatpush1.msra.mxu0 0.0
        %455 = vmatprep.subr.mxu0 0.0
        %456 = vmatpush1.msra.mxu0 0.0
        %457 = vmatprep.subr.mxu0 0.0
        %458 = vmatpush1.msra.mxu0 0.0
        %459 = vmatprep.subr.mxu0 0.0
        %460 = vmatpush1.msra.mxu0 0.0
        %461 = vmatprep.subr.mxu0 0.0
        %462 = vmatpush1.msra.mxu0 0.0
        %463 = vmatprep.subr.mxu0 0.0
        %464 = vmatpush1.msra.mxu0 0.0
        %465 = vmatprep.subr.mxu0 0.0
        %466 = vmatpush1.msra.mxu0 0.0
        %467 = vmatprep.subr.mxu0 0.0
        %468 = vmatpush1.msra.mxu0 0.0
        %469 = vmatprep.subr.mxu0 0.0
        %470 = vmatpush1.msra.mxu0 0.0
        %471 = vmatprep.subr.mxu0 0.0
        %472 = vmatpush1.msra.mxu0 0.0
        %473 = vmatprep.subr.mxu0 0.0
        %474 = vmatpush1.msra.mxu0 0.0
        %475 = vmatprep.subr.mxu0 0.0
        %476 = vmatpush1.msra.mxu0 0.0
        %477 = vmatprep.subr.mxu0 0.0
        %478 = vmatpush1.msra.mxu0 0.0
        %479 = vmatprep.subr.mxu0 0.0
        %480 = vmatpush1.msra.mxu0 0.0
        %481 = vmatprep.subr.mxu0 0.0
        %482 = vmatpush1.msra.mxu0 0.0
        %483 = vmatprep.subr.mxu0 0.0
        %484 = vmatpush1.msra.mxu0 0.0
        %485 = vmatprep.subr.mxu0 0.0
        %486 = vmatpush1.msra.mxu0 0.0
        %487 = vmatprep.subr.mxu0 0.0
        %488 = vmatpush1.msra.mxu0 0.0
        %489 = vmatprep.subr.mxu0 0.0
        %490 = vmatpush1.msra.mxu0 0.0
        %491 = vmatprep.subr.mxu0 0.0
        %492 = vmatpush1.msra.mxu0 0.0
        %493 = vmatprep.subr.mxu0 0.0
        %494 = vmatpush1.msra.mxu0 0.0
        %495 = vmatprep.subr.mxu0 0.0
        %496 = vmatpush1.msra.mxu0 0.0
        %497 = vmatprep.mubr.f32.mxu0 0.0
        %498 = vmatmul.mubr.f32.gmra.mrb[0].mxu0 %v431
        %v499 = vpop.f32.mrb[0].mxu0
        %v500 = vadd.f32 0.0, %v499
        %v501 = vpop.f32.mrb[0].mxu0
        %502 = vdwg.mxu0
        %v503 = vadd.f32 %v424, %v500
        %v504 = vxor.u32 %v503, 2147483648
        %v505 = vmul.f32 %v504, 1.442695
        %v506 = vpow.pop %v505
        %v507 = vadd.f32 %v506, 1.0
        %v508 = vrcp.pop %v507
        %v509 = vmul.f32 1.0, %v508
        %v510 = vtanh.pop %v503
        %511 = vrot.lane.b32.xlu0 %v423, 32
        %v512 = vpop.permute.xlu0 %511
        %v514 = vsub.f32 %v510, %v512
        %516 = vrot.lane.b32.xlu0 %v514, 96
        %v517 = vpop.permute.xlu0 %516
        %v519 = vmul.f32 %v509, %v517
        %v520 = vadd.f32 %v423, %v519
        %v521 = vld [vmem:[#allocation3] sm:$0xff]
        %v522 = vld [vmem:[#allocation3 + $0x8] sm:$0xff]
        %v523 = vld [vmem:[#allocation3 + $0x10] sm:$0xff]
        %v524 = vld [vmem:[#allocation3 + $0x18] sm:$0xff]
        %v526 = vsel %vm429, %v520, 0
        %528 = vmatprep.subr.mxu0 0.0
        %529 = vmatpush1.msra.mxu0 %v521
        %530 = vmatprep.subr.mxu0 0.0
        %531 = vmatpush1.msra.mxu0 %v522
        %532 = vmatprep.subr.mxu0 0.0
        %533 = vmatpush1.msra.mxu0 %v523
        %534 = vmatprep.subr.mxu0 0.0
        %535 = vmatpush1.msra.mxu0 %v524
        %536 = vmatprep.subr.mxu0 0.0
        %537 = vmatpush1.msra.mxu0 0.0
        %538 = vmatprep.subr.mxu0 0.0
        %539 = vmatpush1.msra.mxu0 0.0
        %540 = vmatprep.subr.mxu0 0.0
        %541 = vmatpush1.msra.mxu0 0.0
        %542 = vmatprep.subr.mxu0 0.0
        %543 = vmatpush1.msra.mxu0 0.0
        %544 = vmatprep.subr.mxu0 0.0
        %545 = vmatpush1.msra.mxu0 0.0
        %546 = vmatprep.subr.mxu0 0.0
        %547 = vmatpush1.msra.mxu0 0.0
        %548 = vmatprep.subr.mxu0 0.0
        %549 = vmatpush1.msra.mxu0 0.0
        %550 = vmatprep.subr.mxu0 0.0
        %551 = vmatpush1.msra.mxu0 0.0
        %552 = vmatprep.subr.mxu0 0.0
        %553 = vmatpush1.msra.mxu0 0.0
        %554 = vmatprep.subr.mxu0 0.0
        %555 = vmatpush1.msra.mxu0 0.0
        %556 = vmatprep.subr.mxu0 0.0
        %557 = vmatpush1.msra.mxu0 0.0
        %558 = vmatprep.subr.mxu0 0.0
        %559 = vmatpush1.msra.mxu0 0.0
        %560 = vmatprep.subr.mxu0 0.0
        %561 = vmatpush1.msra.mxu0 0.0
        %562 = vmatprep.subr.mxu0 0.0
        %563 = vmatpush1.msra.mxu0 0.0
        %564 = vmatprep.subr.mxu0 0.0
        %565 = vmatpush1.msra.mxu0 0.0
        %566 = vmatprep.subr.mxu0 0.0
        %567 = vmatpush1.msra.mxu0 0.0
        %568 = vmatprep.subr.mxu0 0.0
        %569 = vmatpush1.msra.mxu0 0.0
        %570 = vmatprep.subr.mxu0 0.0
        %571 = vmatpush1.msra.mxu0 0.0
        %572 = vmatprep.subr.mxu0 0.0
        %573 = vmatpush1.msra.mxu0 0.0
        %574 = vmatprep.subr.mxu0 0.0
        %575 = vmatpush1.msra.mxu0 0.0
        %576 = vmatprep.subr.mxu0 0.0
        %577 = vmatpush1.msra.mxu0 0.0
        %578 = vmatprep.subr.mxu0 0.0
        %579 = vmatpush1.msra.mxu0 0.0
        %580 = vmatprep.subr.mxu0 0.0
        %581 = vmatpush1.msra.mxu0 0.0
        %582 = vmatprep.subr.mxu0 0.0
        %583 = vmatpush1.msra.mxu0 0.0
        %584 = vmatprep.subr.mxu0 0.0
        %585 = vmatpush1.msra.mxu0 0.0
        %586 = vmatprep.subr.mxu0 0.0
        %587 = vmatpush1.msra.mxu0 0.0
        %588 = vmatprep.subr.mxu0 0.0
        %589 = vmatpush1.msra.mxu0 0.0
        %590 = vmatprep.subr.mxu0 0.0
        %591 = vmatpush1.msra.mxu0 0.0
        %592 = vmatprep.mubr.f32.mxu0 0.0
        %593 = vmatmul.mubr.f32.gmra.mrb[0].mxu0 %v526
        %v594 = vpop.f32.mrb[0].mxu0
        %v595 = vadd.f32 0.0, %v594
        %v596 = vpop.f32.mrb[0].mxu0
        %597 = vdwg.mxu0
        %v598 = vxor.u32 %v595, 2147483648
        %v599 = vmul.f32 %v598, 1.442695
        %v600 = vpow.pop %v599
        %v601 = vadd.f32 %v600, 1.0
        %v602 = vrcp.pop %v601
        %v603 = vmul.f32 1.0, %v602
        %604 = vrot.lane.b32.xlu0 %v520, 32
        %v605 = vpop.permute.xlu0 %604
        %v607 = vsub.f32 %v603, %v605
        %609 = vrot.lane.b32.xlu0 %v607, 96
        %v610 = vpop.permute.xlu0 %609
        %v612 = vmul.f32 %v603, %v610
        %v613 = vadd.f32 %v520, %v612
        %v614 = vld [vmem:[%s4] sm:$0xff]
        %v615 = vld [vmem:[%s4 + $0x8] sm:$0xff]
        %v616 = vld [vmem:[%s4 + $0x10] sm:$0xff]
        %v617 = vld [vmem:[%s4 + $0x18] sm:$0xff]
        %v618 = vld [vmem:[%s4 + $0x20] sm:$0xff]
        %v619 = vld [vmem:[%s4 + $0x28] sm:$0xff]
        %v620 = vld [vmem:[%s4 + $0x30] sm:$0xff]
        %v621 = vld [vmem:[%s4 + $0x38] sm:$0xff]
        %v623 = vsel %vm429, %v613, 0
        %625 = vmatprep.subr.mxu0 %v615
        %626 = vmatpush1.msra.mxu0 %v614
        %627 = vmatprep.subr.mxu0 %v617
        %628 = vmatpush1.msra.mxu0 %v616
        %629 = vmatprep.subr.mxu0 %v619
        %630 = vmatpush1.msra.mxu0 %v618
        %631 = vmatprep.subr.mxu0 %v621
        %632 = vmatpush1.msra.mxu0 %v620
        %633 = vmatprep.subr.mxu0 0.0
        %634 = vmatpush1.msra.mxu0 0.0
        %635 = vmatprep.subr.mxu0 0.0
        %636 = vmatpush1.msra.mxu0 0.0
        %637 = vmatprep.subr.mxu0 0.0
        %638 = vmatpush1.msra.mxu0 0.0
        %639 = vmatprep.subr.mxu0 0.0
        %640 = vmatpush1.msra.mxu0 0.0
        %641 = vmatprep.subr.mxu0 0.0
        %642 = vmatpush1.msra.mxu0 0.0
        %643 = vmatprep.subr.mxu0 0.0
        %644 = vmatpush1.msra.mxu0 0.0
        %645 = vmatprep.subr.mxu0 0.0
        %646 = vmatpush1.msra.mxu0 0.0
        %647 = vmatprep.subr.mxu0 0.0
        %648 = vmatpush1.msra.mxu0 0.0
        %649 = vmatprep.subr.mxu0 0.0
        %650 = vmatpush1.msra.mxu0 0.0
        %651 = vmatprep.subr.mxu0 0.0
        %652 = vmatpush1.msra.mxu0 0.0
        %653 = vmatprep.subr.mxu0 0.0
        %654 = vmatpush1.msra.mxu0 0.0
        %655 = vmatprep.subr.mxu0 0.0
        %656 = vmatpush1.msra.mxu0 0.0
        %657 = vmatprep.subr.mxu0 0.0
        %658 = vmatpush1.msra.mxu0 0.0
        %659 = vmatprep.subr.mxu0 0.0
        %660 = vmatpush1.msra.mxu0 0.0
        %661 = vmatprep.subr.mxu0 0.0
        %662 = vmatpush1.msra.mxu0 0.0
        %663 = vmatprep.subr.mxu0 0.0
        %664 = vmatpush1.msra.mxu0 0.0
        %665 = vmatprep.subr.mxu0 0.0
        %666 = vmatpush1.msra.mxu0 0.0
        %667 = vmatprep.subr.mxu0 0.0
        %668 = vmatpush1.msra.mxu0 0.0
        %669 = vmatprep.subr.mxu0 0.0
        %670 = vmatpush1.msra.mxu0 0.0
        %671 = vmatprep.subr.mxu0 0.0
        %672 = vmatpush1.msra.mxu0 0.0
        %673 = vmatprep.subr.mxu0 0.0
        %674 = vmatpush1.msra.mxu0 0.0
        %675 = vmatprep.subr.mxu0 0.0
        %676 = vmatpush1.msra.mxu0 0.0
        %677 = vmatprep.subr.mxu0 0.0
        %678 = vmatpush1.msra.mxu0 0.0
        %679 = vmatprep.subr.mxu0 0.0
        %680 = vmatpush1.msra.mxu0 0.0
        %681 = vmatprep.subr.mxu0 0.0
        %682 = vmatpush1.msra.mxu0 0.0
        %683 = vmatprep.subr.mxu0 0.0
        %684 = vmatpush1.msra.mxu0 0.0
        %685 = vmatprep.subr.mxu0 0.0
        %686 = vmatpush1.msra.mxu0 0.0
        %687 = vmatprep.subr.mxu0 0.0
        %688 = vmatpush1.msra.mxu0 0.0
        %689 = vmatprep.mubr.f32.mxu0 0.0
        %690 = vmatmul.mubr.f32.gmra.mrb[0].mxu0 %v623
        %v691 = vpop.f32.mrb[0].mxu0
        %v692 = vadd.f32 0.0, %v691
        %v693 = vpop.f32.mrb[0].mxu0
        %v694 = vadd.f32 0.0, %v693
        %695 = vdwg.mxu0
        %v696 = vxor.u32 %v692, 2147483648
        %v697 = vmul.f32 %v696, 1.442695
        %v698 = vpow.pop %v697
        %v699 = vadd.f32 %v698, 1.0
        %v700 = vrcp.pop %v699
        %v701 = vmul.f32 1.0, %v700
        %v702 = vmax.f32 %v692, 0.0
        %703 = vrot.lane.b32.xlu0 %v613, 32
        %v704 = vpop.permute.xlu0 %703
        %v706 = vsub.f32 %v702, %v704
        %708 = vrot.lane.b32.xlu0 %v706, 96
        %v709 = vpop.permute.xlu0 %708
        %v711 = vmul.f32 %v701, %v709
        %v712 = vadd.f32 %v613, %v711
        %v713 = vadd.f32 %v613, %v712
        %714 = vrot.lane.b32.xlu0 %v613, 96
        %v715 = vpop.permute.xlu0 %714
        %v717 = vsub.f32 %v702, %v715
        %719 = vrot.lane.b32.xlu0 %v717, 96
        %v720 = vpop.permute.xlu0 %719
        %v722 = vmul.f32 %v701, %v720
        %724 = vrot.lane.b32.xlu0 %v722, 64
        %v725 = vpop.permute.xlu0 %724
        %v727 = vadd.f32 %v613, %v725
        %v728 = vadd.f32 %v713, %v727
        %v729 = vxor.u32 %v694, 2147483648
        %v730 = vmul.f32 %v729, 1.442695
        %v731 = vpow.pop %v730
        %v732 = vadd.f32 %v731, 1.0
        %v733 = vrcp.pop %v732
        %v734 = vmul.f32 1.0, %v733
        %v735 = vsub.f32 %v694, %v704
        %737 = vrot.lane.b32.xlu0 %v735, 96
        %v738 = vpop.permute.xlu0 %737
        %v740 = vmul.f32 %v734, %v738
        %v741 = vadd.f32 %v613, %v740
        %v742 = vadd.f32 %v728, %v741
        %v743 = vld [vmem:[#allocation5] sm:$0xff]
        %v744 = vld [vmem:[#allocation5 + $0x8] sm:$0xff]
        %v745 = vld [vmem:[#allocation5 + $0x10] sm:$0xff]
        %v746 = vld [vmem:[#allocation5 + $0x18] sm:$0xff]
        %v748 = vsel %vm429, %v712, 0
        %750 = vmatprep.subr.mxu0 0.0
        %751 = vmatpush1.msra.mxu0 %v743
        %752 = vmatprep.subr.mxu0 0.0
        %753 = vmatpush1.msra.mxu0 %v744
        %754 = vmatprep.subr.mxu0 0.0
        %755 = vmatpush1.msra.mxu0 %v745
        %756 = vmatprep.subr.mxu0 0.0
        %757 = vmatpush1.msra.mxu0 %v746
        %758 = vmatprep.subr.mxu0 0.0
        %759 = vmatpush1.msra.mxu0 0.0
        %760 = vmatprep.subr.mxu0 0.0
        %761 = vmatpush1.msra.mxu0 0.0
        %762 = vmatprep.subr.mxu0 0.0
        %763 = vmatpush1.msra.mxu0 0.0
        %764 = vmatprep.subr.mxu0 0.0
        %765 = vmatpush1.msra.mxu0 0.0
        %766 = vmatprep.subr.mxu0 0.0
        %767 = vmatpush1.msra.mxu0 0.0
        %768 = vmatprep.subr.mxu0 0.0
        %769 = vmatpush1.msra.mxu0 0.0
        %770 = vmatprep.subr.mxu0 0.0
        %771 = vmatpush1.msra.mxu0 0.0
        %772 = vmatprep.subr.mxu0 0.0
        %773 = vmatpush1.msra.mxu0 0.0
        %774 = vmatprep.subr.mxu0 0.0
        %775 = vmatpush1.msra.mxu0 0.0
        %776 = vmatprep.subr.mxu0 0.0
        %777 = vmatpush1.msra.mxu0 0.0
        %778 = vmatprep.subr.mxu0 0.0
        %779 = vmatpush1.msra.mxu0 0.0
        %780 = vmatprep.subr.mxu0 0.0
        %781 = vmatpush1.msra.mxu0 0.0
        %782 = vmatprep.subr.mxu0 0.0
        %783 = vmatpush1.msra.mxu0 0.0
        %784 = vmatprep.subr.mxu0 0.0
        %785 = vmatpush1.msra.mxu0 0.0
        %786 = vmatprep.subr.mxu0 0.0
        %787 = vmatpush1.msra.mxu0 0.0
        %788 = vmatprep.subr.mxu0 0.0
        %789 = vmatpush1.msra.mxu0 0.0
        %790 = vmatprep.subr.mxu0 0.0
        %791 = vmatpush1.msra.mxu0 0.0
        %792 = vmatprep.subr.mxu0 0.0
        %793 = vmatpush1.msra.mxu0 0.0
        %794 = vmatprep.subr.mxu0 0.0
        %795 = vmatpush1.msra.mxu0 0.0
        %796 = vmatprep.subr.mxu0 0.0
        %797 = vmatpush1.msra.mxu0 0.0
        %798 = vmatprep.subr.mxu0 0.0
        %799 = vmatpush1.msra.mxu0 0.0
        %800 = vmatprep.subr.mxu0 0.0
        %801 = vmatpush1.msra.mxu0 0.0
        %802 = vmatprep.subr.mxu0 0.0
        %803 = vmatpush1.msra.mxu0 0.0
        %804 = vmatprep.subr.mxu0 0.0
        %805 = vmatpush1.msra.mxu0 0.0
        %806 = vmatprep.subr.mxu0 0.0
        %807 = vmatpush1.msra.mxu0 0.0
        %808 = vmatprep.subr.mxu0 0.0
        %809 = vmatpush1.msra.mxu0 0.0
        %810 = vmatprep.subr.mxu0 0.0
        %811 = vmatpush1.msra.mxu0 0.0
        %812 = vmatprep.subr.mxu0 0.0
        %813 = vmatpush1.msra.mxu0 0.0
        %814 = vmatprep.mubr.f32.mxu0 0.0
        %815 = vmatmul.mubr.f32.gmra.mrb[0].mxu0 %v748
        %v816 = vpop.f32.mrb[0].mxu0
        %v817 = vadd.f32 0.0, %v816
        %v818 = vpop.f32.mrb[0].mxu0
        %819 = vdwg.mxu0
        %v820 = vxor.u32 %v817, 2147483648
        %v821 = vmul.f32 %v820, 1.442695
        %v822 = vpow.pop %v821
        %v823 = vadd.f32 %v822, 1.0
        %v824 = vrcp.pop %v823
        %v825 = vmul.f32 1.0, %v824
        %v826 = vtanh.pop %v817
        %827 = vrot.lane.b32.xlu0 %v712, 32
        %v828 = vpop.permute.xlu0 %827
        %v830 = vsub.f32 %v826, %v828
        %832 = vrot.lane.b32.xlu0 %v830, 96
        %v833 = vpop.permute.xlu0 %832
        %v835 = vmul.f32 %v825, %v833
        %v836 = vadd.f32 %v712, %v835
        %v837 = vadd.f32 %v742, %v836
        %v838 = vld [vmem:[#allocation7] sm:$0xff]
        %v839 = vld [vmem:[#allocation7 + $0x8] sm:$0xff]
        %v840 = vld [vmem:[#allocation7 + $0x10] sm:$0xff]
        %v841 = vld [vmem:[#allocation7 + $0x18] sm:$0xff]
        %v843 = vsel %vm429, %v727, 0
        %845 = vmatprep.subr.mxu0 0.0
        %846 = vmatpush1.msra.mxu0 %v838
        %847 = vmatprep.subr.mxu0 0.0
        %848 = vmatpush1.msra.mxu0 %v839
        %849 = vmatprep.subr.mxu0 0.0
        %850 = vmatpush1.msra.mxu0 %v840
        %851 = vmatprep.subr.mxu0 0.0
        %852 = vmatpush1.msra.mxu0 %v841
        %853 = vmatprep.subr.mxu0 0.0
        %854 = vmatpush1.msra.mxu0 0.0
        %855 = vmatprep.subr.mxu0 0.0
        %856 = vmatpush1.msra.mxu0 0.0
        %857 = vmatprep.subr.mxu0 0.0
        %858 = vmatpush1.msra.mxu0 0.0
        %859 = vmatprep.subr.mxu0 0.0
        %860 = vmatpush1.msra.mxu0 0.0
        %861 = vmatprep.subr.mxu0 0.0
        %862 = vmatpush1.msra.mxu0 0.0
        %863 = vmatprep.subr.mxu0 0.0
        %864 = vmatpush1.msra.mxu0 0.0
        %865 = vmatprep.subr.mxu0 0.0
        %866 = vmatpush1.msra.mxu0 0.0
        %867 = vmatprep.subr.mxu0 0.0
        %868 = vmatpush1.msra.mxu0 0.0
        %869 = vmatprep.subr.mxu0 0.0
        %870 = vmatpush1.msra.mxu0 0.0
        %871 = vmatprep.subr.mxu0 0.0
        %872 = vmatpush1.msra.mxu0 0.0
        %873 = vmatprep.subr.mxu0 0.0
        %874 = vmatpush1.msra.mxu0 0.0
        %875 = vmatprep.subr.mxu0 0.0
        %876 = vmatpush1.msra.mxu0 0.0
        %877 = vmatprep.subr.mxu0 0.0
        %878 = vmatpush1.msra.mxu0 0.0
        %879 = vmatprep.subr.mxu0 0.0
        %880 = vmatpush1.msra.mxu0 0.0
        %881 = vmatprep.subr.mxu0 0.0
        %882 = vmatpush1.msra.mxu0 0.0
        %883 = vmatprep.subr.mxu0 0.0
        %884 = vmatpush1.msra.mxu0 0.0
        %885 = vmatprep.subr.mxu0 0.0
        %886 = vmatpush1.msra.mxu0 0.0
        %887 = vmatprep.subr.mxu0 0.0
        %888 = vmatpush1.msra.mxu0 0.0
        %889 = vmatprep.subr.mxu0 0.0
        %890 = vmatpush1.msra.mxu0 0.0
        %891 = vmatprep.subr.mxu0 0.0
        %892 = vmatpush1.msra.mxu0 0.0
        %893 = vmatprep.subr.mxu0 0.0
        %894 = vmatpush1.msra.mxu0 0.0
        %895 = vmatprep.subr.mxu0 0.0
        %896 = vmatpush1.msra.mxu0 0.0
        %897 = vmatprep.subr.mxu0 0.0
        %898 = vmatpush1.msra.mxu0 0.0
        %899 = vmatprep.subr.mxu0 0.0
        %900 = vmatpush1.msra.mxu0 0.0
        %901 = vmatprep.subr.mxu0 0.0
        %902 = vmatpush1.msra.mxu0 0.0
        %903 = vmatprep.subr.mxu0 0.0
        %904 = vmatpush1.msra.mxu0 0.0
        %905 = vmatprep.subr.mxu0 0.0
        %906 = vmatpush1.msra.mxu0 0.0
        %907 = vmatprep.subr.mxu0 0.0
        %908 = vmatpush1.msra.mxu0 0.0
        %909 = vmatprep.mubr.f32.mxu0 0.0
        %910 = vmatmul.mubr.f32.gmra.mrb[0].mxu0 %v843
        %v911 = vpop.f32.mrb[0].mxu0
        %v912 = vadd.f32 0.0, %v911
        %v913 = vpop.f32.mrb[0].mxu0
        %914 = vdwg.mxu0
        %v915 = vxor.u32 %v912, 2147483648
        %v916 = vmul.f32 %v915, 1.442695
        %v917 = vpow.pop %v916
        %v918 = vadd.f32 %v917, 1.0
        %v919 = vrcp.pop %v918
        %v920 = vmul.f32 1.0, %v919
        %v921 = vtanh.pop %v912
        %922 = vrot.lane.b32.xlu0 %v727, 32
        %v923 = vpop.permute.xlu0 %922
        %v925 = vsub.f32 %v921, %v923
        %927 = vrot.lane.b32.xlu0 %v925, 96
        %v928 = vpop.permute.xlu0 %927
        %v930 = vmul.f32 %v920, %v928
        %v931 = vadd.f32 %v727, %v930
        %v932 = vadd.f32 %v837, %v931
        %v933 = vld [vmem:[#allocation8] sm:$0xff]
        %v934 = vld [vmem:[#allocation8 + $0x8] sm:$0xff]
        %v935 = vld [vmem:[#allocation8 + $0x10] sm:$0xff]
        %v936 = vld [vmem:[#allocation8 + $0x18] sm:$0xff]
        %v938 = vsel %vm429, %v836, 0
        %940 = vmatprep.subr.mxu0 0.0
        %941 = vmatpush1.msra.mxu0 %v933
        %942 = vmatprep.subr.mxu0 0.0
        %943 = vmatpush1.msra.mxu0 %v934
        %944 = vmatprep.subr.mxu0 0.0
        %945 = vmatpush1.msra.mxu0 %v935
        %946 = vmatprep.subr.mxu0 0.0
        %947 = vmatpush1.msra.mxu0 %v936
        %948 = vmatprep.subr.mxu0 0.0
        %949 = vmatpush1.msra.mxu0 0.0
        %950 = vmatprep.subr.mxu0 0.0
        %951 = vmatpush1.msra.mxu0 0.0
        %952 = vmatprep.subr.mxu0 0.0
        %953 = vmatpush1.msra.mxu0 0.0
        %954 = vmatprep.subr.mxu0 0.0
        %955 = vmatpush1.msra.mxu0 0.0
        %956 = vmatprep.subr.mxu0 0.0
        %957 = vmatpush1.msra.mxu0 0.0
        %958 = vmatprep.subr.mxu0 0.0
        %959 = vmatpush1.msra.mxu0 0.0
        %960 = vmatprep.subr.mxu0 0.0
        %961 = vmatpush1.msra.mxu0 0.0
        %962 = vmatprep.subr.mxu0 0.0
        %963 = vmatpush1.msra.mxu0 0.0
        %964 = vmatprep.subr.mxu0 0.0
        %965 = vmatpush1.msra.mxu0 0.0
        %966 = vmatprep.subr.mxu0 0.0
        %967 = vmatpush1.msra.mxu0 0.0
        %968 = vmatprep.subr.mxu0 0.0
        %969 = vmatpush1.msra.mxu0 0.0
        %970 = vmatprep.subr.mxu0 0.0
        %971 = vmatpush1.msra.mxu0 0.0
        %972 = vmatprep.subr.mxu0 0.0
        %973 = vmatpush1.msra.mxu0 0.0
        %974 = vmatprep.subr.mxu0 0.0
        %975 = vmatpush1.msra.mxu0 0.0
        %976 = vmatprep.subr.mxu0 0.0
        %977 = vmatpush1.msra.mxu0 0.0
        %978 = vmatprep.subr.mxu0 0.0
        %979 = vmatpush1.msra.mxu0 0.0
        %980 = vmatprep.subr.mxu0 0.0
        %981 = vmatpush1.msra.mxu0 0.0
        %982 = vmatprep.subr.mxu0 0.0
        %983 = vmatpush1.msra.mxu0 0.0
        %984 = vmatprep.subr.mxu0 0.0
        %985 = vmatpush1.msra.mxu0 0.0
        %986 = vmatprep.subr.mxu0 0.0
        %987 = vmatpush1.msra.mxu0 0.0
        %988 = vmatprep.subr.mxu0 0.0
        %989 = vmatpush1.msra.mxu0 0.0
        %990 = vmatprep.subr.mxu0 0.0
        %991 = vmatpush1.msra.mxu0 0.0
        %992 = vmatprep.subr.mxu0 0.0
        %993 = vmatpush1.msra.mxu0 0.0
        %994 = vmatprep.subr.mxu0 0.0
        %995 = vmatpush1.msra.mxu0 0.0
        %996 = vmatprep.subr.mxu0 0.0
        %997 = vmatpush1.msra.mxu0 0.0
        %998 = vmatprep.subr.mxu0 0.0
        %999 = vmatpush1.msra.mxu0 0.0
        %1000 = vmatprep.subr.mxu0 0.0
        %1001 = vmatpush1.msra.mxu0 0.0
        %1002 = vmatprep.subr.mxu0 0.0
        %1003 = vmatpush1.msra.mxu0 0.0
        %1004 = vmatprep.mubr.f32.mxu0 0.0
        %1005 = vmatmul.mubr.f32.gmra.mrb[0].mxu0 %v938
        %v1006 = vpop.f32.mrb[0].mxu0
        %v1007 = vadd.f32 0.0, %v1006
        %v1008 = vpop.f32.mrb[0].mxu0
        %1009 = vdwg.mxu0
        %v1010 = vxor.u32 %v1007, 2147483648
        %v1011 = vmul.f32 %v1010, 1.442695
        %v1012 = vpow.pop %v1011
        %v1013 = vadd.f32 %v1012, 1.0
        %v1014 = vrcp.pop %v1013
        %v1015 = vmul.f32 1.0, %v1014
        %1016 = vrot.lane.b32.xlu0 %v836, 32
        %v1017 = vpop.permute.xlu0 %1016
        %v1019 = vsub.f32 %v1015, %v1017
        %1021 = vrot.lane.b32.xlu0 %v1019, 96
        %v1022 = vpop.permute.xlu0 %1021
        %v1024 = vmul.f32 %v1015, %v1022
        %v1025 = vadd.f32 %v836, %v1024
        %v1026 = vadd.f32 %v932, %v1025
        %v1027 = vmax.f32 %v1007, 0.0
        %1028 = vrot.lane.b32.xlu0 %v836, 96
        %v1029 = vpop.permute.xlu0 %1028
        %v1031 = vsub.f32 %v1027, %v1029
        %1033 = vrot.lane.b32.xlu0 %v1031, 96
        %v1034 = vpop.permute.xlu0 %1033
        %v1036 = vmul.f32 %v1015, %v1034
        %1038 = vrot.lane.b32.xlu0 %v1036, 64
        %v1039 = vpop.permute.xlu0 %1038
        %v1041 = vadd.f32 %v836, %v1039
        %v1042 = vadd.f32 %v1026, %v1041
        %v1043 = vmul.f32 %v1042, 0.125
        %vm1044 = vcmask 254976
        %1045 = vst.msk [vmem:[%s414] sm:$0x3] %vm1044, %v1043
        %s1046 = scalar_lea.vmem %s401, 2
        %v1047 = vld [vmem:[%s1046] sm:$0x3]
        %v1048 = vld [vmem:[%s2] sm:$0xff]
        %v1049 = vld [vmem:[%s2 + $0x8] sm:$0xff]
        %v1050 = vld [vmem:[%s2 + $0x10] sm:$0xff]
        %v1051 = vld [vmem:[%s2 + $0x18] sm:$0xff]
        %v1053 = vsel %vm429, %v1043, 0
        %1055 = vmatprep.subr.mxu0 0.0
        %1056 = vmatpush1.msra.mxu0 %v1048
        %1057 = vmatprep.subr.mxu0 0.0
        %1058 = vmatpush1.msra.mxu0 %v1049
        %1059 = vmatprep.subr.mxu0 0.0
        %1060 = vmatpush1.msra.mxu0 %v1050
        %1061 = vmatprep.subr.mxu0 0.0
        %1062 = vmatpush1.msra.mxu0 %v1051
        %1063 = vmatprep.subr.mxu0 0.0
        %1064 = vmatpush1.msra.mxu0 0.0
        %1065 = vmatprep.subr.mxu0 0.0
        %1066 = vmatpush1.msra.mxu0 0.0
        %1067 = vmatprep.subr.mxu0 0.0
        %1068 = vmatpush1.msra.mxu0 0.0
        %1069 = vmatprep.subr.mxu0 0.0
        %1070 = vmatpush1.msra.mxu0 0.0
        %1071 = vmatprep.subr.mxu0 0.0
        %1072 = vmatpush1.msra.mxu0 0.0
        %1073 = vmatprep.subr.mxu0 0.0
        %1074 = vmatpush1.msra.mxu0 0.0
        %1075 = vmatprep.subr.mxu0 0.0
        %1076 = vmatpush1.msra.mxu0 0.0
        %1077 = vmatprep.subr.mxu0 0.0
        %1078 = vmatpush1.msra.mxu0 0.0
        %1079 = vmatprep.subr.mxu0 0.0
        %1080 = vmatpush1.msra.mxu0 0.0
        %1081 = vmatprep.subr.mxu0 0.0
        %1082 = vmatpush1.msra.mxu0 0.0
        %1083 = vmatprep.subr.mxu0 0.0
        %1084 = vmatpush1.msra.mxu0 0.0
        %1085 = vmatprep.subr.mxu0 0.0
        %1086 = vmatpush1.msra.mxu0 0.0
        %1087 = vmatprep.subr.mxu0 0.0
        %1088 = vmatpush1.msra.mxu0 0.0
        %1089 = vmatprep.subr.mxu0 0.0
        %1090 = vmatpush1.msra.mxu0 0.0
        %1091 = vmatprep.subr.mxu0 0.0
        %1092 = vmatpush1.msra.mxu0 0.0
        %1093 = vmatprep.subr.mxu0 0.0
        %1094 = vmatpush1.msra.mxu0 0.0
        %1095 = vmatprep.subr.mxu0 0.0
        %1096 = vmatpush1.msra.mxu0 0.0
        %1097 = vmatprep.subr.mxu0 0.0
        %1098 = vmatpush1.msra.mxu0 0.0
        %1099 = vmatprep.subr.mxu0 0.0
        %1100 = vmatpush1.msra.mxu0 0.0
        %1101 = vmatprep.subr.mxu0 0.0
        %1102 = vmatpush1.msra.mxu0 0.0
        %1103 = vmatprep.subr.mxu0 0.0
        %1104 = vmatpush1.msra.mxu0 0.0
        %1105 = vmatprep.subr.mxu0 0.0
        %1106 = vmatpush1.msra.mxu0 0.0
        %1107 = vmatprep.subr.mxu0 0.0
        %1108 = vmatpush1.msra.mxu0 0.0
        %1109 = vmatprep.subr.mxu0 0.0
        %1110 = vmatpush1.msra.mxu0 0.0
        %1111 = vmatprep.subr.mxu0 0.0
        %1112 = vmatpush1.msra.mxu0 0.0
        %1113 = vmatprep.subr.mxu0 0.0
        %1114 = vmatpush1.msra.mxu0 0.0
        %1115 = vmatprep.subr.mxu0 0.0
        %1116 = vmatpush1.msra.mxu0 0.0
        %1117 = vmatprep.subr.mxu0 0.0
        %1118 = vmatpush1.msra.mxu0 0.0
        %1119 = vmatprep.mubr.f32.mxu0 0.0
        %1120 = vmatmul.mubr.f32.gmra.mrb[0].mxu0 %v1053
        %v1121 = vpop.f32.mrb[0].mxu0
        %v1122 = vadd.f32 0.0, %v1121
        %v1123 = vpop.f32.mrb[0].mxu0
        %1124 = vdwg.mxu0
        %v1125 = vadd.f32 %v1047, %v1122
        %v1126 = vxor.u32 %v1125, 2147483648
        %v1127 = vmul.f32 %v1126, 1.442695
        %v1128 = vpow.pop %v1127
        %v1129 = vadd.f32 %v1128, 1.0
        %v1130 = vrcp.pop %v1129
        %v1131 = vmul.f32 1.0, %v1130
        %v1132 = vtanh.pop %v1125
        %1133 = vrot.lane.b32.xlu0 %v1043, 32
        %v1134 = vpop.permute.xlu0 %1133
        %v1136 = vsub.f32 %v1132, %v1134
        %1138 = vrot.lane.b32.xlu0 %v1136, 96
        %v1139 = vpop.permute.xlu0 %1138
        %v1141 = vmul.f32 %v1131, %v1139
        %v1142 = vadd.f32 %v1043, %v1141
        %v1143 = vld [vmem:[#allocation3] sm:$0xff]
        %v1144 = vld [vmem:[#allocation3 + $0x8] sm:$0xff]
        %v1145 = vld [vmem:[#allocation3 + $0x10] sm:$0xff]
        %v1146 = vld [vmem:[#allocation3 + $0x18] sm:$0xff]
        %v1148 = vsel %vm429, %v1142, 0
        %1150 = vmatprep.subr.mxu0 0.0
        %1151 = vmatpush1.msra.mxu0 %v1143
        %1152 = vmatprep.subr.mxu0 0.0
        %1153 = vmatpush1.msra.mxu0 %v1144
        %1154 = vmatprep.subr.mxu0 0.0
        %1155 = vmatpush1.msra.mxu0 %v1145
        %1156 = vmatprep.subr.mxu0 0.0
        %1157 = vmatpush1.msra.mxu0 %v1146
        %1158 = vmatprep.subr.mxu0 0.0
        %1159 = vmatpush1.msra.mxu0 0.0
        %1160 = vmatprep.subr.mxu0 0.0
        %1161 = vmatpush1.msra.mxu0 0.0
        %1162 = vmatprep.subr.mxu0 0.0
        %1163 = vmatpush1.msra.mxu0 0.0
        %1164 = vmatprep.subr.mxu0 0.0
        %1165 = vmatpush1.msra.mxu0 0.0
        %1166 = vmatprep.subr.mxu0 0.0
        %1167 = vmatpush1.msra.mxu0 0.0
        %1168 = vmatprep.subr.mxu0 0.0
        %1169 = vmatpush1.msra.mxu0 0.0
        %1170 = vmatprep.subr.mxu0 0.0
        %1171 = vmatpush1.msra.mxu0 0.0
        %1172 = vmatprep.subr.mxu0 0.0
        %1173 = vmatpush1.msra.mxu0 0.0
        %1174 = vmatprep.subr.mxu0 0.0
        %1175 = vmatpush1.msra.mxu0 0.0
        %1176 = vmatprep.subr.mxu0 0.0
        %1177 = vmatpush1.msra.mxu0 0.0
        %1178 = vmatprep.subr.mxu0 0.0
        %1179 = vmatpush1.msra.mxu0 0.0
        %1180 = vmatprep.subr.mxu0 0.0
        %1181 = vmatpush1.msra.mxu0 0.0
        %1182 = vmatprep.subr.mxu0 0.0
        %1183 = vmatpush1.msra.mxu0 0.0
        %1184 = vmatprep.subr.mxu0 0.0
        %1185 = vmatpush1.msra.mxu0 0.0
        %1186 = vmatprep.subr.mxu0 0.0
        %1187 = vmatpush1.msra.mxu0 0.0
        %1188 = vmatprep.subr.mxu0 0.0
        %1189 = vmatpush1.msra.mxu0 0.0
        %1190 = vmatprep.subr.mxu0 0.0
        %1191 = vmatpush1.msra.mxu0 0.0
        %1192 = vmatprep.subr.mxu0 0.0
        %1193 = vmatpush1.msra.mxu0 0.0
        %1194 = vmatprep.subr.mxu0 0.0
        %1195 = vmatpush1.msra.mxu0 0.0
        %1196 = vmatprep.subr.mxu0 0.0
        %1197 = vmatpush1.msra.mxu0 0.0
        %1198 = vmatprep.subr.mxu0 0.0
        %1199 = vmatpush1.msra.mxu0 0.0
        %1200 = vmatprep.subr.mxu0 0.0
        %1201 = vmatpush1.msra.mxu0 0.0
        %1202 = vmatprep.subr.mxu0 0.0
        %1203 = vmatpush1.msra.mxu0 0.0
        %1204 = vmatprep.subr.mxu0 0.0
        %1205 = vmatpush1.msra.mxu0 0.0
        %1206 = vmatprep.subr.mxu0 0.0
        %1207 = vmatpush1.msra.mxu0 0.0
        %1208 = vmatprep.subr.mxu0 0.0
        %1209 = vmatpush1.msra.mxu0 0.0
        %1210 = vmatprep.subr.mxu0 0.0
        %1211 = vmatpush1.msra.mxu0 0.0
        %1212 = vmatprep.subr.mxu0 0.0
        %1213 = vmatpush1.msra.mxu0 0.0
        %1214 = vmatprep.mubr.f32.mxu0 0.0
        %1215 = vmatmul.mubr.f32.gmra.mrb[0].mxu0 %v1148
        %v1216 = vpop.f32.mrb[0].mxu0
        %v1217 = vadd.f32 0.0, %v1216
        %v1218 = vpop.f32.mrb[0].mxu0
        %1219 = vdwg.mxu0
        %v1220 = vxor.u32 %v1217, 2147483648
        %v1221 = vmul.f32 %v1220, 1.442695
        %v1222 = vpow.pop %v1221
        %v1223 = vadd.f32 %v1222, 1.0
        %v1224 = vrcp.pop %v1223
        %v1225 = vmul.f32 1.0, %v1224
        %1226 = vrot.lane.b32.xlu0 %v1142, 32
        %v1227 = vpop.permute.xlu0 %1226
        %v1229 = vsub.f32 %v1225, %v1227
        %1231 = vrot.lane.b32.xlu0 %v1229, 96
        %v1232 = vpop.permute.xlu0 %1231
        %v1234 = vmul.f32 %v1225, %v1232
        %v1235 = vadd.f32 %v1142, %v1234
        %v1236 = vld [vmem:[%s4] sm:$0xff]
        %v1237 = vld [vmem:[%s4 + $0x8] sm:$0xff]
        %v1238 = vld [vmem:[%s4 + $0x10] sm:$0xff]
        %v1239 = vld [vmem:[%s4 + $0x18] sm:$0xff]
        %v1240 = vld [vmem:[%s4 + $0x20] sm:$0xff]
        %v1241 = vld [vmem:[%s4 + $0x28] sm:$0xff]
        %v1242 = vld [vmem:[%s4 + $0x30] sm:$0xff]
        %v1243 = vld [vmem:[%s4 + $0x38] sm:$0xff]
        %v1245 = vsel %vm429, %v1235, 0
        %1247 = vmatprep.subr.mxu0 %v1237
        %1248 = vmatpush1.msra.mxu0 %v1236
        %1249 = vmatprep.subr.mxu0 %v1239
        %1250 = vmatpush1.msra.mxu0 %v1238
        %1251 = vmatprep.subr.mxu0 %v1241
        %1252 = vmatpush1.msra.mxu0 %v1240
        %1253 = vmatprep.subr.mxu0 %v1243
        %1254 = vmatpush1.msra.mxu0 %v1242
        %1255 = vmatprep.subr.mxu0 0.0
        %1256 = vmatpush1.msra.mxu0 0.0
        %1257 = vmatprep.subr.mxu0 0.0
        %1258 = vmatpush1.msra.mxu0 0.0
        %1259 = vmatprep.subr.mxu0 0.0
        %1260 = vmatpush1.msra.mxu0 0.0
        %1261 = vmatprep.subr.mxu0 0.0
        %1262 = vmatpush1.msra.mxu0 0.0
        %1263 = vmatprep.subr.mxu0 0.0
        %1264 = vmatpush1.msra.mxu0 0.0
        %1265 = vmatprep.subr.mxu0 0.0
        %1266 = vmatpush1.msra.mxu0 0.0
        %1267 = vmatprep.subr.mxu0 0.0
        %1268 = vmatpush1.msra.mxu0 0.0
        %1269 = vmatprep.subr.mxu0 0.0
        %1270 = vmatpush1.msra.mxu0 0.0
        %1271 = vmatprep.subr.mxu0 0.0
        %1272 = vmatpush1.msra.mxu0 0.0
        %1273 = vmatprep.subr.mxu0 0.0
        %1274 = vmatpush1.msra.mxu0 0.0
        %1275 = vmatprep.subr.mxu0 0.0
        %1276 = vmatpush1.msra.mxu0 0.0
        %1277 = vmatprep.subr.mxu0 0.0
        %1278 = vmatpush1.msra.mxu0 0.0
        %1279 = vmatprep.subr.mxu0 0.0
        %1280 = vmatpush1.msra.mxu0 0.0
        %1281 = vmatprep.subr.mxu0 0.0
        %1282 = vmatpush1.msra.mxu0 0.0
        %1283 = vmatprep.subr.mxu0 0.0
        %1284 = vmatpush1.msra.mxu0 0.0
        %1285 = vmatprep.subr.mxu0 0.0
        %1286 = vmatpush1.msra.mxu0 0.0
        %1287 = vmatprep.subr.mxu0 0.0
        %1288 = vmatpush1.msra.mxu0 0.0
        %1289 = vmatprep.subr.mxu0 0.0
        %1290 = vmatpush1.msra.mxu0 0.0
        %1291 = vmatprep.subr.mxu0 0.0
        %1292 = vmatpush1.msra.mxu0 0.0
        %1293 = vmatprep.subr.mxu0 0.0
        %1294 = vmatpush1.msra.mxu0 0.0
        %1295 = vmatprep.subr.mxu0 0.0
        %1296 = vmatpush1.msra.mxu0 0.0
        %1297 = vmatprep.subr.mxu0 0.0
        %1298 = vmatpush1.msra.mxu0 0.0
        %1299 = vmatprep.subr.mxu0 0.0
        %1300 = vmatpush1.msra.mxu0 0.0
        %1301 = vmatprep.subr.mxu0 0.0
        %1302 = vmatpush1.msra.mxu0 0.0
        %1303 = vmatprep.subr.mxu0 0.0
        %1304 = vmatpush1.msra.mxu0 0.0
        %1305 = vmatprep.subr.mxu0 0.0
        %1306 = vmatpush1.msra.mxu0 0.0
        %1307 = vmatprep.subr.mxu0 0.0
        %1308 = vmatpush1.msra.mxu0 0.0
        %1309 = vmatprep.subr.mxu0 0.0
        %1310 = vmatpush1.msra.mxu0 0.0
        %1311 = vmatprep.mubr.f32.mxu0 0.0
        %1312 = vmatmul.mubr.f32.gmra.mrb[0].mxu0 %v1245
        %v1313 = vpop.f32.mrb[0].mxu0
        %v1314 = vadd.f32 0.0, %v1313
        %v1315 = vpop.f32.mrb[0].mxu0
        %v1316 = vadd.f32 0.0, %v1315
        %1317 = vdwg.mxu0
        %v1318 = vxor.u32 %v1314, 2147483648
        %v1319 = vmul.f32 %v1318, 1.442695
        %v1320 = vpow.pop %v1319
        %v1321 = vadd.f32 %v1320, 1.0
        %v1322 = vrcp.pop %v1321
        %v1323 = vmul.f32 1.0, %v1322
        %v1324 = vmax.f32 %v1314, 0.0
        %1325 = vrot.lane.b32.xlu0 %v1235, 32
        %v1326 = vpop.permute.xlu0 %1325
        %v1328 = vsub.f32 %v1324, %v1326
        %1330 = vrot.lane.b32.xlu0 %v1328, 96
        %v1331 = vpop.permute.xlu0 %1330
        %v1333 = vmul.f32 %v1323, %v1331
        %v1334 = vadd.f32 %v1235, %v1333
        %v1335 = vadd.f32 %v1235, %v1334
        %1336 = vrot.lane.b32.xlu0 %v1235, 96
        %v1337 = vpop.permute.xlu0 %1336
        %v1339 = vsub.f32 %v1324, %v1337
        %1341 = vrot.lane.b32.xlu0 %v1339, 96
        %v1342 = vpop.permute.xlu0 %1341
        %v1344 = vmul.f32 %v1323, %v1342
        %1346 = vrot.lane.b32.xlu0 %v1344, 64
        %v1347 = vpop.permute.xlu0 %1346
        %v1349 = vadd.f32 %v1235, %v1347
        %v1350 = vadd.f32 %v1335, %v1349
        %v1351 = vxor.u32 %v1316, 2147483648
        %v1352 = vmul.f32 %v1351, 1.442695
        %v1353 = vpow.pop %v1352
        %v1354 = vadd.f32 %v1353, 1.0
        %v1355 = vrcp.pop %v1354
        %v1356 = vmul.f32 1.0, %v1355
        %v1357 = vsub.f32 %v1316, %v1326
        %1359 = vrot.lane.b32.xlu0 %v1357, 96
        %v1360 = vpop.permute.xlu0 %1359
        %v1362 = vmul.f32 %v1356, %v1360
        %v1363 = vadd.f32 %v1235, %v1362
        %v1364 = vadd.f32 %v1350, %v1363
        %v1365 = vld [vmem:[#allocation5] sm:$0xff]
        %v1366 = vld [vmem:[#allocation5 + $0x8] sm:$0xff]
        %v1367 = vld [vmem:[#allocation5 + $0x10] sm:$0xff]
        %v1368 = vld [vmem:[#allocation5 + $0x18] sm:$0xff]
        %v1370 = vsel %vm429, %v1334, 0
        %1372 = vmatprep.subr.mxu0 0.0
        %1373 = vmatpush1.msra.mxu0 %v1365
        %1374 = vmatprep.subr.mxu0 0.0
        %1375 = vmatpush1.msra.mxu0 %v1366
        %1376 = vmatprep.subr.mxu0 0.0
        %1377 = vmatpush1.msra.mxu0 %v1367
        %1378 = vmatprep.subr.mxu0 0.0
        %1379 = vmatpush1.msra.mxu0 %v1368
        %1380 = vmatprep.subr.mxu0 0.0
        %1381 = vmatpush1.msra.mxu0 0.0
        %1382 = vmatprep.subr.mxu0 0.0
        %1383 = vmatpush1.msra.mxu0 0.0
        %1384 = vmatprep.subr.mxu0 0.0
        %1385 = vmatpush1.msra.mxu0 0.0
        %1386 = vmatprep.subr.mxu0 0.0
        %1387 = vmatpush1.msra.mxu0 0.0
        %1388 = vmatprep.subr.mxu0 0.0
        %1389 = vmatpush1.msra.mxu0 0.0
        %1390 = vmatprep.subr.mxu0 0.0
        %1391 = vmatpush1.msra.mxu0 0.0
        %1392 = vmatprep.subr.mxu0 0.0
        %1393 = vmatpush1.msra.mxu0 0.0
        %1394 = vmatprep.subr.mxu0 0.0
        %1395 = vmatpush1.msra.mxu0 0.0
        %1396 = vmatprep.subr.mxu0 0.0
        %1397 = vmatpush1.msra.mxu0 0.0
        %1398 = vmatprep.subr.mxu0 0.0
        %1399 = vmatpush1.msra.mxu0 0.0
        %1400 = vmatprep.subr.mxu0 0.0
        %1401 = vmatpush1.msra.mxu0 0.0
        %1402 = vmatprep.subr.mxu0 0.0
        %1403 = vmatpush1.msra.mxu0 0.0
        %1404 = vmatprep.subr.mxu0 0.0
        %1405 = vmatpush1.msra.mxu0 0.0
        %1406 = vmatprep.subr.mxu0 0.0
        %1407 = vmatpush1.msra.mxu0 0.0
        %1408 = vmatprep.subr.mxu0 0.0
        %1409 = vmatpush1.msra.mxu0 0.0
        %1410 = vmatprep.subr.mxu0 0.0
        %1411 = vmatpush1.msra.mxu0 0.0
        %1412 = vmatprep.subr.mxu0 0.0
        %1413 = vmatpush1.msra.mxu0 0.0
        %1414 = vmatprep.subr.mxu0 0.0
        %1415 = vmatpush1.msra.mxu0 0.0
        %1416 = vmatprep.subr.mxu0 0.0
        %1417 = vmatpush1.msra.mxu0 0.0
        %1418 = vmatprep.subr.mxu0 0.0
        %1419 = vmatpush1.msra.mxu0 0.0
        %1420 = vmatprep.subr.mxu0 0.0
        %1421 = vmatpush1.msra.mxu0 0.0
        %1422 = vmatprep.subr.mxu0 0.0
        %1423 = vmatpush1.msra.mxu0 0.0
        %1424 = vmatprep.subr.mxu0 0.0
        %1425 = vmatpush1.msra.mxu0 0.0
        %1426 = vmatprep.subr.mxu0 0.0
        %1427 = vmatpush1.msra.mxu0 0.0
        %1428 = vmatprep.subr.mxu0 0.0
        %1429 = vmatpush1.msra.mxu0 0.0
        %1430 = vmatprep.subr.mxu0 0.0
        %1431 = vmatpush1.msra.mxu0 0.0
        %1432 = vmatprep.subr.mxu0 0.0
        %1433 = vmatpush1.msra.mxu0 0.0
        %1434 = vmatprep.subr.mxu0 0.0
        %1435 = vmatpush1.msra.mxu0 0.0
        %1436 = vmatprep.mubr.f32.mxu0 0.0
        %1437 = vmatmul.mubr.f32.gmra.mrb[0].mxu0 %v1370
        %v1438 = vpop.f32.mrb[0].mxu0
        %v1439 = vadd.f32 0.0, %v1438
        %v1440 = vpop.f32.mrb[0].mxu0
        %1441 = vdwg.mxu0
        %v1442 = vxor.u32 %v1439, 2147483648
        %v1443 = vmul.f32 %v1442, 1.442695
        %v1444 = vpow.pop %v1443
        %v1445 = vadd.f32 %v1444, 1.0
        %v1446 = vrcp.pop %v1445
        %v1447 = vmul.f32 1.0, %v1446
        %v1448 = vtanh.pop %v1439
        %1449 = vrot.lane.b32.xlu0 %v1334, 32
        %v1450 = vpop.permute.xlu0 %1449
        %v1452 = vsub.f32 %v1448, %v1450
        %1454 = vrot.lane.b32.xlu0 %v1452, 96
        %v1455 = vpop.permute.xlu0 %1454
        %v1457 = vmul.f32 %v1447, %v1455
        %v1458 = vadd.f32 %v1334, %v1457
        %v1459 = vadd.f32 %v1364, %v1458
        %v1460 = vld [vmem:[#allocation7] sm:$0xff]
        %v1461 = vld [vmem:[#allocation7 + $0x8] sm:$0xff]
        %v1462 = vld [vmem:[#allocation7 + $0x10] sm:$0xff]
        %v1463 = vld [vmem:[#allocation7 + $0x18] sm:$0xff]
        %v1465 = vsel %vm429, %v1349, 0
        %1467 = vmatprep.subr.mxu0 0.0
        %1468 = vmatpush1.msra.mxu0 %v1460
        %1469 = vmatprep.subr.mxu0 0.0
        %1470 = vmatpush1.msra.mxu0 %v1461
        %1471 = vmatprep.subr.mxu0 0.0
        %1472 = vmatpush1.msra.mxu0 %v1462
        %1473 = vmatprep.subr.mxu0 0.0
        %1474 = vmatpush1.msra.mxu0 %v1463
        %1475 = vmatprep.subr.mxu0 0.0
        %1476 = vmatpush1.msra.mxu0 0.0
        %1477 = vmatprep.subr.mxu0 0.0
        %1478 = vmatpush1.msra.mxu0 0.0
        %1479 = vmatprep.subr.mxu0 0.0
        %1480 = vmatpush1.msra.mxu0 0.0
        %1481 = vmatprep.subr.mxu0 0.0
        %1482 = vmatpush1.msra.mxu0 0.0
        %1483 = vmatprep.subr.mxu0 0.0
        %1484 = vmatpush1.msra.mxu0 0.0
        %1485 = vmatprep.subr.mxu0 0.0
        %1486 = vmatpush1.msra.mxu0 0.0
        %1487 = vmatprep.subr.mxu0 0.0
        %1488 = vmatpush1.msra.mxu0 0.0
        %1489 = vmatprep.subr.mxu0 0.0
        %1490 = vmatpush1.msra.mxu0 0.0
        %1491 = vmatprep.subr.mxu0 0.0
        %1492 = vmatpush1.msra.mxu0 0.0
        %1493 = vmatprep.subr.mxu0 0.0
        %1494 = vmatpush1.msra.mxu0 0.0
        %1495 = vmatprep.subr.mxu0 0.0
        %1496 = vmatpush1.msra.mxu0 0.0
        %1497 = vmatprep.subr.mxu0 0.0
        %1498 = vmatpush1.msra.mxu0 0.0
        %1499 = vmatprep.subr.mxu0 0.0
        %1500 = vmatpush1.msra.mxu0 0.0
        %1501 = vmatprep.subr.mxu0 0.0
        %1502 = vmatpush1.msra.mxu0 0.0
        %1503 = vmatprep.subr.mxu0 0.0
        %1504 = vmatpush1.msra.mxu0 0.0
        %1505 = vmatprep.subr.mxu0 0.0
        %1506 = vmatpush1.msra.mxu0 0.0
        %1507 = vmatprep.subr.mxu0 0.0
        %1508 = vmatpush1.msra.mxu0 0.0
        %1509 = vmatprep.subr.mxu0 0.0
        %1510 = vmatpush1.msra.mxu0 0.0
        %1511 = vmatprep.subr.mxu0 0.0
        %1512 = vmatpush1.msra.mxu0 0.0
        %1513 = vmatprep.subr.mxu0 0.0
        %1514 = vmatpush1.msra.mxu0 0.0
        %1515 = vmatprep.subr.mxu0 0.0
        %1516 = vmatpush1.msra.mxu0 0.0
        %1517 = vmatprep.subr.mxu0 0.0
        %1518 = vmatpush1.msra.mxu0 0.0
        %1519 = vmatprep.subr.mxu0 0.0
        %1520 = vmatpush1.msra.mxu0 0.0
        %1521 = vmatprep.subr.mxu0 0.0
        %1522 = vmatpush1.msra.mxu0 0.0
        %1523 = vmatprep.subr.mxu0 0.0
        %1524 = vmatpush1.msra.mxu0 0.0
        %1525 = vmatprep.subr.mxu0 0.0
        %1526 = vmatpush1.msra.mxu0 0.0
        %1527 = vmatprep.subr.mxu0 0.0
        %1528 = vmatpush1.msra.mxu0 0.0
        %1529 = vmatprep.subr.mxu0 0.0
        %1530 = vmatpush1.msra.mxu0 0.0
        %1531 = vmatprep.mubr.f32.mxu0 0.0
        %1532 = vmatmul.mubr.f32.gmra.mrb[0].mxu0 %v1465
        %v1533 = vpop.f32.mrb[0].mxu0
        %v1534 = vadd.f32 0.0, %v1533
        %v1535 = vpop.f32.mrb[0].mxu0
        %1536 = vdwg.mxu0
        %v1537 = vxor.u32 %v1534, 2147483648
        %v1538 = vmul.f32 %v1537, 1.442695
        %v1539 = vpow.pop %v1538
        %v1540 = vadd.f32 %v1539, 1.0
        %v1541 = vrcp.pop %v1540
        %v1542 = vmul.f32 1.0, %v1541
        %v1543 = vtanh.pop %v1534
        %1544 = vrot.lane.b32.xlu0 %v1349, 32
        %v1545 = vpop.permute.xlu0 %1544
        %v1547 = vsub.f32 %v1543, %v1545
        %1549 = vrot.lane.b32.xlu0 %v1547, 96
        %v1550 = vpop.permute.xlu0 %1549
        %v1552 = vmul.f32 %v1542, %v1550
        %v1553 = vadd.f32 %v1349, %v1552
        %v1554 = vadd.f32 %v1459, %v1553
        %v1555 = vld [vmem:[#allocation8] sm:$0xff]
        %v1556 = vld [vmem:[#allocation8 + $0x8] sm:$0xff]
        %v1557 = vld [vmem:[#allocation8 + $0x10] sm:$0xff]
        %v1558 = vld [vmem:[#allocation8 + $0x18] sm:$0xff]
        %v1560 = vsel %vm429, %v1458, 0
        %1562 = vmatprep.subr.mxu0 0.0
        %1563 = vmatpush1.msra.mxu0 %v1555
        %1564 = vmatprep.subr.mxu0 0.0
        %1565 = vmatpush1.msra.mxu0 %v1556
        %1566 = vmatprep.subr.mxu0 0.0
        %1567 = vmatpush1.msra.mxu0 %v1557
        %1568 = vmatprep.subr.mxu0 0.0
        %1569 = vmatpush1.msra.mxu0 %v1558
        %1570 = vmatprep.subr.mxu0 0.0
        %1571 = vmatpush1.msra.mxu0 0.0
        %1572 = vmatprep.subr.mxu0 0.0
        %1573 = vmatpush1.msra.mxu0 0.0
        %1574 = vmatprep.subr.mxu0 0.0
        %1575 = vmatpush1.msra.mxu0 0.0
        %1576 = vmatprep.subr.mxu0 0.0
        %1577 = vmatpush1.msra.mxu0 0.0
        %1578 = vmatprep.subr.mxu0 0.0
        %1579 = vmatpush1.msra.mxu0 0.0
        %1580 = vmatprep.subr.mxu0 0.0
        %1581 = vmatpush1.msra.mxu0 0.0
        %1582 = vmatprep.subr.mxu0 0.0
        %1583 = vmatpush1.msra.mxu0 0.0
        %1584 = vmatprep.subr.mxu0 0.0
        %1585 = vmatpush1.msra.mxu0 0.0
        %1586 = vmatprep.subr.mxu0 0.0
        %1587 = vmatpush1.msra.mxu0 0.0
        %1588 = vmatprep.subr.mxu0 0.0
        %1589 = vmatpush1.msra.mxu0 0.0
        %1590 = vmatprep.subr.mxu0 0.0
        %1591 = vmatpush1.msra.mxu0 0.0
        %1592 = vmatprep.subr.mxu0 0.0
        %1593 = vmatpush1.msra.mxu0 0.0
        %1594 = vmatprep.subr.mxu0 0.0
        %1595 = vmatpush1.msra.mxu0 0.0
        %1596 = vmatprep.subr.mxu0 0.0
        %1597 = vmatpush1.msra.mxu0 0.0
        %1598 = vmatprep.subr.mxu0 0.0
        %1599 = vmatpush1.msra.mxu0 0.0
        %1600 = vmatprep.subr.mxu0 0.0
        %1601 = vmatpush1.msra.mxu0 0.0
        %1602 = vmatprep.subr.mxu0 0.0
        %1603 = vmatpush1.msra.mxu0 0.0
        %1604 = vmatprep.subr.mxu0 0.0
        %1605 = vmatpush1.msra.mxu0 0.0
        %1606 = vmatprep.subr.mxu0 0.0
        %1607 = vmatpush1.msra.mxu0 0.0
        %1608 = vmatprep.subr.mxu0 0.0
        %1609 = vmatpush1.msra.mxu0 0.0
        %1610 = vmatprep.subr.mxu0 0.0
        %1611 = vmatpush1.msra.mxu0 0.0
        %1612 = vmatprep.subr.mxu0 0.0
        %1613 = vmatpush1.msra.mxu0 0.0
        %1614 = vmatprep.subr.mxu0 0.0
        %1615 = vmatpush1.msra.mxu0 0.0
        %1616 = vmatprep.subr.mxu0 0.0
        %1617 = vmatpush1.msra.mxu0 0.0
        %1618 = vmatprep.subr.mxu0 0.0
        %1619 = vmatpush1.msra.mxu0 0.0
        %1620 = vmatprep.subr.mxu0 0.0
        %1621 = vmatpush1.msra.mxu0 0.0
        %1622 = vmatprep.subr.mxu0 0.0
        %1623 = vmatpush1.msra.mxu0 0.0
        %1624 = vmatprep.subr.mxu0 0.0
        %1625 = vmatpush1.msra.mxu0 0.0
        %1626 = vmatprep.mubr.f32.mxu0 0.0
        %1627 = vmatmul.mubr.f32.gmra.mrb[0].mxu0 %v1560
        %v1628 = vpop.f32.mrb[0].mxu0
        %v1629 = vadd.f32 0.0, %v1628
        %v1630 = vpop.f32.mrb[0].mxu0
        %1631 = vdwg.mxu0
        %v1632 = vxor.u32 %v1629, 2147483648
        %v1633 = vmul.f32 %v1632, 1.442695
        %v1634 = vpow.pop %v1633
        %v1635 = vadd.f32 %v1634, 1.0
        %v1636 = vrcp.pop %v1635
        %v1637 = vmul.f32 1.0, %v1636
        %1638 = vrot.lane.b32.xlu0 %v1458, 32
        %v1639 = vpop.permute.xlu0 %1638
        %v1641 = vsub.f32 %v1637, %v1639
        %1643 = vrot.lane.b32.xlu0 %v1641, 96
        %v1644 = vpop.permute.xlu0 %1643
        %v1646 = vmul.f32 %v1637, %v1644
        %v1647 = vadd.f32 %v1458, %v1646
        %v1648 = vadd.f32 %v1554, %v1647
        %v1649 = vmax.f32 %v1629, 0.0
        %1650 = vrot.lane.b32.xlu0 %v1458, 96
        %v1651 = vpop.permute.xlu0 %1650
        %v1653 = vsub.f32 %v1649, %v1651
        %1655 = vrot.lane.b32.xlu0 %v1653, 96
        %v1656 = vpop.permute.xlu0 %1655
        %v1658 = vmul.f32 %v1637, %v1656
        %1660 = vrot.lane.b32.xlu0 %v1658, 64
        %v1661 = vpop.permute.xlu0 %1660
        %v1663 = vadd.f32 %v1458, %v1661
        %v1664 = vadd.f32 %v1648, %v1663
        %v1665 = vmul.f32 %v1664, 0.125
        %s1666 = scalar_lea.vmem %s414, 2
        %1667 = vst.msk [vmem:[%s1666] sm:$0x3] %vm1044, %v1665
        %1668 = vst.msk [vmem:[#allocation2] sm:$0x3] %vm1044, %v1665
        %s1669 = smul.u32 2, %s27
        %p1670 = scmp.lt.s32.totalorder %s1669, 7
        %s1671 = scalar_select %p1670, %s1669, 7
        %p1672 = scmp.lt.s32.totalorder %s26, 0
        %s1673 = scalar_select %p1672, %s26, 0
        %s1674 = sadd.s32 %s1673, %s1671
        %s1675 = smul.addr %s1674, 2
        %s1676 = scalar_lea.vmem %s8, %s1675
        // Predicated region
        $region73: #{dg_receiver_forward.2} parent=51 // pred_check
          %p1677 = pneg %p234
        $region74: #{dg_receiver_forward.2} parent=51 // pred_check_branch
          %1679 = sbr.rel (%p1677) target = $region76
        $region75: #{dg_receiver_forward.2} parent=51 // pred_region
          %s1680 = smul.u32 2, %s27
        $region76: #{dg_receiver_forward.2} parent=51 // pred_fallthru
          _
      $region52: #{dg_receiver_forward.2} parent=5 // pred_fallthru
        _
      %p1681 = scmp.le.s32.totalorder 2, %s17
      // Predicated region
      $region77: #{dg_receiver_forward.2} parent=5 // pred_check
        %p1682 = pneg %p1681
      $region78: #{dg_receiver_forward.2} parent=5 // pred_check_branch
        %1684 = sbr.rel (%p1682) target = $region80
      $region79: #{dg_receiver_forward.2} parent=5 // pred_region
        %s1685 = ssub.s32 %s17, 2
        // Predicated region
        $region81: #{dg_receiver_forward.2} parent=79 // pred_check
          %p1686 = pneg %p240
        $region82: #{dg_receiver_forward.2} parent=79 // pred_check_branch
          %1688 = sbr.rel (%p1686) target = $region84
        $region83: #{dg_receiver_forward.2} parent=79 // pred_region
          %s1689 = smul.u32 2, %s29
          %p1690 = scmp.lt.s32.totalorder %s1689, 7
          %s1691 = scalar_select %p1690, %s1689, 7
          %p1692 = scmp.lt.s32.totalorder %s28, 0
          %s1693 = scalar_select %p1692, %s28, 0
          %s1694 = sadd.s32 %s1693, %s1691
          %s1695 = smul.addr %s1694, 2
          %s1696 = scalar_lea.vmem %s8, %s1695
        $region84: #{dg_receiver_forward.2} parent=79 // pred_fallthru
          _
      $region80: #{dg_receiver_forward.2} parent=5 // pred_fallthru
        _
    $region6: #{dg_receiver_forward.2} parent=1 // loop_footer
      %s21 = sadd.s32 1, %s17
    $region7: #{dg_receiver_forward.2} parent=1 // loop_footer_branch
      %16 = sbr.rel target = $region3
    $region8: #{dg_receiver_forward.2} parent=1 // loop_exit
      _
    %1697 = vsyncpa [#allocation4], 1
    %s1698 = scalar_lea.sflag [#allocation4], 1
    %1699 = vsyncpa %s1698, 1
    %1700 = vsyncpa [#allocation6], 1
    %1701 = vsyncpa [#allocation9], 1

// kernel: dg_receiver_forward.3
$region0: #{dg_receiver_forward.3}
  #allocation0 [shape = 'u32[]', space=smem, size = 0x4, offset = 0x4, fixed_abs, tag = 'smem constant byte address 0x4 - core index']
  #allocation1 [shape = 'u32[144,128]{1,0:T(1,128)}', space=vmem, size = 0x12000, scoped, tag = 'internal scratch']
  #allocation2 [shape = 'f32[2,32]{1,0:T(2,128)}', space=vmem, size = 0x400, scoped, tag = 'scratch operand']
  %s0 = inlined_call_operand.vmem [shape: f32[8,2,64], index: 0, kind: input, shape index: {}]
  %s1 = inlined_call_operand.vmem [shape: f32[2,32], index: 1, kind: input, shape index: {}]
  %s2 = inlined_call_operand.vmem [shape: f32[32,64], index: 2, kind: input, shape index: {}]
  %s3 = inlined_call_operand.vmem [shape: f32[32,64], index: 3, kind: input, shape index: {}]
  %s4 = inlined_call_operand.vmem [shape: f32[32,192], index: 4, kind: input, shape index: {}]
  %s5 = inlined_call_operand.vmem [shape: f32[32,64], index: 5, kind: input, shape index: {}]
  %s6 = inlined_call_operand.vmem [shape: f32[32,64], index: 6, kind: input, shape index: {}]
  %s7 = inlined_call_operand.vmem [shape: f32[32,128], index: 7, kind: input, shape index: {}]
  %s8 = inlined_call_operand.vmem [shape: f32[8,2,32], index: 8, kind: output, shape index: {}]
  %s9 = sld [smem:[#allocation0]]
  $region69: #{dg_receiver_forward.3} parent=0
    _
  %s11 = ssub.s32 1, %s9
  %s12 = scalar_select 0, %s11, %s9
  loop: start=0, step=1, limit=6
  $region2: #{dg_receiver_forward.3} parent=0 // loop_pre_header
    _
  $region3: #{dg_receiver_forward.3} parent=0 // loop_header
    %s14 = sphi 0, %s18
    %p15 = scmp.ge.s32.totalorder %s14, 6
    %s21 = sphi 0, %s33
    %s22 = sphi 0, %s29
    %s23 = sphi 0, %s21
    %s24 = sphi 0, %s22
    %s25 = sphi 0, %s23
    %s26 = sphi 0, %s24
    %s38 = sphi 0, %s40
    %s41 = sphi 0, %s38
    %s42 = sphi 0, %s41
    %s58 = sphi 0, %s42
    %s64 = sphi 0, %s66
    %s67 = sphi 0, %s64
    %s68 = sphi 0, %s67
    %s84 = sphi 0, %s68
    %s88 = sphi 0, %s88
    %s90 = sphi 0, %s88
    %s91 = sphi 0, %s90
    %s105 = sphi 0, %s91
    %s109 = sphi 0, %s109
    %s111 = sphi 0, %s109
    %s112 = sphi 0, %s111
    %s126 = sphi 0, %s112
    %s130 = sphi 0, %s130
    %s132 = sphi 0, %s130
    %s133 = sphi 0, %s132
    %s147 = sphi 0, %s133
    %s151 = sphi 0, %s151
    %s153 = sphi 0, %s151
    %s154 = sphi 0, %s153
    %s168 = sphi 0, %s154
    %s172 = sphi 0, %s172
    %s174 = sphi 0, %s172
    %s175 = sphi 0, %s174
    %s189 = sphi 0, %s175
    %s193 = sphi 0, %s193
    %s195 = sphi 0, %s193
    %s196 = sphi 0, %s195
    %s210 = sphi 0, %s196
    %s218 = sphi 0, %s220
    %s221 = sphi 0, %s218
    %s222 = sphi 0, %s221
    %s238 = sphi 0, %s222
  $region4: #{dg_receiver_forward.3} parent=0 // loop_header_branch
    %17 = sbr.rel (%p15) target = $region8
  $region5: #{dg_receiver_forward.3} parent=0 // loop_body
    %s19 = ssub.s32 %s14, 1
    %s20 = ssub.s32 %s14, 2
    %s27 = sadd.s32 1, %s22
    %p28 = scmp.ge.s32.totalorder %s27, 4
    %s29 = scalar_select %p28, 0, %s27
    %s30 = sadd.s32 1, %s21
    %s31 = scalar_select %p28, %s30, %s21
    %p32 = scmp.ge.s32.totalorder %s31, 1
    %s33 = scalar_select %p32, 0, %s31
    %s34 = ssub.s32 %s22, %s29
    %s35 = ssub.s32 %s21, %s33
    %s36 = sor.u32 %s34, %s35
    %p37 = scmp.eq.s32.totalorder %s36, 0
    %s39 = sadd.s32 %s38, 1
    %s40 = scalar_select %p37, %s38, %s39
    %p43 = pneg %p37
    %p44 = scmp.eq.s32.totalorder %s14, 3
    %p45 = por %p43, %p44
    %p46 = scmp.ne.s32.totalorder %s38, %s41
    %p47 = scmp.eq.s32.totalorder %s14, 0
    %p48 = por %p46, %p47
    %p49 = scmp.ne.s32.totalorder %s38, %s41
    %p50 = scmp.eq.s32.totalorder %s19, 3
    %p51 = por %p49, %p50
    %p52 = scmp.ne.s32.totalorder %s41, %s42
    %p53 = scmp.eq.s32.totalorder %s19, 0
    %p54 = por %p52, %p53
    %p55 = scmp.ne.s32.totalorder %s41, %s42
    %p56 = scmp.eq.s32.totalorder %s20, 3
    %p57 = por %p55, %p56
    %p59 = scmp.ne.s32.totalorder %s42, %s58
    %p60 = scmp.eq.s32.totalorder %s20, 0
    %p61 = por %p59, %p60
    %s62 = ssub.s32 %s21, %s33
    %p63 = scmp.eq.s32.totalorder %s62, 0
    %s65 = sadd.s32 %s64, 1
    %s66 = scalar_select %p63, %s64, %s65
    %p69 = pneg %p63
    %p70 = scmp.eq.s32.totalorder %s14, 3
    %p71 = por %p69, %p70
    %p72 = scmp.ne.s32.totalorder %s64, %s67
    %p73 = scmp.eq.s32.totalorder %s14, 0
    %p74 = por %p72, %p73
    %p75 = scmp.ne.s32.totalorder %s64, %s67
    %p76 = scmp.eq.s32.totalorder %s19, 3
    %p77 = por %p75, %p76
    %p78 = scmp.ne.s32.totalorder %s67, %s68
    %p79 = scmp.eq.s32.totalorder %s19, 0
    %p80 = por %p78, %p79
    %p81 = scmp.ne.s32.totalorder %s67, %s68
    %p82 = scmp.eq.s32.totalorder %s20, 3
    %p83 = por %p81, %p82
    %p85 = scmp.ne.s32.totalorder %s68, %s84
    %p86 = scmp.eq.s32.totalorder %s20, 0
    %p87 = por %p85, %p86
    %s89 = sadd.s32 %s88, 1
    %p92 = scmp.eq.s32.totalorder %s14, 3
    %p93 = scmp.ne.s32.totalorder %s88, %s90
    %p94 = scmp.eq.s32.totalorder %s14, 0
    %p95 = por %p93, %p94
    %p96 = scmp.ne.s32.totalorder %s88, %s90
    %p97 = scmp.eq.s32.totalorder %s19, 3
    %p98 = por %p96, %p97
    %p99 = scmp.ne.s32.totalorder %s90, %s91
    %p100 = scmp.eq.s32.totalorder %s19, 0
    %p101 = por %p99, %p100
    %p102 = scmp.ne.s32.totalorder %s90, %s91
    %p103 = scmp.eq.s32.totalorder %s20, 3
    %p104 = por %p102, %p103
    %p106 = scmp.ne.s32.totalorder %s91, %s105
    %p107 = scmp.eq.s32.totalorder %s20, 0
    %p108 = por %p106, %p107
    %s110 = sadd.s32 %s109, 1
    %p113 = scmp.eq.s32.totalorder %s14, 3
    %p114 = scmp.ne.s32.totalorder %s109, %s111
    %p115 = scmp.eq.s32.totalorder %s14, 0
    %p116 = por %p114, %p115
    %p117 = scmp.ne.s32.totalorder %s109, %s111
    %p118 = scmp.eq.s32.totalorder %s19, 3
    %p119 = por %p117, %p118
    %p120 = scmp.ne.s32.totalorder %s111, %s112
    %p121 = scmp.eq.s32.totalorder %s19, 0
    %p122 = por %p120, %p121
    %p123 = scmp.ne.s32.totalorder %s111, %s112
    %p124 = scmp.eq.s32.totalorder %s20, 3
    %p125 = por %p123, %p124
    %p127 = scmp.ne.s32.totalorder %s112, %s126
    %p128 = scmp.eq.s32.totalorder %s20, 0
    %p129 = por %p127, %p128
    %s131 = sadd.s32 %s130, 1
    %p134 = scmp.eq.s32.totalorder %s14, 3
    %p135 = scmp.ne.s32.totalorder %s130, %s132
    %p136 = scmp.eq.s32.totalorder %s14, 0
    %p137 = por %p135, %p136
    %p138 = scmp.ne.s32.totalorder %s130, %s132
    %p139 = scmp.eq.s32.totalorder %s19, 3
    %p140 = por %p138, %p139
    %p141 = scmp.ne.s32.totalorder %s132, %s133
    %p142 = scmp.eq.s32.totalorder %s19, 0
    %p143 = por %p141, %p142
    %p144 = scmp.ne.s32.totalorder %s132, %s133
    %p145 = scmp.eq.s32.totalorder %s20, 3
    %p146 = por %p144, %p145
    %p148 = scmp.ne.s32.totalorder %s133, %s147
    %p149 = scmp.eq.s32.totalorder %s20, 0
    %p150 = por %p148, %p149
    %s152 = sadd.s32 %s151, 1
    %p155 = scmp.eq.s32.totalorder %s14, 3
    %p156 = scmp.ne.s32.totalorder %s151, %s153
    %p157 = scmp.eq.s32.totalorder %s14, 0
    %p158 = por %p156, %p157
    %p159 = scmp.ne.s32.totalorder %s151, %s153
    %p160 = scmp.eq.s32.totalorder %s19, 3
    %p161 = por %p159, %p160
    %p162 = scmp.ne.s32.totalorder %s153, %s154
    %p163 = scmp.eq.s32.totalorder %s19, 0
    %p164 = por %p162, %p163
    %p165 = scmp.ne.s32.totalorder %s153, %s154
    %p166 = scmp.eq.s32.totalorder %s20, 3
    %p167 = por %p165, %p166
    %p169 = scmp.ne.s32.totalorder %s154, %s168
    %p170 = scmp.eq.s32.totalorder %s20, 0
    %p171 = por %p169, %p170
    %s173 = sadd.s32 %s172, 1
    %p176 = scmp.eq.s32.totalorder %s14, 3
    %p177 = scmp.ne.s32.totalorder %s172, %s174
    %p178 = scmp.eq.s32.totalorder %s14, 0
    %p179 = por %p177, %p178
    %p180 = scmp.ne.s32.totalorder %s172, %s174
    %p181 = scmp.eq.s32.totalorder %s19, 3
    %p182 = por %p180, %p181
    %p183 = scmp.ne.s32.totalorder %s174, %s175
    %p184 = scmp.eq.s32.totalorder %s19, 0
    %p185 = por %p183, %p184
    %p186 = scmp.ne.s32.totalorder %s174, %s175
    %p187 = scmp.eq.s32.totalorder %s20, 3
    %p188 = por %p186, %p187
    %p190 = scmp.ne.s32.totalorder %s175, %s189
    %p191 = scmp.eq.s32.totalorder %s20, 0
    %p192 = por %p190, %p191
    %s194 = sadd.s32 %s193, 1
    %p197 = scmp.eq.s32.totalorder %s14, 3
    %p198 = scmp.ne.s32.totalorder %s193, %s195
    %p199 = scmp.eq.s32.totalorder %s14, 0
    %p200 = por %p198, %p199
    %p201 = scmp.ne.s32.totalorder %s193, %s195
    %p202 = scmp.eq.s32.totalorder %s19, 3
    %p203 = por %p201, %p202
    %p204 = scmp.ne.s32.totalorder %s195, %s196
    %p205 = scmp.eq.s32.totalorder %s19, 0
    %p206 = por %p204, %p205
    %p207 = scmp.ne.s32.totalorder %s195, %s196
    %p208 = scmp.eq.s32.totalorder %s20, 3
    %p209 = por %p207, %p208
    %p211 = scmp.ne.s32.totalorder %s196, %s210
    %p212 = scmp.eq.s32.totalorder %s20, 0
    %p213 = por %p211, %p212
    %s214 = ssub.s32 %s22, %s29
    %s215 = ssub.s32 %s21, %s33
    %s216 = sor.u32 %s214, %s215
    %p217 = scmp.eq.s32.totalorder %s216, 0
    %s219 = sadd.s32 %s218, 1
    %s220 = scalar_select %p217, %s218, %s219
    %p223 = pneg %p217
    %p224 = scmp.eq.s32.totalorder %s14, 3
    %p225 = por %p223, %p224
    %p226 = scmp.ne.s32.totalorder %s218, %s221
    %p227 = scmp.eq.s32.totalorder %s14, 0
    %p228 = por %p226, %p227
    %p229 = scmp.ne.s32.totalorder %s218, %s221
    %p230 = scmp.eq.s32.totalorder %s19, 3
    %p231 = por %p229, %p230
    %p232 = scmp.ne.s32.totalorder %s221, %s222
    %p233 = scmp.eq.s32.totalorder %s19, 0
    %p234 = por %p232, %p233
    %p235 = scmp.ne.s32.totalorder %s221, %s222
    %p236 = scmp.eq.s32.totalorder %s20, 3
    %p237 = por %p235, %p236
    %p239 = scmp.ne.s32.totalorder %s222, %s238
    %p240 = scmp.eq.s32.totalorder %s20, 0
    %p241 = por %p239, %p240
    %p242 = scmp.le.s32.totalorder 1, %s14
    %p243 = scmp.lt.s32.totalorder %s14, 5
    %p244 = pnand %p242, %p243
    %p245 = pneg %p244
    // Predicated region
    $region9: #{dg_receiver_forward.3} parent=5 // pred_check
      _
    $region10: #{dg_receiver_forward.3} parent=5 // pred_check_branch
      %247 = sbr.rel (%p244) target = $region12
    $region11: #{dg_receiver_forward.3} parent=5 // pred_region
      %s248 = ssub.s32 %s14, 1
      // Predicated region
      $region13: #{dg_receiver_forward.3} parent=11 // pred_check
        %p249 = pneg %p80
      $region14: #{dg_receiver_forward.3} parent=11 // pred_check_branch
        %251 = sbr.rel (%p249) target = $region16
      $region15: #{dg_receiver_forward.3} parent=11 // pred_region
        %p252 = scmp.lt.s32.totalorder %s23, 0
        %s253 = scalar_select %p252, %s23, 0
        %s254 = smul.addr %s253, 2
        %s255 = scalar_lea.vmem %s1, %s254
      $region16: #{dg_receiver_forward.3} parent=11 // pred_fallthru
        _
      // Predicated region
      $region17: #{dg_receiver_forward.3} parent=11 // pred_check
        %p256 = pneg %p101
      $region18: #{dg_receiver_forward.3} parent=11 // pred_check_branch
        %258 = sbr.rel (%p256) target = $region20
      $region19: #{dg_receiver_forward.3} parent=11 // pred_region
        _
      $region20: #{dg_receiver_forward.3} parent=11 // pred_fallthru
        _
      // Predicated region
      $region21: #{dg_receiver_forward.3} parent=11 // pred_check
        %p259 = pneg %p122
      $region22: #{dg_receiver_forward.3} parent=11 // pred_check_branch
        %261 = sbr.rel (%p259) target = $region24
      $region23: #{dg_receiver_forward.3} parent=11 // pred_region
        _
      $region24: #{dg_receiver_forward.3} parent=11 // pred_fallthru
        _
      // Predicated region
      $region25: #{dg_receiver_forward.3} parent=11 // pred_check
        %p262 = pneg %p143
      $region26: #{dg_receiver_forward.3} parent=11 // pred_check_branch
        %264 = sbr.rel (%p262) target = $region28
      $region27: #{dg_receiver_forward.3} parent=11 // pred_region
        _
      $region28: #{dg_receiver_forward.3} parent=11 // pred_fallthru
        _
      // Predicated region
      $region29: #{dg_receiver_forward.3} parent=11 // pred_check
        %p265 = pneg %p164
      $region30: #{dg_receiver_forward.3} parent=11 // pred_check_branch
        %267 = sbr.rel (%p265) target = $region32
      $region31: #{dg_receiver_forward.3} parent=11 // pred_region
        _
      $region32: #{dg_receiver_forward.3} parent=11 // pred_fallthru
        _
      // Predicated region
      $region33: #{dg_receiver_forward.3} parent=11 // pred_check
        %p268 = pneg %p185
      $region34: #{dg_receiver_forward.3} parent=11 // pred_check_branch
        %270 = sbr.rel (%p268) target = $region36
      $region35: #{dg_receiver_forward.3} parent=11 // pred_region
        _
      $region36: #{dg_receiver_forward.3} parent=11 // pred_fallthru
        _
      // Predicated region
      $region37: #{dg_receiver_forward.3} parent=11 // pred_check
        %p271 = pneg %p206
      $region38: #{dg_receiver_forward.3} parent=11 // pred_check_branch
        %273 = sbr.rel (%p271) target = $region40
      $region39: #{dg_receiver_forward.3} parent=11 // pred_region
        _
      $region40: #{dg_receiver_forward.3} parent=11 // pred_fallthru
        _
    $region12: #{dg_receiver_forward.3} parent=5 // pred_fallthru
      _
    %p274 = scmp.lt.s32.totalorder %s14, 4
    // Predicated region
    $region41: #{dg_receiver_forward.3} parent=5 // pred_check
      %p275 = pneg %p274
    $region42: #{dg_receiver_forward.3} parent=5 // pred_check_branch
      %277 = sbr.rel (%p275) target = $region44
    $region43: #{dg_receiver_forward.3} parent=5 // pred_region
      // Predicated region
      $region45: #{dg_receiver_forward.3} parent=43 // pred_check
        %p278 = pneg %p48
      $region46: #{dg_receiver_forward.3} parent=43 // pred_check_branch
        %280 = sbr.rel (%p278) target = $region48
      $region47: #{dg_receiver_forward.3} parent=43 // pred_region
        %s281 = smul.u32 2, %s22
        %p282 = scmp.lt.s32.totalorder %s281, 7
        %s283 = scalar_select %p282, %s281, 7
        %p284 = scmp.lt.s32.totalorder %s21, 0
        %s285 = scalar_select %p284, %s21, 0
        %s286 = sadd.s32 %s285, %s283
        %s287 = smul.addr %s286, 2
        %s288 = scalar_lea.vmem %s0, %s287
        %s289 = smul.u32 2, %s22
      $region48: #{dg_receiver_forward.3} parent=43 // pred_fallthru
        _
    $region44: #{dg_receiver_forward.3} parent=5 // pred_fallthru
      _
    %p290 = scmp.le.s32.totalorder 1, %s14
    %p291 = scmp.lt.s32.totalorder %s14, 5
    %p292 = pnand %p290, %p291
    %p293 = pneg %p292
    // Predicated region
    $region49: #{dg_receiver_forward.3} parent=5 // pred_check
      _
    $region50: #{dg_receiver_forward.3} parent=5 // pred_check_branch
      %295 = sbr.rel (%p292) target = $region52
    $region51: #{dg_receiver_forward.3} parent=5 // pred_region
      %s296 = ssub.s32 %s14, 1
      %s297 = smul.u32 2, %s24
      %p298 = scmp.lt.s32.totalorder %s297, 7
      %s299 = scalar_select %p298, %s297, 7
      %p300 = scmp.lt.s32.totalorder %s23, 0
      %s301 = scalar_select %p300, %s23, 0
      %s302 = sadd.s32 %s301, %s299
      %s303 = smul.addr %s302, 2
      %s304 = scalar_lea.vmem %s0, %s303
      %p305 = pneg %p54
      %p306 = pneg %p51
      %p307 = scmp.lt.s32.totalorder %s23, 0
      %s308 = scalar_select %p307, %s23, 0
      %s309 = smul.addr %s308, 2
      %s310 = scalar_lea.vmem %s1, %s309
      %p311 = pneg %p80
      %p312 = pneg %p77
      %p313 = pneg %p101
      %p314 = pneg %p98
      %p315 = pneg %p122
      %p316 = pneg %p119
      %p317 = pneg %p143
      %p318 = pneg %p140
      %p319 = pneg %p164
      %p320 = pneg %p161
      %p321 = pneg %p185
      %p322 = pneg %p182
      %p323 = pneg %p206
      %p324 = pneg %p203
      %p325 = pneg %p234
      %p326 = pneg %p231
      %s327 = smul.u32 2, %s24
      %p328 = scmp.lt.s32.totalorder %s327, 7
      %s329 = scalar_select %p328, %s327, 7
      %p330 = scmp.lt.s32.totalorder %s23, 0
      %s331 = scalar_select %p330, %s23, 0
      %s332 = sadd.s32 %s331, %s329
      %s333 = smul.addr %s332, 2
      %s334 = scalar_lea.vmem %s8, %s333
      %s335 = smul.u32 2, %s24
      %p336 = scmp.lt.s32.totalorder %s335, 7
      %s337 = scalar_select %p336, %s335, 7
      %p338 = scmp.lt.s32.totalorder %s23, 0
      %s339 = scalar_select %p338, %s23, 0
      %s340 = sadd.s32 %s339, %s337
      %s341 = smul.addr %s340, 2
      %s342 = scalar_lea.vmem %s0, %s341
      %s343 = smul.u32 2, %s24
      %p344 = scmp.lt.s32.totalorder %s23, 0
      %s345 = scalar_select %p344, %s23, 0
      %s346 = smul.addr %s345, 2
      %s347 = scalar_lea.vmem %s1, %s346
      %s348 = smul.u32 2, %s24
      %p349 = scmp.lt.s32.totalorder %s348, 7
      %s350 = scalar_select %p349, %s348, 7
      %p351 = scmp.lt.s32.totalorder %s23, 0
      %s352 = scalar_select %p351, %s23, 0
      %s353 = sadd.s32 %s352, %s350
      %s354 = smul.addr %s353, 2
      %s355 = scalar_lea.vmem %s8, %s354
      %s356 = smul.u32 2, %s24
      %p357 = scmp.eq.s32.totalorder %s24, 0
      // Predicated region
      $region53: #{dg_receiver_forward.3} parent=51 // pred_check
        %p358 = pneg %p357
      $region54: #{dg_receiver_forward.3} parent=51 // pred_check_branch
        %360 = sbr.rel (%p358) target = $region56
      $region55: #{dg_receiver_forward.3} parent=51 // pred_region
        %v361 = vld [vmem:[%s347] sm:$0x3]
        %vm362 = vcmask 254976
        %363 = vst.msk [vmem:[#allocation2] sm:$0x3] %vm362, %v361
      $region56: #{dg_receiver_forward.3} parent=51 // pred_fallthru
        _
      %v364 = vld [vmem:[#allocation2] sm:$0x3]
      %v365 = vld [vmem:[%s342] sm:$0x3]
      %v366 = vld [vmem:[%s2] sm:$0xff]
      %v367 = vld [vmem:[%s2 + $0x8] sm:$0xff]
      %v368 = vld [vmem:[%s2 + $0x10] sm:$0xff]
      %v369 = vld [vmem:[%s2 + $0x18] sm:$0xff]
      %vm370 = vcmask 261120
      %v372 = vsel %vm370, %v364, 0
      %374 = vmatprep.subr.mxu0 0.0
      %375 = vmatpush1.msra.mxu0 %v366
      %376 = vmatprep.subr.mxu0 0.0
      %377 = vmatpush1.msra.mxu0 %v367
      %378 = vmatprep.subr.mxu0 0.0
      %379 = vmatpush1.msra.mxu0 %v368
      %380 = vmatprep.subr.mxu0 0.0
      %381 = vmatpush1.msra.mxu0 %v369
      %382 = vmatprep.subr.mxu0 0.0
      %383 = vmatpush1.msra.mxu0 0.0
      %384 = vmatprep.subr.mxu0 0.0
      %385 = vmatpush1.msra.mxu0 0.0
      %386 = vmatprep.subr.mxu0 0.0
      %387 = vmatpush1.msra.mxu0 0.0
      %388 = vmatprep.subr.mxu0 0.0
      %389 = vmatpush1.msra.mxu0 0.0
      %390 = vmatprep.subr.mxu0 0.0
      %391 = vmatpush1.msra.mxu0 0.0
      %392 = vmatprep.subr.mxu0 0.0
      %393 = vmatpush1.msra.mxu0 0.0
      %394 = vmatprep.subr.mxu0 0.0
      %395 = vmatpush1.msra.mxu0 0.0
      %396 = vmatprep.subr.mxu0 0.0
      %397 = vmatpush1.msra.mxu0 0.0
      %398 = vmatprep.subr.mxu0 0.0
      %399 = vmatpush1.msra.mxu0 0.0
      %400 = vmatprep.subr.mxu0 0.0
      %401 = vmatpush1.msra.mxu0 0.0
      %402 = vmatprep.subr.mxu0 0.0
      %403 = vmatpush1.msra.mxu0 0.0
      %404 = vmatprep.subr.mxu0 0.0
      %405 = vmatpush1.msra.mxu0 0.0
      %406 = vmatprep.subr.mxu0 0.0
      %407 = vmatpush1.msra.mxu0 0.0
      %408 = vmatprep.subr.mxu0 0.0
      %409 = vmatpush1.msra.mxu0 0.0
      %410 = vmatprep.subr.mxu0 0.0
      %411 = vmatpush1.msra.mxu0 0.0
      %412 = vmatprep.subr.mxu0 0.0
      %413 = vmatpush1.msra.mxu0 0.0
      %414 = vmatprep.subr.mxu0 0.0
      %415 = vmatpush1.msra.mxu0 0.0
      %416 = vmatprep.subr.mxu0 0.0
      %417 = vmatpush1.msra.mxu0 0.0
      %418 = vmatprep.subr.mxu0 0.0
      %419 = vmatpush1.msra.mxu0 0.0
      %420 = vmatprep.subr.mxu0 0.0
      %421 = vmatpush1.msra.mxu0 0.0
      %422 = vmatprep.subr.mxu0 0.0
      %423 = vmatpush1.msra.mxu0 0.0
      %424 = vmatprep.subr.mxu0 0.0
      %425 = vmatpush1.msra.mxu0 0.0
      %426 = vmatprep.subr.mxu0 0.0
      %427 = vmatpush1.msra.mxu0 0.0
      %428 = vmatprep.subr.mxu0 0.0
      %429 = vmatpush1.msra.mxu0 0.0
      %430 = vmatprep.subr.mxu0 0.0
      %431 = vmatpush1.msra.mxu0 0.0
      %432 = vmatprep.subr.mxu0 0.0
      %433 = vmatpush1.msra.mxu0 0.0
      %434 = vmatprep.subr.mxu0 0.0
      %435 = vmatpush1.msra.mxu0 0.0
      %436 = vmatprep.subr.mxu0 0.0
      %437 = vmatpush1.msra.mxu0 0.0
      %438 = vmatprep.mubr.f32.mxu0 0.0
      %439 = vmatmul.mubr.f32.gmra.mrb[0].mxu0 %v372
      %v440 = vpop.f32.mrb[0].mxu0
      %v441 = vadd.f32 0.0, %v440
      %v442 = vpop.f32.mrb[0].mxu0
      %443 = vdwg.mxu0
      %v444 = vadd.f32 %v365, %v441
      %v445 = vxor.u32 %v444, 2147483648
      %v446 = vmul.f32 %v445, 1.442695
      %v447 = vpow.pop %v446
      %v448 = vadd.f32 %v447, 1.0
      %v449 = vrcp.pop %v448
      %v450 = vmul.f32 1.0, %v449
      %v451 = vtanh.pop %v444
      %452 = vrot.lane.b32.xlu0 %v364, 32
      %v453 = vpop.permute.xlu0 %452
      %v455 = vsub.f32 %v451, %v453
      %457 = vrot.lane.b32.xlu0 %v455, 96
      %v458 = vpop.permute.xlu0 %457
      %v460 = vmul.f32 %v450, %v458
      %v461 = vadd.f32 %v364, %v460
      %v462 = vld [vmem:[%s3] sm:$0xff]
      %v463 = vld [vmem:[%s3 + $0x8] sm:$0xff]
      %v464 = vld [vmem:[%s3 + $0x10] sm:$0xff]
      %v465 = vld [vmem:[%s3 + $0x18] sm:$0xff]
      %v467 = vsel %vm370, %v461, 0
      %469 = vmatprep.subr.mxu0 0.0
      %470 = vmatpush1.msra.mxu0 %v462
      %471 = vmatprep.subr.mxu0 0.0
      %472 = vmatpush1.msra.mxu0 %v463
      %473 = vmatprep.subr.mxu0 0.0
      %474 = vmatpush1.msra.mxu0 %v464
      %475 = vmatprep.subr.mxu0 0.0
      %476 = vmatpush1.msra.mxu0 %v465
      %477 = vmatprep.subr.mxu0 0.0
      %478 = vmatpush1.msra.mxu0 0.0
      %479 = vmatprep.subr.mxu0 0.0
      %480 = vmatpush1.msra.mxu0 0.0
      %481 = vmatprep.subr.mxu0 0.0
      %482 = vmatpush1.msra.mxu0 0.0
      %483 = vmatprep.subr.mxu0 0.0
      %484 = vmatpush1.msra.mxu0 0.0
      %485 = vmatprep.subr.mxu0 0.0
      %486 = vmatpush1.msra.mxu0 0.0
      %487 = vmatprep.subr.mxu0 0.0
      %488 = vmatpush1.msra.mxu0 0.0
      %489 = vmatprep.subr.mxu0 0.0
      %490 = vmatpush1.msra.mxu0 0.0
      %491 = vmatprep.subr.mxu0 0.0
      %492 = vmatpush1.msra.mxu0 0.0
      %493 = vmatprep.subr.mxu0 0.0
      %494 = vmatpush1.msra.mxu0 0.0
      %495 = vmatprep.subr.mxu0 0.0
      %496 = vmatpush1.msra.mxu0 0.0
      %497 = vmatprep.subr.mxu0 0.0
      %498 = vmatpush1.msra.mxu0 0.0
      %499 = vmatprep.subr.mxu0 0.0
      %500 = vmatpush1.msra.mxu0 0.0
      %501 = vmatprep.subr.mxu0 0.0
      %502 = vmatpush1.msra.mxu0 0.0
      %503 = vmatprep.subr.mxu0 0.0
      %504 = vmatpush1.msra.mxu0 0.0
      %505 = vmatprep.subr.mxu0 0.0
      %506 = vmatpush1.msra.mxu0 0.0
      %507 = vmatprep.subr.mxu0 0.0
      %508 = vmatpush1.msra.mxu0 0.0
      %509 = vmatprep.subr.mxu0 0.0
      %510 = vmatpush1.msra.mxu0 0.0
      %511 = vmatprep.subr.mxu0 0.0
      %512 = vmatpush1.msra.mxu0 0.0
      %513 = vmatprep.subr.mxu0 0.0
      %514 = vmatpush1.msra.mxu0 0.0
      %515 = vmatprep.subr.mxu0 0.0
      %516 = vmatpush1.msra.mxu0 0.0
      %517 = vmatprep.subr.mxu0 0.0
      %518 = vmatpush1.msra.mxu0 0.0
      %519 = vmatprep.subr.mxu0 0.0
      %520 = vmatpush1.msra.mxu0 0.0
      %521 = vmatprep.subr.mxu0 0.0
      %522 = vmatpush1.msra.mxu0 0.0
      %523 = vmatprep.subr.mxu0 0.0
      %524 = vmatpush1.msra.mxu0 0.0
      %525 = vmatprep.subr.mxu0 0.0
      %526 = vmatpush1.msra.mxu0 0.0
      %527 = vmatprep.subr.mxu0 0.0
      %528 = vmatpush1.msra.mxu0 0.0
      %529 = vmatprep.subr.mxu0 0.0
      %530 = vmatpush1.msra.mxu0 0.0
      %531 = vmatprep.subr.mxu0 0.0
      %532 = vmatpush1.msra.mxu0 0.0
      %533 = vmatprep.mubr.f32.mxu0 0.0
      %534 = vmatmul.mubr.f32.gmra.mrb[0].mxu0 %v467
      %v535 = vpop.f32.mrb[0].mxu0
      %v536 = vadd.f32 0.0, %v535
      %v537 = vpop.f32.mrb[0].mxu0
      %538 = vdwg.mxu0
      %v539 = vxor.u32 %v536, 2147483648
      %v540 = vmul.f32 %v539, 1.442695
      %v541 = vpow.pop %v540
      %v542 = vadd.f32 %v541, 1.0
      %v543 = vrcp.pop %v542
      %v544 = vmul.f32 1.0, %v543
      %545 = vrot.lane.b32.xlu0 %v461, 32
      %v546 = vpop.permute.xlu0 %545
      %v548 = vsub.f32 %v544, %v546
      %550 = vrot.lane.b32.xlu0 %v548, 96
      %v551 = vpop.permute.xlu0 %550
      %v553 = vmul.f32 %v544, %v551
      %v554 = vadd.f32 %v461, %v553
      %v555 = vld [vmem:[%s4] sm:$0xff]
      %v556 = vld [vmem:[%s4 + $0x8] sm:$0xff]
      %v557 = vld [vmem:[%s4 + $0x10] sm:$0xff]
      %v558 = vld [vmem:[%s4 + $0x18] sm:$0xff]
      %v559 = vld [vmem:[%s4 + $0x20] sm:$0xff]
      %v560 = vld [vmem:[%s4 + $0x28] sm:$0xff]
      %v561 = vld [vmem:[%s4 + $0x30] sm:$0xff]
      %v562 = vld [vmem:[%s4 + $0x38] sm:$0xff]
      %v564 = vsel %vm370, %v554, 0
      %566 = vmatprep.subr.mxu0 %v556
      %567 = vmatpush1.msra.mxu0 %v555
      %568 = vmatprep.subr.mxu0 %v558
      %569 = vmatpush1.msra.mxu0 %v557
      %570 = vmatprep.subr.mxu0 %v560
      %571 = vmatpush1.msra.mxu0 %v559
      %572 = vmatprep.subr.mxu0 %v562
      %573 = vmatpush1.msra.mxu0 %v561
      %574 = vmatprep.subr.mxu0 0.0
      %575 = vmatpush1.msra.mxu0 0.0
      %576 = vmatprep.subr.mxu0 0.0
      %577 = vmatpush1.msra.mxu0 0.0
      %578 = vmatprep.subr.mxu0 0.0
      %579 = vmatpush1.msra.mxu0 0.0
      %580 = vmatprep.subr.mxu0 0.0
      %581 = vmatpush1.msra.mxu0 0.0
      %582 = vmatprep.subr.mxu0 0.0
      %583 = vmatpush1.msra.mxu0 0.0
      %584 = vmatprep.subr.mxu0 0.0
      %585 = vmatpush1.msra.mxu0 0.0
      %586 = vmatprep.subr.mxu0 0.0
      %587 = vmatpush1.msra.mxu0 0.0
      %588 = vmatprep.subr.mxu0 0.0
      %589 = vmatpush1.msra.mxu0 0.0
      %590 = vmatprep.subr.mxu0 0.0
      %591 = vmatpush1.msra.mxu0 0.0
      %592 = vmatprep.subr.mxu0 0.0
      %593 = vmatpush1.msra.mxu0 0.0
      %594 = vmatprep.subr.mxu0 0.0
      %595 = vmatpush1.msra.mxu0 0.0
      %596 = vmatprep.subr.mxu0 0.0
      %597 = vmatpush1.msra.mxu0 0.0
      %598 = vmatprep.subr.mxu0 0.0
      %599 = vmatpush1.msra.mxu0 0.0
      %600 = vmatprep.subr.mxu0 0.0
      %601 = vmatpush1.msra.mxu0 0.0
      %602 = vmatprep.subr.mxu0 0.0
      %603 = vmatpush1.msra.mxu0 0.0
      %604 = vmatprep.subr.mxu0 0.0
      %605 = vmatpush1.msra.mxu0 0.0
      %606 = vmatprep.subr.mxu0 0.0
      %607 = vmatpush1.msra.mxu0 0.0
      %608 = vmatprep.subr.mxu0 0.0
      %609 = vmatpush1.msra.mxu0 0.0
      %610 = vmatprep.subr.mxu0 0.0
      %611 = vmatpush1.msra.mxu0 0.0
      %612 = vmatprep.subr.mxu0 0.0
      %613 = vmatpush1.msra.mxu0 0.0
      %614 = vmatprep.subr.mxu0 0.0
      %615 = vmatpush1.msra.mxu0 0.0
      %616 = vmatprep.subr.mxu0 0.0
      %617 = vmatpush1.msra.mxu0 0.0
      %618 = vmatprep.subr.mxu0 0.0
      %619 = vmatpush1.msra.mxu0 0.0
      %620 = vmatprep.subr.mxu0 0.0
      %621 = vmatpush1.msra.mxu0 0.0
      %622 = vmatprep.subr.mxu0 0.0
      %623 = vmatpush1.msra.mxu0 0.0
      %624 = vmatprep.subr.mxu0 0.0
      %625 = vmatpush1.msra.mxu0 0.0
      %626 = vmatprep.subr.mxu0 0.0
      %627 = vmatpush1.msra.mxu0 0.0
      %628 = vmatprep.subr.mxu0 0.0
      %629 = vmatpush1.msra.mxu0 0.0
      %630 = vmatprep.mubr.f32.mxu0 0.0
      %631 = vmatmul.mubr.f32.gmra.mrb[0].mxu0 %v564
      %v632 = vpop.f32.mrb[0].mxu0
      %v633 = vadd.f32 0.0, %v632
      %v634 = vpop.f32.mrb[0].mxu0
      %v635 = vadd.f32 0.0, %v634
      %636 = vdwg.mxu0
      %v637 = vxor.u32 %v633, 2147483648
      %v638 = vmul.f32 %v637, 1.442695
      %v639 = vpow.pop %v638
      %v640 = vadd.f32 %v639, 1.0
      %v641 = vrcp.pop %v640
      %v642 = vmul.f32 1.0, %v641
      %v643 = vmax.f32 %v633, 0.0
      %644 = vrot.lane.b32.xlu0 %v554, 32
      %v645 = vpop.permute.xlu0 %644
      %v647 = vsub.f32 %v643, %v645
      %649 = vrot.lane.b32.xlu0 %v647, 96
      %v650 = vpop.permute.xlu0 %649
      %v652 = vmul.f32 %v642, %v650
      %v653 = vadd.f32 %v554, %v652
      %v654 = vadd.f32 %v554, %v653
      %655 = vrot.lane.b32.xlu0 %v554, 96
      %v656 = vpop.permute.xlu0 %655
      %v658 = vsub.f32 %v643, %v656
      %660 = vrot.lane.b32.xlu0 %v658, 96
      %v661 = vpop.permute.xlu0 %660
      %v663 = vmul.f32 %v642, %v661
      %665 = vrot.lane.b32.xlu0 %v663, 64
      %v666 = vpop.permute.xlu0 %665
      %v668 = vadd.f32 %v554, %v666
      %v669 = vadd.f32 %v654, %v668
      %v670 = vxor.u32 %v635, 2147483648
      %v671 = vmul.f32 %v670, 1.442695
      %v672 = vpow.pop %v671
      %v673 = vadd.f32 %v672, 1.0
      %v674 = vrcp.pop %v673
      %v675 = vmul.f32 1.0, %v674
      %v676 = vsub.f32 %v635, %v645
      %678 = vrot.lane.b32.xlu0 %v676, 96
      %v679 = vpop.permute.xlu0 %678
      %v681 = vmul.f32 %v675, %v679
      %v682 = vadd.f32 %v554, %v681
      %v683 = vadd.f32 %v669, %v682
      %v684 = vld [vmem:[%s5] sm:$0xff]
      %v685 = vld [vmem:[%s5 + $0x8] sm:$0xff]
      %v686 = vld [vmem:[%s5 + $0x10] sm:$0xff]
      %v687 = vld [vmem:[%s5 + $0x18] sm:$0xff]
      %v689 = vsel %vm370, %v653, 0
      %691 = vmatprep.subr.mxu0 0.0
      %692 = vmatpush1.msra.mxu0 %v684
      %693 = vmatprep.subr.mxu0 0.0
      %694 = vmatpush1.msra.mxu0 %v685
      %695 = vmatprep.subr.mxu0 0.0
      %696 = vmatpush1.msra.mxu0 %v686
      %697 = vmatprep.subr.mxu0 0.0
      %698 = vmatpush1.msra.mxu0 %v687
      %699 = vmatprep.subr.mxu0 0.0
      %700 = vmatpush1.msra.mxu0 0.0
      %701 = vmatprep.subr.mxu0 0.0
      %702 = vmatpush1.msra.mxu0 0.0
      %703 = vmatprep.subr.mxu0 0.0
      %704 = vmatpush1.msra.mxu0 0.0
      %705 = vmatprep.subr.mxu0 0.0
      %706 = vmatpush1.msra.mxu0 0.0
      %707 = vmatprep.subr.mxu0 0.0
      %708 = vmatpush1.msra.mxu0 0.0
      %709 = vmatprep.subr.mxu0 0.0
      %710 = vmatpush1.msra.mxu0 0.0
      %711 = vmatprep.subr.mxu0 0.0
      %712 = vmatpush1.msra.mxu0 0.0
      %713 = vmatprep.subr.mxu0 0.0
      %714 = vmatpush1.msra.mxu0 0.0
      %715 = vmatprep.subr.mxu0 0.0
      %716 = vmatpush1.msra.mxu0 0.0
      %717 = vmatprep.subr.mxu0 0.0
      %718 = vmatpush1.msra.mxu0 0.0
      %719 = vmatprep.subr.mxu0 0.0
      %720 = vmatpush1.msra.mxu0 0.0
      %721 = vmatprep.subr.mxu0 0.0
      %722 = vmatpush1.msra.mxu0 0.0
      %723 = vmatprep.subr.mxu0 0.0
      %724 = vmatpush1.msra.mxu0 0.0
      %725 = vmatprep.subr.mxu0 0.0
      %726 = vmatpush1.msra.mxu0 0.0
      %727 = vmatprep.subr.mxu0 0.0
      %728 = vmatpush1.msra.mxu0 0.0
      %729 = vmatprep.subr.mxu0 0.0
      %730 = vmatpush1.msra.mxu0 0.0
      %731 = vmatprep.subr.mxu0 0.0
      %732 = vmatpush1.msra.mxu0 0.0
      %733 = vmatprep.subr.mxu0 0.0
      %734 = vmatpush1.msra.mxu0 0.0
      %735 = vmatprep.subr.mxu0 0.0
      %736 = vmatpush1.msra.mxu0 0.0
      %737 = vmatprep.subr.mxu0 0.0
      %738 = vmatpush1.msra.mxu0 0.0
      %739 = vmatprep.subr.mxu0 0.0
      %740 = vmatpush1.msra.mxu0 0.0
      %741 = vmatprep.subr.mxu0 0.0
      %742 = vmatpush1.msra.mxu0 0.0
      %743 = vmatprep.subr.mxu0 0.0
      %744 = vmatpush1.msra.mxu0 0.0
      %745 = vmatprep.subr.mxu0 0.0
      %746 = vmatpush1.msra.mxu0 0.0
      %747 = vmatprep.subr.mxu0 0.0
      %748 = vmatpush1.msra.mxu0 0.0
      %749 = vmatprep.subr.mxu0 0.0
      %750 = vmatpush1.msra.mxu0 0.0
      %751 = vmatprep.subr.mxu0 0.0
      %752 = vmatpush1.msra.mxu0 0.0
      %753 = vmatprep.subr.mxu0 0.0
      %754 = vmatpush1.msra.mxu0 0.0
      %755 = vmatprep.mubr.f32.mxu0 0.0
      %756 = vmatmul.mubr.f32.gmra.mrb[0].mxu0 %v689
      %v757 = vpop.f32.mrb[0].mxu0
      %v758 = vadd.f32 0.0, %v757
      %v759 = vpop.f32.mrb[0].mxu0
      %760 = vdwg.mxu0
      %v761 = vxor.u32 %v758, 2147483648
      %v762 = vmul.f32 %v761, 1.442695
      %v763 = vpow.pop %v762
      %v764 = vadd.f32 %v763, 1.0
      %v765 = vrcp.pop %v764
      %v766 = vmul.f32 1.0, %v765
      %v767 = vtanh.pop %v758
      %768 = vrot.lane.b32.xlu0 %v653, 32
      %v769 = vpop.permute.xlu0 %768
      %v771 = vsub.f32 %v767, %v769
      %773 = vrot.lane.b32.xlu0 %v771, 96
      %v774 = vpop.permute.xlu0 %773
      %v776 = vmul.f32 %v766, %v774
      %v777 = vadd.f32 %v653, %v776
      %v778 = vadd.f32 %v683, %v777
      %v779 = vld [vmem:[%s6] sm:$0xff]
      %v780 = vld [vmem:[%s6 + $0x8] sm:$0xff]
      %v781 = vld [vmem:[%s6 + $0x10] sm:$0xff]
      %v782 = vld [vmem:[%s6 + $0x18] sm:$0xff]
      %v784 = vsel %vm370, %v668, 0
      %786 = vmatprep.subr.mxu0 0.0
      %787 = vmatpush1.msra.mxu0 %v779
      %788 = vmatprep.subr.mxu0 0.0
      %789 = vmatpush1.msra.mxu0 %v780
      %790 = vmatprep.subr.mxu0 0.0
      %791 = vmatpush1.msra.mxu0 %v781
      %792 = vmatprep.subr.mxu0 0.0
      %793 = vmatpush1.msra.mxu0 %v782
      %794 = vmatprep.subr.mxu0 0.0
      %795 = vmatpush1.msra.mxu0 0.0
      %796 = vmatprep.subr.mxu0 0.0
      %797 = vmatpush1.msra.mxu0 0.0
      %798 = vmatprep.subr.mxu0 0.0
      %799 = vmatpush1.msra.mxu0 0.0
      %800 = vmatprep.subr.mxu0 0.0
      %801 = vmatpush1.msra.mxu0 0.0
      %802 = vmatprep.subr.mxu0 0.0
      %803 = vmatpush1.msra.mxu0 0.0
      %804 = vmatprep.subr.mxu0 0.0
      %805 = vmatpush1.msra.mxu0 0.0
      %806 = vmatprep.subr.mxu0 0.0
      %807 = vmatpush1.msra.mxu0 0.0
      %808 = vmatprep.subr.mxu0 0.0
      %809 = vmatpush1.msra.mxu0 0.0
      %810 = vmatprep.subr.mxu0 0.0
      %811 = vmatpush1.msra.mxu0 0.0
      %812 = vmatprep.subr.mxu0 0.0
      %813 = vmatpush1.msra.mxu0 0.0
      %814 = vmatprep.subr.mxu0 0.0
      %815 = vmatpush1.msra.mxu0 0.0
      %816 = vmatprep.subr.mxu0 0.0
      %817 = vmatpush1.msra.mxu0 0.0
      %818 = vmatprep.subr.mxu0 0.0
      %819 = vmatpush1.msra.mxu0 0.0
      %820 = vmatprep.subr.mxu0 0.0
      %821 = vmatpush1.msra.mxu0 0.0
      %822 = vmatprep.subr.mxu0 0.0
      %823 = vmatpush1.msra.mxu0 0.0
      %824 = vmatprep.subr.mxu0 0.0
      %825 = vmatpush1.msra.mxu0 0.0
      %826 = vmatprep.subr.mxu0 0.0
      %827 = vmatpush1.msra.mxu0 0.0
      %828 = vmatprep.subr.mxu0 0.0
      %829 = vmatpush1.msra.mxu0 0.0
      %830 = vmatprep.subr.mxu0 0.0
      %831 = vmatpush1.msra.mxu0 0.0
      %832 = vmatprep.subr.mxu0 0.0
      %833 = vmatpush1.msra.mxu0 0.0
      %834 = vmatprep.subr.mxu0 0.0
      %835 = vmatpush1.msra.mxu0 0.0
      %836 = vmatprep.subr.mxu0 0.0
      %837 = vmatpush1.msra.mxu0 0.0
      %838 = vmatprep.subr.mxu0 0.0
      %839 = vmatpush1.msra.mxu0 0.0
      %840 = vmatprep.subr.mxu0 0.0
      %841 = vmatpush1.msra.mxu0 0.0
      %842 = vmatprep.subr.mxu0 0.0
      %843 = vmatpush1.msra.mxu0 0.0
      %844 = vmatprep.subr.mxu0 0.0
      %845 = vmatpush1.msra.mxu0 0.0
      %846 = vmatprep.subr.mxu0 0.0
      %847 = vmatpush1.msra.mxu0 0.0
      %848 = vmatprep.subr.mxu0 0.0
      %849 = vmatpush1.msra.mxu0 0.0
      %850 = vmatprep.mubr.f32.mxu0 0.0
      %851 = vmatmul.mubr.f32.gmra.mrb[0].mxu0 %v784
      %v852 = vpop.f32.mrb[0].mxu0
      %v853 = vadd.f32 0.0, %v852
      %v854 = vpop.f32.mrb[0].mxu0
      %855 = vdwg.mxu0
      %v856 = vxor.u32 %v853, 2147483648
      %v857 = vmul.f32 %v856, 1.442695
      %v858 = vpow.pop %v857
      %v859 = vadd.f32 %v858, 1.0
      %v860 = vrcp.pop %v859
      %v861 = vmul.f32 1.0, %v860
      %v862 = vtanh.pop %v853
      %863 = vrot.lane.b32.xlu0 %v668, 32
      %v864 = vpop.permute.xlu0 %863
      %v866 = vsub.f32 %v862, %v864
      %868 = vrot.lane.b32.xlu0 %v866, 96
      %v869 = vpop.permute.xlu0 %868
      %v871 = vmul.f32 %v861, %v869
      %v872 = vadd.f32 %v668, %v871
      %v873 = vadd.f32 %v778, %v872
      %v874 = vld [vmem:[%s7] sm:$0xff]
      %v875 = vld [vmem:[%s7 + $0x8] sm:$0xff]
      %v876 = vld [vmem:[%s7 + $0x10] sm:$0xff]
      %v877 = vld [vmem:[%s7 + $0x18] sm:$0xff]
      %v879 = vsel %vm370, %v777, 0
      %881 = vmatprep.subr.mxu0 0.0
      %882 = vmatpush1.msra.mxu0 %v874
      %883 = vmatprep.subr.mxu0 0.0
      %884 = vmatpush1.msra.mxu0 %v875
      %885 = vmatprep.subr.mxu0 0.0
      %886 = vmatpush1.msra.mxu0 %v876
      %887 = vmatprep.subr.mxu0 0.0
      %888 = vmatpush1.msra.mxu0 %v877
      %889 = vmatprep.subr.mxu0 0.0
      %890 = vmatpush1.msra.mxu0 0.0
      %891 = vmatprep.subr.mxu0 0.0
      %892 = vmatpush1.msra.mxu0 0.0
      %893 = vmatprep.subr.mxu0 0.0
      %894 = vmatpush1.msra.mxu0 0.0
      %895 = vmatprep.subr.mxu0 0.0
      %896 = vmatpush1.msra.mxu0 0.0
      %897 = vmatprep.subr.mxu0 0.0
      %898 = vmatpush1.msra.mxu0 0.0
      %899 = vmatprep.subr.mxu0 0.0
      %900 = vmatpush1.msra.mxu0 0.0
      %901 = vmatprep.subr.mxu0 0.0
      %902 = vmatpush1.msra.mxu0 0.0
      %903 = vmatprep.subr.mxu0 0.0
      %904 = vmatpush1.msra.mxu0 0.0
      %905 = vmatprep.subr.mxu0 0.0
      %906 = vmatpush1.msra.mxu0 0.0
      %907 = vmatprep.subr.mxu0 0.0
      %908 = vmatpush1.msra.mxu0 0.0
      %909 = vmatprep.subr.mxu0 0.0
      %910 = vmatpush1.msra.mxu0 0.0
      %911 = vmatprep.subr.mxu0 0.0
      %912 = vmatpush1.msra.mxu0 0.0
      %913 = vmatprep.subr.mxu0 0.0
      %914 = vmatpush1.msra.mxu0 0.0
      %915 = vmatprep.subr.mxu0 0.0
      %916 = vmatpush1.msra.mxu0 0.0
      %917 = vmatprep.subr.mxu0 0.0
      %918 = vmatpush1.msra.mxu0 0.0
      %919 = vmatprep.subr.mxu0 0.0
      %920 = vmatpush1.msra.mxu0 0.0
      %921 = vmatprep.subr.mxu0 0.0
      %922 = vmatpush1.msra.mxu0 0.0
      %923 = vmatprep.subr.mxu0 0.0
      %924 = vmatpush1.msra.mxu0 0.0
      %925 = vmatprep.subr.mxu0 0.0
      %926 = vmatpush1.msra.mxu0 0.0
      %927 = vmatprep.subr.mxu0 0.0
      %928 = vmatpush1.msra.mxu0 0.0
      %929 = vmatprep.subr.mxu0 0.0
      %930 = vmatpush1.msra.mxu0 0.0
      %931 = vmatprep.subr.mxu0 0.0
      %932 = vmatpush1.msra.mxu0 0.0
      %933 = vmatprep.subr.mxu0 0.0
      %934 = vmatpush1.msra.mxu0 0.0
      %935 = vmatprep.subr.mxu0 0.0
      %936 = vmatpush1.msra.mxu0 0.0
      %937 = vmatprep.subr.mxu0 0.0
      %938 = vmatpush1.msra.mxu0 0.0
      %939 = vmatprep.subr.mxu0 0.0
      %940 = vmatpush1.msra.mxu0 0.0
      %941 = vmatprep.subr.mxu0 0.0
      %942 = vmatpush1.msra.mxu0 0.0
      %943 = vmatprep.subr.mxu0 0.0
      %944 = vmatpush1.msra.mxu0 0.0
      %945 = vmatprep.mubr.f32.mxu0 0.0
      %946 = vmatmul.mubr.f32.gmra.mrb[0].mxu0 %v879
      %v947 = vpop.f32.mrb[0].mxu0
      %v948 = vadd.f32 0.0, %v947
      %v949 = vpop.f32.mrb[0].mxu0
      %950 = vdwg.mxu0
      %v951 = vxor.u32 %v948, 2147483648
      %v952 = vmul.f32 %v951, 1.442695
      %v953 = vpow.pop %v952
      %v954 = vadd.f32 %v953, 1.0
      %v955 = vrcp.pop %v954
      %v956 = vmul.f32 1.0, %v955
      %957 = vrot.lane.b32.xlu0 %v777, 32
      %v958 = vpop.permute.xlu0 %957
      %v960 = vsub.f32 %v956, %v958
      %962 = vrot.lane.b32.xlu0 %v960, 96
      %v963 = vpop.permute.xlu0 %962
      %v965 = vmul.f32 %v956, %v963
      %v966 = vadd.f32 %v777, %v965
      %v967 = vadd.f32 %v873, %v966
      %v968 = vmax.f32 %v948, 0.0
      %969 = vrot.lane.b32.xlu0 %v777, 96
      %v970 = vpop.permute.xlu0 %969
      %v972 = vsub.f32 %v968, %v970
      %974 = vrot.lane.b32.xlu0 %v972, 96
      %v975 = vpop.permute.xlu0 %974
      %v977 = vmul.f32 %v956, %v975
      %979 = vrot.lane.b32.xlu0 %v977, 64
      %v980 = vpop.permute.xlu0 %979
      %v982 = vadd.f32 %v777, %v980
      %v983 = vadd.f32 %v967, %v982
      %v984 = vmul.f32 %v983, 0.125
      %vm985 = vcmask 254976
      %986 = vst.msk [vmem:[%s355] sm:$0x3] %vm985, %v984
      %s987 = scalar_lea.vmem %s342, 2
      %v988 = vld [vmem:[%s987] sm:$0x3]
      %v989 = vld [vmem:[%s2] sm:$0xff]
      %v990 = vld [vmem:[%s2 + $0x8] sm:$0xff]
      %v991 = vld [vmem:[%s2 + $0x10] sm:$0xff]
      %v992 = vld [vmem:[%s2 + $0x18] sm:$0xff]
      %v994 = vsel %vm370, %v984, 0
      %996 = vmatprep.subr.mxu0 0.0
      %997 = vmatpush1.msra.mxu0 %v989
      %998 = vmatprep.subr.mxu0 0.0
      %999 = vmatpush1.msra.mxu0 %v990
      %1000 = vmatprep.subr.mxu0 0.0
      %1001 = vmatpush1.msra.mxu0 %v991
      %1002 = vmatprep.subr.mxu0 0.0
      %1003 = vmatpush1.msra.mxu0 %v992
      %1004 = vmatprep.subr.mxu0 0.0
      %1005 = vmatpush1.msra.mxu0 0.0
      %1006 = vmatprep.subr.mxu0 0.0
      %1007 = vmatpush1.msra.mxu0 0.0
      %1008 = vmatprep.subr.mxu0 0.0
      %1009 = vmatpush1.msra.mxu0 0.0
      %1010 = vmatprep.subr.mxu0 0.0
      %1011 = vmatpush1.msra.mxu0 0.0
      %1012 = vmatprep.subr.mxu0 0.0
      %1013 = vmatpush1.msra.mxu0 0.0
      %1014 = vmatprep.subr.mxu0 0.0
      %1015 = vmatpush1.msra.mxu0 0.0
      %1016 = vmatprep.subr.mxu0 0.0
      %1017 = vmatpush1.msra.mxu0 0.0
      %1018 = vmatprep.subr.mxu0 0.0
      %1019 = vmatpush1.msra.mxu0 0.0
      %1020 = vmatprep.subr.mxu0 0.0
      %1021 = vmatpush1.msra.mxu0 0.0
      %1022 = vmatprep.subr.mxu0 0.0
      %1023 = vmatpush1.msra.mxu0 0.0
      %1024 = vmatprep.subr.mxu0 0.0
      %1025 = vmatpush1.msra.mxu0 0.0
      %1026 = vmatprep.subr.mxu0 0.0
      %1027 = vmatpush1.msra.mxu0 0.0
      %1028 = vmatprep.subr.mxu0 0.0
      %1029 = vmatpush1.msra.mxu0 0.0
      %1030 = vmatprep.subr.mxu0 0.0
      %1031 = vmatpush1.msra.mxu0 0.0
      %1032 = vmatprep.subr.mxu0 0.0
      %1033 = vmatpush1.msra.mxu0 0.0
      %1034 = vmatprep.subr.mxu0 0.0
      %1035 = vmatpush1.msra.mxu0 0.0
      %1036 = vmatprep.subr.mxu0 0.0
      %1037 = vmatpush1.msra.mxu0 0.0
      %1038 = vmatprep.subr.mxu0 0.0
      %1039 = vmatpush1.msra.mxu0 0.0
      %1040 = vmatprep.subr.mxu0 0.0
      %1041 = vmatpush1.msra.mxu0 0.0
      %1042 = vmatprep.subr.mxu0 0.0
      %1043 = vmatpush1.msra.mxu0 0.0
      %1044 = vmatprep.subr.mxu0 0.0
      %1045 = vmatpush1.msra.mxu0 0.0
      %1046 = vmatprep.subr.mxu0 0.0
      %1047 = vmatpush1.msra.mxu0 0.0
      %1048 = vmatprep.subr.mxu0 0.0
      %1049 = vmatpush1.msra.mxu0 0.0
      %1050 = vmatprep.subr.mxu0 0.0
      %1051 = vmatpush1.msra.mxu0 0.0
      %1052 = vmatprep.subr.mxu0 0.0
      %1053 = vmatpush1.msra.mxu0 0.0
      %1054 = vmatprep.subr.mxu0 0.0
      %1055 = vmatpush1.msra.mxu0 0.0
      %1056 = vmatprep.subr.mxu0 0.0
      %1057 = vmatpush1.msra.mxu0 0.0
      %1058 = vmatprep.subr.mxu0 0.0
      %1059 = vmatpush1.msra.mxu0 0.0
      %1060 = vmatprep.mubr.f32.mxu0 0.0
      %1061 = vmatmul.mubr.f32.gmra.mrb[0].mxu0 %v994
      %v1062 = vpop.f32.mrb[0].mxu0
      %v1063 = vadd.f32 0.0, %v1062
      %v1064 = vpop.f32.mrb[0].mxu0
      %1065 = vdwg.mxu0
      %v1066 = vadd.f32 %v988, %v1063
      %v1067 = vxor.u32 %v1066, 2147483648
      %v1068 = vmul.f32 %v1067, 1.442695
      %v1069 = vpow.pop %v1068
      %v1070 = vadd.f32 %v1069, 1.0
      %v1071 = vrcp.pop %v1070
      %v1072 = vmul.f32 1.0, %v1071
      %v1073 = vtanh.pop %v1066
      %1074 = vrot.lane.b32.xlu0 %v984, 32
      %v1075 = vpop.permute.xlu0 %1074
      %v1077 = vsub.f32 %v1073, %v1075
      %1079 = vrot.lane.b32.xlu0 %v1077, 96
      %v1080 = vpop.permute.xlu0 %1079
      %v1082 = vmul.f32 %v1072, %v1080
      %v1083 = vadd.f32 %v984, %v1082
      %v1084 = vld [vmem:[%s3] sm:$0xff]
      %v1085 = vld [vmem:[%s3 + $0x8] sm:$0xff]
      %v1086 = vld [vmem:[%s3 + $0x10] sm:$0xff]
      %v1087 = vld [vmem:[%s3 + $0x18] sm:$0xff]
      %v1089 = vsel %vm370, %v1083, 0
      %1091 = vmatprep.subr.mxu0 0.0
      %1092 = vmatpush1.msra.mxu0 %v1084
      %1093 = vmatprep.subr.mxu0 0.0
      %1094 = vmatpush1.msra.mxu0 %v1085
      %1095 = vmatprep.subr.mxu0 0.0
      %1096 = vmatpush1.msra.mxu0 %v1086
      %1097 = vmatprep.subr.mxu0 0.0
      %1098 = vmatpush1.msra.mxu0 %v1087
      %1099 = vmatprep.subr.mxu0 0.0
      %1100 = vmatpush1.msra.mxu0 0.0
      %1101 = vmatprep.subr.mxu0 0.0
      %1102 = vmatpush1.msra.mxu0 0.0
      %1103 = vmatprep.subr.mxu0 0.0
      %1104 = vmatpush1.msra.mxu0 0.0
      %1105 = vmatprep.subr.mxu0 0.0
      %1106 = vmatpush1.msra.mxu0 0.0
      %1107 = vmatprep.subr.mxu0 0.0
      %1108 = vmatpush1.msra.mxu0 0.0
      %1109 = vmatprep.subr.mxu0 0.0
      %1110 = vmatpush1.msra.mxu0 0.0
      %1111 = vmatprep.subr.mxu0 0.0
      %1112 = vmatpush1.msra.mxu0 0.0
      %1113 = vmatprep.subr.mxu0 0.0
      %1114 = vmatpush1.msra.mxu0 0.0
      %1115 = vmatprep.subr.mxu0 0.0
      %1116 = vmatpush1.msra.mxu0 0.0
      %1117 = vmatprep.subr.mxu0 0.0
      %1118 = vmatpush1.msra.mxu0 0.0
      %1119 = vmatprep.subr.mxu0 0.0
      %1120 = vmatpush1.msra.mxu0 0.0
      %1121 = vmatprep.subr.mxu0 0.0
      %1122 = vmatpush1.msra.mxu0 0.0
      %1123 = vmatprep.subr.mxu0 0.0
      %1124 = vmatpush1.msra.mxu0 0.0
      %1125 = vmatprep.subr.mxu0 0.0
      %1126 = vmatpush1.msra.mxu0 0.0
      %1127 = vmatprep.subr.mxu0 0.0
      %1128 = vmatpush1.msra.mxu0 0.0
      %1129 = vmatprep.subr.mxu0 0.0
      %1130 = vmatpush1.msra.mxu0 0.0
      %1131 = vmatprep.subr.mxu0 0.0
      %1132 = vmatpush1.msra.mxu0 0.0
      %1133 = vmatprep.subr.mxu0 0.0
      %1134 = vmatpush1.msra.mxu0 0.0
      %1135 = vmatprep.subr.mxu0 0.0
      %1136 = vmatpush1.msra.mxu0 0.0
      %1137 = vmatprep.subr.mxu0 0.0
      %1138 = vmatpush1.msra.mxu0 0.0
      %1139 = vmatprep.subr.mxu0 0.0
      %1140 = vmatpush1.msra.mxu0 0.0
      %1141 = vmatprep.subr.mxu0 0.0
      %1142 = vmatpush1.msra.mxu0 0.0
      %1143 = vmatprep.subr.mxu0 0.0
      %1144 = vmatpush1.msra.mxu0 0.0
      %1145 = vmatprep.subr.mxu0 0.0
      %1146 = vmatpush1.msra.mxu0 0.0
      %1147 = vmatprep.subr.mxu0 0.0
      %1148 = vmatpush1.msra.mxu0 0.0
      %1149 = vmatprep.subr.mxu0 0.0
      %1150 = vmatpush1.msra.mxu0 0.0
      %1151 = vmatprep.subr.mxu0 0.0
      %1152 = vmatpush1.msra.mxu0 0.0
      %1153 = vmatprep.subr.mxu0 0.0
      %1154 = vmatpush1.msra.mxu0 0.0
      %1155 = vmatprep.mubr.f32.mxu0 0.0
      %1156 = vmatmul.mubr.f32.gmra.mrb[0].mxu0 %v1089
      %v1157 = vpop.f32.mrb[0].mxu0
      %v1158 = vadd.f32 0.0, %v1157
      %v1159 = vpop.f32.mrb[0].mxu0
      %1160 = vdwg.mxu0
      %v1161 = vxor.u32 %v1158, 2147483648
      %v1162 = vmul.f32 %v1161, 1.442695
      %v1163 = vpow.pop %v1162
      %v1164 = vadd.f32 %v1163, 1.0
      %v1165 = vrcp.pop %v1164
      %v1166 = vmul.f32 1.0, %v1165
      %1167 = vrot.lane.b32.xlu0 %v1083, 32
      %v1168 = vpop.permute.xlu0 %1167
      %v1170 = vsub.f32 %v1166, %v1168
      %1172 = vrot.lane.b32.xlu0 %v1170, 96
      %v1173 = vpop.permute.xlu0 %1172
      %v1175 = vmul.f32 %v1166, %v1173
      %v1176 = vadd.f32 %v1083, %v1175
      %v1177 = vld [vmem:[%s4] sm:$0xff]
      %v1178 = vld [vmem:[%s4 + $0x8] sm:$0xff]
      %v1179 = vld [vmem:[%s4 + $0x10] sm:$0xff]
      %v1180 = vld [vmem:[%s4 + $0x18] sm:$0xff]
      %v1181 = vld [vmem:[%s4 + $0x20] sm:$0xff]
      %v1182 = vld [vmem:[%s4 + $0x28] sm:$0xff]
      %v1183 = vld [vmem:[%s4 + $0x30] sm:$0xff]
      %v1184 = vld [vmem:[%s4 + $0x38] sm:$0xff]
      %v1186 = vsel %vm370, %v1176, 0
      %1188 = vmatprep.subr.mxu0 %v1178
      %1189 = vmatpush1.msra.mxu0 %v1177
      %1190 = vmatprep.subr.mxu0 %v1180
      %1191 = vmatpush1.msra.mxu0 %v1179
      %1192 = vmatprep.subr.mxu0 %v1182
      %1193 = vmatpush1.msra.mxu0 %v1181
      %1194 = vmatprep.subr.mxu0 %v1184
      %1195 = vmatpush1.msra.mxu0 %v1183
      %1196 = vmatprep.subr.mxu0 0.0
      %1197 = vmatpush1.msra.mxu0 0.0
      %1198 = vmatprep.subr.mxu0 0.0
      %1199 = vmatpush1.msra.mxu0 0.0
      %1200 = vmatprep.subr.mxu0 0.0
      %1201 = vmatpush1.msra.mxu0 0.0
      %1202 = vmatprep.subr.mxu0 0.0
      %1203 = vmatpush1.msra.mxu0 0.0
      %1204 = vmatprep.subr.mxu0 0.0
      %1205 = vmatpush1.msra.mxu0 0.0
      %1206 = vmatprep.subr.mxu0 0.0
      %1207 = vmatpush1.msra.mxu0 0.0
      %1208 = vmatprep.subr.mxu0 0.0
      %1209 = vmatpush1.msra.mxu0 0.0
      %1210 = vmatprep.subr.mxu0 0.0
      %1211 = vmatpush1.msra.mxu0 0.0
      %1212 = vmatprep.subr.mxu0 0.0
      %1213 = vmatpush1.msra.mxu0 0.0
      %1214 = vmatprep.subr.mxu0 0.0
      %1215 = vmatpush1.msra.mxu0 0.0
      %1216 = vmatprep.subr.mxu0 0.0
      %1217 = vmatpush1.msra.mxu0 0.0
      %1218 = vmatprep.subr.mxu0 0.0
      %1219 = vmatpush1.msra.mxu0 0.0
      %1220 = vmatprep.subr.mxu0 0.0
      %1221 = vmatpush1.msra.mxu0 0.0
      %1222 = vmatprep.subr.mxu0 0.0
      %1223 = vmatpush1.msra.mxu0 0.0
      %1224 = vmatprep.subr.mxu0 0.0
      %1225 = vmatpush1.msra.mxu0 0.0
      %1226 = vmatprep.subr.mxu0 0.0
      %1227 = vmatpush1.msra.mxu0 0.0
      %1228 = vmatprep.subr.mxu0 0.0
      %1229 = vmatpush1.msra.mxu0 0.0
      %1230 = vmatprep.subr.mxu0 0.0
      %1231 = vmatpush1.msra.mxu0 0.0
      %1232 = vmatprep.subr.mxu0 0.0
      %1233 = vmatpush1.msra.mxu0 0.0
      %1234 = vmatprep.subr.mxu0 0.0
      %1235 = vmatpush1.msra.mxu0 0.0
      %1236 = vmatprep.subr.mxu0 0.0
      %1237 = vmatpush1.msra.mxu0 0.0
      %1238 = vmatprep.subr.mxu0 0.0
      %1239 = vmatpush1.msra.mxu0 0.0
      %1240 = vmatprep.subr.mxu0 0.0
      %1241 = vmatpush1.msra.mxu0 0.0
      %1242 = vmatprep.subr.mxu0 0.0
      %1243 = vmatpush1.msra.mxu0 0.0
      %1244 = vmatprep.subr.mxu0 0.0
      %1245 = vmatpush1.msra.mxu0 0.0
      %1246 = vmatprep.subr.mxu0 0.0
      %1247 = vmatpush1.msra.mxu0 0.0
      %1248 = vmatprep.subr.mxu0 0.0
      %1249 = vmatpush1.msra.mxu0 0.0
      %1250 = vmatprep.subr.mxu0 0.0
      %1251 = vmatpush1.msra.mxu0 0.0
      %1252 = vmatprep.mubr.f32.mxu0 0.0
      %1253 = vmatmul.mubr.f32.gmra.mrb[0].mxu0 %v1186
      %v1254 = vpop.f32.mrb[0].mxu0
      %v1255 = vadd.f32 0.0, %v1254
      %v1256 = vpop.f32.mrb[0].mxu0
      %v1257 = vadd.f32 0.0, %v1256
      %1258 = vdwg.mxu0
      %v1259 = vxor.u32 %v1255, 2147483648
      %v1260 = vmul.f32 %v1259, 1.442695
      %v1261 = vpow.pop %v1260
      %v1262 = vadd.f32 %v1261, 1.0
      %v1263 = vrcp.pop %v1262
      %v1264 = vmul.f32 1.0, %v1263
      %v1265 = vmax.f32 %v1255, 0.0
      %1266 = vrot.lane.b32.xlu0 %v1176, 32
      %v1267 = vpop.permute.xlu0 %1266
      %v1269 = vsub.f32 %v1265, %v1267
      %1271 = vrot.lane.b32.xlu0 %v1269, 96
      %v1272 = vpop.permute.xlu0 %1271
      %v1274 = vmul.f32 %v1264, %v1272
      %v1275 = vadd.f32 %v1176, %v1274
      %v1276 = vadd.f32 %v1176, %v1275
      %1277 = vrot.lane.b32.xlu0 %v1176, 96
      %v1278 = vpop.permute.xlu0 %1277
      %v1280 = vsub.f32 %v1265, %v1278
      %1282 = vrot.lane.b32.xlu0 %v1280, 96
      %v1283 = vpop.permute.xlu0 %1282
      %v1285 = vmul.f32 %v1264, %v1283
      %1287 = vrot.lane.b32.xlu0 %v1285, 64
      %v1288 = vpop.permute.xlu0 %1287
      %v1290 = vadd.f32 %v1176, %v1288
      %v1291 = vadd.f32 %v1276, %v1290
      %v1292 = vxor.u32 %v1257, 2147483648
      %v1293 = vmul.f32 %v1292, 1.442695
      %v1294 = vpow.pop %v1293
      %v1295 = vadd.f32 %v1294, 1.0
      %v1296 = vrcp.pop %v1295
      %v1297 = vmul.f32 1.0, %v1296
      %v1298 = vsub.f32 %v1257, %v1267
      %1300 = vrot.lane.b32.xlu0 %v1298, 96
      %v1301 = vpop.permute.xlu0 %1300
      %v1303 = vmul.f32 %v1297, %v1301
      %v1304 = vadd.f32 %v1176, %v1303
      %v1305 = vadd.f32 %v1291, %v1304
      %v1306 = vld [vmem:[%s5] sm:$0xff]
      %v1307 = vld [vmem:[%s5 + $0x8] sm:$0xff]
      %v1308 = vld [vmem:[%s5 + $0x10] sm:$0xff]
      %v1309 = vld [vmem:[%s5 + $0x18] sm:$0xff]
      %v1311 = vsel %vm370, %v1275, 0
      %1313 = vmatprep.subr.mxu0 0.0
      %1314 = vmatpush1.msra.mxu0 %v1306
      %1315 = vmatprep.subr.mxu0 0.0
      %1316 = vmatpush1.msra.mxu0 %v1307
      %1317 = vmatprep.subr.mxu0 0.0
      %1318 = vmatpush1.msra.mxu0 %v1308
      %1319 = vmatprep.subr.mxu0 0.0
      %1320 = vmatpush1.msra.mxu0 %v1309
      %1321 = vmatprep.subr.mxu0 0.0
      %1322 = vmatpush1.msra.mxu0 0.0
      %1323 = vmatprep.subr.mxu0 0.0
      %1324 = vmatpush1.msra.mxu0 0.0
      %1325 = vmatprep.subr.mxu0 0.0
      %1326 = vmatpush1.msra.mxu0 0.0
      %1327 = vmatprep.subr.mxu0 0.0
      %1328 = vmatpush1.msra.mxu0 0.0
      %1329 = vmatprep.subr.mxu0 0.0
      %1330 = vmatpush1.msra.mxu0 0.0
      %1331 = vmatprep.subr.mxu0 0.0
      %1332 = vmatpush1.msra.mxu0 0.0
      %1333 = vmatprep.subr.mxu0 0.0
      %1334 = vmatpush1.msra.mxu0 0.0
      %1335 = vmatprep.subr.mxu0 0.0
      %1336 = vmatpush1.msra.mxu0 0.0
      %1337 = vmatprep.subr.mxu0 0.0
      %1338 = vmatpush1.msra.mxu0 0.0
      %1339 = vmatprep.subr.mxu0 0.0
      %1340 = vmatpush1.msra.mxu0 0.0
      %1341 = vmatprep.subr.mxu0 0.0
      %1342 = vmatpush1.msra.mxu0 0.0
      %1343 = vmatprep.subr.mxu0 0.0
      %1344 = vmatpush1.msra.mxu0 0.0
      %1345 = vmatprep.subr.mxu0 0.0
      %1346 = vmatpush1.msra.mxu0 0.0
      %1347 = vmatprep.subr.mxu0 0.0
      %1348 = vmatpush1.msra.mxu0 0.0
      %1349 = vmatprep.subr.mxu0 0.0
      %1350 = vmatpush1.msra.mxu0 0.0
      %1351 = vmatprep.subr.mxu0 0.0
      %1352 = vmatpush1.msra.mxu0 0.0
      %1353 = vmatprep.subr.mxu0 0.0
      %1354 = vmatpush1.msra.mxu0 0.0
      %1355 = vmatprep.subr.mxu0 0.0
      %1356 = vmatpush1.msra.mxu0 0.0
      %1357 = vmatprep.subr.mxu0 0.0
      %1358 = vmatpush1.msra.mxu0 0.0
      %1359 = vmatprep.subr.mxu0 0.0
      %1360 = vmatpush1.msra.mxu0 0.0
      %1361 = vmatprep.subr.mxu0 0.0
      %1362 = vmatpush1.msra.mxu0 0.0
      %1363 = vmatprep.subr.mxu0 0.0
      %1364 = vmatpush1.msra.mxu0 0.0
      %1365 = vmatprep.subr.mxu0 0.0
      %1366 = vmatpush1.msra.mxu0 0.0
      %1367 = vmatprep.subr.mxu0 0.0
      %1368 = vmatpush1.msra.mxu0 0.0
      %1369 = vmatprep.subr.mxu0 0.0
      %1370 = vmatpush1.msra.mxu0 0.0
      %1371 = vmatprep.subr.mxu0 0.0
      %1372 = vmatpush1.msra.mxu0 0.0
      %1373 = vmatprep.subr.mxu0 0.0
      %1374 = vmatpush1.msra.mxu0 0.0
      %1375 = vmatprep.subr.mxu0 0.0
      %1376 = vmatpush1.msra.mxu0 0.0
      %1377 = vmatprep.mubr.f32.mxu0 0.0
      %1378 = vmatmul.mubr.f32.gmra.mrb[0].mxu0 %v1311
      %v1379 = vpop.f32.mrb[0].mxu0
      %v1380 = vadd.f32 0.0, %v1379
      %v1381 = vpop.f32.mrb[0].mxu0
      %1382 = vdwg.mxu0
      %v1383 = vxor.u32 %v1380, 2147483648
      %v1384 = vmul.f32 %v1383, 1.442695
      %v1385 = vpow.pop %v1384
      %v1386 = vadd.f32 %v1385, 1.0
      %v1387 = vrcp.pop %v1386
      %v1388 = vmul.f32 1.0, %v1387
      %v1389 = vtanh.pop %v1380
      %1390 = vrot.lane.b32.xlu0 %v1275, 32
      %v1391 = vpop.permute.xlu0 %1390
      %v1393 = vsub.f32 %v1389, %v1391
      %1395 = vrot.lane.b32.xlu0 %v1393, 96
      %v1396 = vpop.permute.xlu0 %1395
      %v1398 = vmul.f32 %v1388, %v1396
      %v1399 = vadd.f32 %v1275, %v1398
      %v1400 = vadd.f32 %v1305, %v1399
      %v1401 = vld [vmem:[%s6] sm:$0xff]
      %v1402 = vld [vmem:[%s6 + $0x8] sm:$0xff]
      %v1403 = vld [vmem:[%s6 + $0x10] sm:$0xff]
      %v1404 = vld [vmem:[%s6 + $0x18] sm:$0xff]
      %v1406 = vsel %vm370, %v1290, 0
      %1408 = vmatprep.subr.mxu0 0.0
      %1409 = vmatpush1.msra.mxu0 %v1401
      %1410 = vmatprep.subr.mxu0 0.0
      %1411 = vmatpush1.msra.mxu0 %v1402
      %1412 = vmatprep.subr.mxu0 0.0
      %1413 = vmatpush1.msra.mxu0 %v1403
      %1414 = vmatprep.subr.mxu0 0.0
      %1415 = vmatpush1.msra.mxu0 %v1404
      %1416 = vmatprep.subr.mxu0 0.0
      %1417 = vmatpush1.msra.mxu0 0.0
      %1418 = vmatprep.subr.mxu0 0.0
      %1419 = vmatpush1.msra.mxu0 0.0
      %1420 = vmatprep.subr.mxu0 0.0
      %1421 = vmatpush1.msra.mxu0 0.0
      %1422 = vmatprep.subr.mxu0 0.0
      %1423 = vmatpush1.msra.mxu0 0.0
      %1424 = vmatprep.subr.mxu0 0.0
      %1425 = vmatpush1.msra.mxu0 0.0
      %1426 = vmatprep.subr.mxu0 0.0
      %1427 = vmatpush1.msra.mxu0 0.0
      %1428 = vmatprep.subr.mxu0 0.0
      %1429 = vmatpush1.msra.mxu0 0.0
      %1430 = vmatprep.subr.mxu0 0.0
      %1431 = vmatpush1.msra.mxu0 0.0
      %1432 = vmatprep.subr.mxu0 0.0
      %1433 = vmatpush1.msra.mxu0 0.0
      %1434 = vmatprep.subr.mxu0 0.0
      %1435 = vmatpush1.msra.mxu0 0.0
      %1436 = vmatprep.subr.mxu0 0.0
      %1437 = vmatpush1.msra.mxu0 0.0
      %1438 = vmatprep.subr.mxu0 0.0
      %1439 = vmatpush1.msra.mxu0 0.0
      %1440 = vmatprep.subr.mxu0 0.0
      %1441 = vmatpush1.msra.mxu0 0.0
      %1442 = vmatprep.subr.mxu0 0.0
      %1443 = vmatpush1.msra.mxu0 0.0
      %1444 = vmatprep.subr.mxu0 0.0
      %1445 = vmatpush1.msra.mxu0 0.0
      %1446 = vmatprep.subr.mxu0 0.0
      %1447 = vmatpush1.msra.mxu0 0.0
      %1448 = vmatprep.subr.mxu0 0.0
      %1449 = vmatpush1.msra.mxu0 0.0
      %1450 = vmatprep.subr.mxu0 0.0
      %1451 = vmatpush1.msra.mxu0 0.0
      %1452 = vmatprep.subr.mxu0 0.0
      %1453 = vmatpush1.msra.mxu0 0.0
      %1454 = vmatprep.subr.mxu0 0.0
      %1455 = vmatpush1.msra.mxu0 0.0
      %1456 = vmatprep.subr.mxu0 0.0
      %1457 = vmatpush1.msra.mxu0 0.0
      %1458 = vmatprep.subr.mxu0 0.0
      %1459 = vmatpush1.msra.mxu0 0.0
      %1460 = vmatprep.subr.mxu0 0.0
      %1461 = vmatpush1.msra.mxu0 0.0
      %1462 = vmatprep.subr.mxu0 0.0
      %1463 = vmatpush1.msra.mxu0 0.0
      %1464 = vmatprep.subr.mxu0 0.0
      %1465 = vmatpush1.msra.mxu0 0.0
      %1466 = vmatprep.subr.mxu0 0.0
      %1467 = vmatpush1.msra.mxu0 0.0
      %1468 = vmatprep.subr.mxu0 0.0
      %1469 = vmatpush1.msra.mxu0 0.0
      %1470 = vmatprep.subr.mxu0 0.0
      %1471 = vmatpush1.msra.mxu0 0.0
      %1472 = vmatprep.mubr.f32.mxu0 0.0
      %1473 = vmatmul.mubr.f32.gmra.mrb[0].mxu0 %v1406
      %v1474 = vpop.f32.mrb[0].mxu0
      %v1475 = vadd.f32 0.0, %v1474
      %v1476 = vpop.f32.mrb[0].mxu0
      %1477 = vdwg.mxu0
      %v1478 = vxor.u32 %v1475, 2147483648
      %v1479 = vmul.f32 %v1478, 1.442695
      %v1480 = vpow.pop %v1479
      %v1481 = vadd.f32 %v1480, 1.0
      %v1482 = vrcp.pop %v1481
      %v1483 = vmul.f32 1.0, %v1482
      %v1484 = vtanh.pop %v1475
      %1485 = vrot.lane.b32.xlu0 %v1290, 32
      %v1486 = vpop.permute.xlu0 %1485
      %v1488 = vsub.f32 %v1484, %v1486
      %1490 = vrot.lane.b32.xlu0 %v1488, 96
      %v1491 = vpop.permute.xlu0 %1490
      %v1493 = vmul.f32 %v1483, %v1491
      %v1494 = vadd.f32 %v1290, %v1493
      %v1495 = vadd.f32 %v1400, %v1494
      %v1496 = vld [vmem:[%s7] sm:$0xff]
      %v1497 = vld [vmem:[%s7 + $0x8] sm:$0xff]
      %v1498 = vld [vmem:[%s7 + $0x10] sm:$0xff]
      %v1499 = vld [vmem:[%s7 + $0x18] sm:$0xff]
      %v1501 = vsel %vm370, %v1399, 0
      %1503 = vmatprep.subr.mxu0 0.0
      %1504 = vmatpush1.msra.mxu0 %v1496
      %1505 = vmatprep.subr.mxu0 0.0
      %1506 = vmatpush1.msra.mxu0 %v1497
      %1507 = vmatprep.subr.mxu0 0.0
      %1508 = vmatpush1.msra.mxu0 %v1498
      %1509 = vmatprep.subr.mxu0 0.0
      %1510 = vmatpush1.msra.mxu0 %v1499
      %1511 = vmatprep.subr.mxu0 0.0
      %1512 = vmatpush1.msra.mxu0 0.0
      %1513 = vmatprep.subr.mxu0 0.0
      %1514 = vmatpush1.msra.mxu0 0.0
      %1515 = vmatprep.subr.mxu0 0.0
      %1516 = vmatpush1.msra.mxu0 0.0
      %1517 = vmatprep.subr.mxu0 0.0
      %1518 = vmatpush1.msra.mxu0 0.0
      %1519 = vmatprep.subr.mxu0 0.0
      %1520 = vmatpush1.msra.mxu0 0.0
      %1521 = vmatprep.subr.mxu0 0.0
      %1522 = vmatpush1.msra.mxu0 0.0
      %1523 = vmatprep.subr.mxu0 0.0
      %1524 = vmatpush1.msra.mxu0 0.0
      %1525 = vmatprep.subr.mxu0 0.0
      %1526 = vmatpush1.msra.mxu0 0.0
      %1527 = vmatprep.subr.mxu0 0.0
      %1528 = vmatpush1.msra.mxu0 0.0
      %1529 = vmatprep.subr.mxu0 0.0
      %1530 = vmatpush1.msra.mxu0 0.0
      %1531 = vmatprep.subr.mxu0 0.0
      %1532 = vmatpush1.msra.mxu0 0.0
      %1533 = vmatprep.subr.mxu0 0.0
      %1534 = vmatpush1.msra.mxu0 0.0
      %1535 = vmatprep.subr.mxu0 0.0
      %1536 = vmatpush1.msra.mxu0 0.0
      %1537 = vmatprep.subr.mxu0 0.0
      %1538 = vmatpush1.msra.mxu0 0.0
      %1539 = vmatprep.subr.mxu0 0.0
      %1540 = vmatpush1.msra.mxu0 0.0
      %1541 = vmatprep.subr.mxu0 0.0
      %1542 = vmatpush1.msra.mxu0 0.0
      %1543 = vmatprep.subr.mxu0 0.0
      %1544 = vmatpush1.msra.mxu0 0.0
      %1545 = vmatprep.subr.mxu0 0.0
      %1546 = vmatpush1.msra.mxu0 0.0
      %1547 = vmatprep.subr.mxu0 0.0
      %1548 = vmatpush1.msra.mxu0 0.0
      %1549 = vmatprep.subr.mxu0 0.0
      %1550 = vmatpush1.msra.mxu0 0.0
      %1551 = vmatprep.subr.mxu0 0.0
      %1552 = vmatpush1.msra.mxu0 0.0
      %1553 = vmatprep.subr.mxu0 0.0
      %1554 = vmatpush1.msra.mxu0 0.0
      %1555 = vmatprep.subr.mxu0 0.0
      %1556 = vmatpush1.msra.mxu0 0.0
      %1557 = vmatprep.subr.mxu0 0.0
      %1558 = vmatpush1.msra.mxu0 0.0
      %1559 = vmatprep.subr.mxu0 0.0
      %1560 = vmatpush1.msra.mxu0 0.0
      %1561 = vmatprep.subr.mxu0 0.0
      %1562 = vmatpush1.msra.mxu0 0.0
      %1563 = vmatprep.subr.mxu0 0.0
      %1564 = vmatpush1.msra.mxu0 0.0
      %1565 = vmatprep.subr.mxu0 0.0
      %1566 = vmatpush1.msra.mxu0 0.0
      %1567 = vmatprep.mubr.f32.mxu0 0.0
      %1568 = vmatmul.mubr.f32.gmra.mrb[0].mxu0 %v1501
      %v1569 = vpop.f32.mrb[0].mxu0
      %v1570 = vadd.f32 0.0, %v1569
      %v1571 = vpop.f32.mrb[0].mxu0
      %1572 = vdwg.mxu0
      %v1573 = vxor.u32 %v1570, 2147483648
      %v1574 = vmul.f32 %v1573, 1.442695
      %v1575 = vpow.pop %v1574
      %v1576 = vadd.f32 %v1575, 1.0
      %v1577 = vrcp.pop %v1576
      %v1578 = vmul.f32 1.0, %v1577
      %1579 = vrot.lane.b32.xlu0 %v1399, 32
      %v1580 = vpop.permute.xlu0 %1579
      %v1582 = vsub.f32 %v1578, %v1580
      %1584 = vrot.lane.b32.xlu0 %v1582, 96
      %v1585 = vpop.permute.xlu0 %1584
      %v1587 = vmul.f32 %v1578, %v1585
      %v1588 = vadd.f32 %v1399, %v1587
      %v1589 = vadd.f32 %v1495, %v1588
      %v1590 = vmax.f32 %v1570, 0.0
      %1591 = vrot.lane.b32.xlu0 %v1399, 96
      %v1592 = vpop.permute.xlu0 %1591
      %v1594 = vsub.f32 %v1590, %v1592
      %1596 = vrot.lane.b32.xlu0 %v1594, 96
      %v1597 = vpop.permute.xlu0 %1596
      %v1599 = vmul.f32 %v1578, %v1597
      %1601 = vrot.lane.b32.xlu0 %v1599, 64
      %v1602 = vpop.permute.xlu0 %1601
      %v1604 = vadd.f32 %v1399, %v1602
      %v1605 = vadd.f32 %v1589, %v1604
      %v1606 = vmul.f32 %v1605, 0.125
      %s1607 = scalar_lea.vmem %s355, 2
      %1608 = vst.msk [vmem:[%s1607] sm:$0x3] %vm985, %v1606
      %1609 = vst.msk [vmem:[#allocation2] sm:$0x3] %vm985, %v1606
      %s1610 = smul.u32 2, %s24
      %p1611 = scmp.lt.s32.totalorder %s1610, 7
      %s1612 = scalar_select %p1611, %s1610, 7
      %p1613 = scmp.lt.s32.totalorder %s23, 0
      %s1614 = scalar_select %p1613, %s23, 0
      %s1615 = sadd.s32 %s1614, %s1612
      %s1616 = smul.addr %s1615, 2
      %s1617 = scalar_lea.vmem %s8, %s1616
      // Predicated region
      $region57: #{dg_receiver_forward.3} parent=51 // pred_check
        %p1618 = pneg %p231
      $region58: #{dg_receiver_forward.3} parent=51 // pred_check_branch
        %1620 = sbr.rel (%p1618) target = $region60
      $region59: #{dg_receiver_forward.3} parent=51 // pred_region
        %s1621 = smul.u32 2, %s24
      $region60: #{dg_receiver_forward.3} parent=51 // pred_fallthru
        _
    $region52: #{dg_receiver_forward.3} parent=5 // pred_fallthru
      _
    %p1622 = scmp.le.s32.totalorder 2, %s14
    // Predicated region
    $region61: #{dg_receiver_forward.3} parent=5 // pred_check
      %p1623 = pneg %p1622
    $region62: #{dg_receiver_forward.3} parent=5 // pred_check_branch
      %1625 = sbr.rel (%p1623) target = $region64
    $region63: #{dg_receiver_forward.3} parent=5 // pred_region
      %s1626 = ssub.s32 %s14, 2
      // Predicated region
      $region65: #{dg_receiver_forward.3} parent=63 // pred_check
        %p1627 = pneg %p237
      $region66: #{dg_receiver_forward.3} parent=63 // pred_check_branch
        %1629 = sbr.rel (%p1627) target = $region68
      $region67: #{dg_receiver_forward.3} parent=63 // pred_region
        %s1630 = smul.u32 2, %s26
        %p1631 = scmp.lt.s32.totalorder %s1630, 7
        %s1632 = scalar_select %p1631, %s1630, 7
        %p1633 = scmp.lt.s32.totalorder %s25, 0
        %s1634 = scalar_select %p1633, %s25, 0
        %s1635 = sadd.s32 %s1634, %s1632
        %s1636 = smul.addr %s1635, 2
        %s1637 = scalar_lea.vmem %s8, %s1636
      $region68: #{dg_receiver_forward.3} parent=63 // pred_fallthru
        _
    $region64: #{dg_receiver_forward.3} parent=5 // pred_fallthru
      _
  $region6: #{dg_receiver_forward.3} parent=0 // loop_footer
    %s18 = sadd.s32 1, %s14
  $region7: #{dg_receiver_forward.3} parent=0 // loop_footer_branch
    %13 = sbr.rel target = $region3
  $region8: #{dg_receiver_forward.3} parent=0 // loop_exit
    _

</llo_original>
